<compile_context>
chip_gen: v6e
topology: v6e:2x2x1
jax: 0.10.0
libtpu: 0.0.40
codegen_flags: <defaults>
</compile_context>

<pallas_src>
import functools

import jax
import jax.numpy as jnp
from jax.experimental import pallas as pl
from jax.experimental.pallas import tpu as pltpu


# ----------------------------------------------------------------------------
# Pallas kernel: one grid step == T GRU time steps for one (batch, node-tile).
# Hidden state is carried in the `hcar_ref` VMEM scratch across the t axis.
# ----------------------------------------------------------------------------
def _sggru_kernel(x_ref, wx_ref, whzr_ref, whh_ref, s_ref, b_ref,
                  states_ref, hfin_ref, hcar_ref, *xw_scr,
                  seq_len, tail_mask):
    t = pl.program_id(2)                      # time-chunk axis (innermost, sequential)
    T = x_ref.shape[1]
    TN, Hp = hcar_ref.shape
    Hid = states_ref.shape[-1]
    Cin = x_ref.shape[-1]

    @pl.when(t == 0)
    def _():
        hcar_ref[...] = jnp.zeros_like(hcar_ref)

    # ---- grid-step invariants: loaded / broadcast once, reused for all T steps ----
    wx = wx_ref[...]                          # [Cin, 3*Hp]   fused  Wxz | Wxr | Wxh
    whzr = whzr_ref[...]                      # [Hp, 2*Hp]    fused  Whz | Whr
    whh = whh_ref[...]                        # [Hp, Hp]
    s = s_ref[0]                              # [TN, 8]  compact per-node SpecConv scales

    def _bc(col):                             # [TN, 1] -> [TN, Hp] lane broadcast (hoisted)
        return jnp.broadcast_to(s[:, col:col + 1], (TN, Hp))

    sx3 = jnp.concatenate([_bc(0), _bc(2), _bc(4)], axis=1)   # s_xz | s_xr | s_xh
    sh2 = jnp.concatenate([_bc(1), _bc(3)], axis=1)           # s_hz | s_hr
    shh = _bc(5)                                              # s_hh
    b3 = jnp.broadcast_to(b_ref[...], (TN, 3 * Hp))           # fused biases bz | br | bh

    use_fma_x = (len(xw_scr) == 0)            # small Cin: x path on the VPU, off the MXU
    if not use_fma_x:
        # Hoisted x-path GEMM for the whole time chunk (x is not recurrent).
        pre_scr = xw_scr[0]                                   # [T, TN, 3*Hp]
        xw_all = jnp.dot(x_ref[0].reshape(T * TN, Cin), wx,
                         preferred_element_type=jnp.float32)
        pre_scr[...] = sx3 * xw_all.reshape(T, TN, 3 * Hp) + b3

    def step(i, h):
        if use_fma_x:
            x = x_ref[0, i]                                   # [TN, Cin]
            xw = x[:, 0:1] * wx[0:1, :]                       # VPU broadcast-FMAs
            for c in range(1, Cin):
                xw = xw + x[:, c:c + 1] * wx[c:c + 1, :]
            pre = sx3 * xw + b3                               # [TN, 3*Hp]
        else:
            pre = xw_scr[0][i]                                # [TN, 3*Hp]

        hw = sh2 * jnp.dot(h, whzr, preferred_element_type=jnp.float32)    # [TN, 2*Hp]
        z = jax.nn.sigmoid(pre[:, 0 * Hp:1 * Hp] + hw[:, 0 * Hp:1 * Hp])
        r = jax.nn.sigmoid(pre[:, 1 * Hp:2 * Hp] + hw[:, 1 * Hp:2 * Hp])

        cand = jnp.dot(shh * (h * r), whh, preferred_element_type=jnp.float32)  # [TN, Hp]
        h_t = jnp.tanh(pre[:, 2 * Hp:3 * Hp] + cand)

        h_new = h_t + z * (h - h_t)            # == z*h + (1-z)*h_t, one fewer multiply
        if tail_mask:                          # ragged last time chunk: freeze past seq end
            h_new = jnp.where(t * T + i < seq_len, h_new, h)

        states_ref[0, i] = h_new[:, :Hid].astype(states_ref.dtype)
        return h_new

    h_last = jax.lax.fori_loop(0, T, step, hcar_ref[...], unroll=True)
    hcar_ref[...] = h_last                    # carry to next time chunk

    @pl.when(t == pl.num_programs(2) - 1)
    def _():
        hfin_ref[0] = h_last[:, :Hid].astype(hfin_ref.dtype)


# ----------------------------------------------------------------------------
# Helpers (tiling / VMEM budgeting)
# ----------------------------------------------------------------------------
def _round_up(a, b):
    return ((a + b - 1) // b) * b


def _cdiv(a, b):
    return (a + b - 1) // b


def _vmem_capacity_bytes():
    try:
        info = pltpu.get_tpu_info()
        cap = int(getattr(info, "vmem_capacity_bytes", 0) or 0)
        if cap > 0:
            return cap
    except Exception:
        pass
    return 64 * 1024 * 1024                   # conservative fallback: v7x per-TC VMEM


def _pick_time_chunk(L, cap):
    cap = max(1, min(cap, L))
    best = 1
    for d in range(1, cap + 1):
        if L % d == 0:
            best = d
    # Prefer an exact divisor when it is reasonably large; otherwise take `cap`
    # and let the in-kernel tail mask handle the ragged last chunk.
    return best if 2 * best > cap else cap


def _pick_node_tile(N, B, cap):
    cap = max(8, (cap // 8) * 8)
    TN = min(cap, _round_up(N, 8))
    # v7x megacore: make sure the parallel (B, node-tile) axes expose >= 2 blocks.
    if B == 1 and N > 8 and _cdiv(N, TN) < 2:
        TN = _round_up(_cdiv(N, 2), 8)
    return TN


# ----------------------------------------------------------------------------
# Wrapper: layout prep (weight fusion, compact scales) + pallas_call
# ----------------------------------------------------------------------------
@jax.jit
def sggru_forward(X, Lambda, params):
    """X: [B, L, N, Cin], Lambda: [B*N]. Returns (States [B, L, N, Hid], H [B, N, Hid])."""
    B, L, N, Cin = X.shape
    Hid = params["w_xz"].shape[1]
    K = params["theta"].shape[0]
    Hp = _round_up(Hid, 128)                  # lane-aligned hidden width for the compute path
    f32 = jnp.float32

    Xf = X.astype(f32)

    # ---- time-invariant SpecConv scales, compact [B, N, 8] (cols 0..5 used) ----
    lam = Lambda.astype(f32).reshape(B, N)
    lam_pow = jnp.stack([lam ** k for k in range(K)], axis=-1)          # [B, N, K]
    scales = lam_pow @ params["theta"].astype(f32)                      # [B, N, 6] (xz,hz,xr,hr,xh,hh)
    scales = jnp.pad(scales, ((0, 0), (0, 0), (0, 2)))                  # -> [B, N, 8]

    # ---- fused, zero-padded weights ----
    pad_c = lambda w: jnp.pad(w.astype(f32), ((0, 0), (0, Hp - Hid)))
    pad_rc = lambda w: jnp.pad(w.astype(f32), ((0, Hp - Hid), (0, Hp - Hid)))
    Wx = jnp.concatenate([pad_c(params["w_xz"]), pad_c(params["w_xr"]),
                          pad_c(params["w_xh"])], axis=1)               # [Cin, 3*Hp]
    Whzr = jnp.concatenate([pad_rc(params["w_hz"]), pad_rc(params["w_hr"])], axis=1)  # [Hp, 2*Hp]
    Whh = pad_rc(params["w_hh"])                                        # [Hp, Hp]

    # ---- combined per-gate biases (x-conv bias + h-conv bias), single row ----
    padv = lambda b: jnp.pad(b.astype(f32), (0, Hp - Hid))
    bias = jnp.concatenate([padv(params["b_xz"] + params["b_hz"]),
                            padv(params["b_xr"] + params["b_hr"]),
                            padv(params["b_xh"] + params["b_hh"])])[None, :]   # [1, 3*Hp]

    # ---- tile selection under a per-generation VMEM budget ----
    use_fma_x = Cin <= 8
    vmem_cap = _vmem_capacity_bytes()
    vmem_budget = int(vmem_cap * 0.8)         # ~51 MiB on v7x, ~102 MiB on v5e/v6e

    def est_vmem(T, TN):
        lane = lambda d: _round_up(max(d, 1), 128)
        sub = lambda d: _round_up(max(d, 1), 8)
        by = 2 * T * sub(TN) * lane(Cin) * 4                       # x block (lane-padded, x2)
        by += 2 * T * sub(TN) * lane(Hid) * 4                      # states block (x2)
        by += 2 * sub(TN) * lane(Hid) * 4                          # final-H block (x2)
        by += 2 * (sub(Cin) * 3 * Hp + Hp * 2 * Hp + Hp * Hp) * 4  # fused weights (x2)
        by += 2 * sub(TN) * 128 * 4 + 2 * 8 * 3 * Hp * 4           # scales + bias (x2)
        by += sub(TN) * Hp * 4                                     # hidden-carry scratch
        if not use_fma_x:
            by += T * sub(TN) * 3 * Hp * 4                         # hoisted x-path scratch
        by += 14 * sub(TN) * Hp * 4 + (2 << 20)                    # hoisted bcasts / temporaries
        return by

    T, TN = 1, 8
    found = False
    for tn_cap in (256, 128, 64, 32, 16, 8):
        tn = _pick_node_tile(N, B, tn_cap)
        for t_cap in (16, 8, 4, 2, 1):
            tt = _pick_time_chunk(L, t_cap)
            if est_vmem(tt, tn) <= vmem_budget:
                T, TN, found = tt, tn, True
                break
        if found:
            break
    vmem_limit = int(min(vmem_budget, max(1.5 * est_vmem(T, TN) + (8 << 20), 48 << 20)))

    grid = (B, _cdiv(N, TN), _cdiv(L, T))
    tail_mask = (grid[2] * T != L)

    kernel = functools.partial(_sggru_kernel, seq_len=L, tail_mask=tail_mask)

    scratch = [pltpu.VMEM((TN, Hp), f32)]                 # recurrent hidden carry
    if not use_fma_x:
        scratch.append(pltpu.VMEM((T, TN, 3 * Hp), f32))  # hoisted x-path pre-activations

    grid_spec = pltpu.PrefetchScalarGridSpec(
        num_scalar_prefetch=0,
        grid=grid,
        in_specs=[
            pl.BlockSpec((1, T, TN, Cin), lambda b, n, t: (b, t, n, 0)),   # X (native layout)
            pl.BlockSpec((Cin, 3 * Hp), lambda b, n, t: (0, 0)),           # fused Wx
            pl.BlockSpec((Hp, 2 * Hp), lambda b, n, t: (0, 0)),            # fused Whz | Whr
            pl.BlockSpec((Hp, Hp), lambda b, n, t: (0, 0)),                # Whh
            pl.BlockSpec((1, TN, 8), lambda b, n, t: (b, n, 0)),           # compact scales
            pl.BlockSpec((1, 3 * Hp), lambda b, n, t: (0, 0)),             # fused bias row
        ],
        out_specs=[
            pl.BlockSpec((1, T, TN, Hid), lambda b, n, t: (b, t, n, 0)),   # all states
            pl.BlockSpec((1, TN, Hid), lambda b, n, t: (b, n, 0)),         # final H
        ],
        scratch_shapes=scratch,
    )

    states, h_final = pl.pallas_call(
        kernel,
        grid_spec=grid_spec,
        out_shape=(jax.ShapeDtypeStruct((B, L, N, Hid), f32),
                   jax.ShapeDtypeStruct((B, N, Hid), f32)),
        compiler_params=pltpu.CompilerParams(
            dimension_semantics=("parallel", "parallel", "arbitrary"),
            vmem_limit_bytes=vmem_limit),
    )(Xf, Wx, Whzr, Whh, scales, bias)

    return states, h_final


# ----------------------------------------------------------------------------
# Pure-JAX reference (mirrors the PyTorch module exactly) for validation
# ----------------------------------------------------------------------------
def sggru_reference(X, Lambda, params):
    B, L, N, Cin = X.shape
    M = B * N
    K = params["theta"].shape[0]
    lam = Lambda.reshape(M, 1)

    def spec_conv(x, theta, w, b):
        out = theta[0] * x
        for k in range(1, K):
            out = out + theta[k] * (lam ** k) * x
        return out @ w + b

    th = params["theta"]  # [K, 6] columns: xz, hz, xr, hr, xh, hh
    H = jnp.zeros((M, params["w_xz"].shape[1]), jnp.float32)
    states = []
    for i in range(L):
        x_t = X[:, i, :, :].reshape(M, Cin)
        Z = jax.nn.sigmoid(spec_conv(x_t, th[:, 0], params["w_xz"], params["b_xz"])
                           + spec_conv(H, th[:, 1], params["w_hz"], params["b_hz"]))
        R = jax.nn.sigmoid(spec_conv(x_t, th[:, 2], params["w_xr"], params["b_xr"])
                           + spec_conv(H, th[:, 3], params["w_hr"], params["b_hr"]))
        Ht = jnp.tanh(spec_conv(x_t, th[:, 4], params["w_xh"], params["b_xh"])
                      + spec_conv(H * R, th[:, 5], params["w_hh"], params["b_hh"]))
        H = Z * H + (1.0 - Z) * Ht
        states.append(H.reshape(B, N, -1))
    return jnp.stack(states, axis=1), H.reshape(B, N, -1)


# ----------------------------------------------------------------------------
# Deterministic parameter init + driver
# ----------------------------------------------------------------------------
def init_params(key, in_channels, hidden, K):
    ks = jax.random.split(key, 13)

    def w(k, shape, scale=0.2):
        return (scale * jax.random.normal(k, shape)).astype(jnp.float32)

    return {
        # theta columns: [xz, hz, xr, hr, xh, hh]
        "theta": w(ks[0], (K, 6), 0.5),
        "w_xz": w(ks[1], (in_channels, hidden)), "b_xz": w(ks[2], (hidden,)),
        "w_hz": w(ks[3], (hidden, hidden)),      "b_hz": w(ks[4], (hidden,)),
        "w_xr": w(ks[5], (in_channels, hidden)), "b_xr": w(ks[6], (hidden,)),
        "w_hr": w(ks[7], (hidden, hidden)),      "b_hr": w(ks[8], (hidden,)),
        "w_xh": w(ks[9], (in_channels, hidden)), "b_xh": w(ks[10], (hidden,)),
        "w_hh": w(ks[11], (hidden, hidden)),     "b_hh": w(ks[12], (hidden,)),
    }


if __name__ == "__main__":
    B, L, N, Cin, Hid, K = 2, 8, 16, 4, 32, 3

    key = jax.random.PRNGKey(0)
    kx, kl, kp = jax.random.split(key, 3)
    X = jax.random.normal(kx, (B, L, N, Cin), jnp.float32)
    Lambda = jax.random.uniform(kl, (B * N,), jnp.float32, minval=0.0, maxval=2.0)
    params = init_params(kp, Cin, Hid, K)

    states, h_final = sggru_forward(X, Lambda, params)
    jax.block_until_ready((states, h_final))

    states_ref, h_ref = sggru_reference(X, Lambda, params)
    assert states.shape == (B, L, N, Hid) and h_final.shape == (B, N, Hid)
    assert jnp.allclose(states, states_ref, rtol=2e-3, atol=2e-3), "states mismatch"
    assert jnp.allclose(h_final, h_ref, rtol=2e-3, atol=2e-3), "final H mismatch"

    print("KERNEL_OK")
</pallas_src>

<mosaic_0001>
module attributes {stable_mosaic.version = 11 : i64} {
  func.func @_sggru_kernel(%arg0: i32, %arg1: i32, %arg2: i32, %arg3: memref<1x8x16x4xf32, #tpu.memory_space<vmem>>, %arg4: memref<4x384xf32, #tpu.memory_space<vmem>>, %arg5: memref<128x256xf32, #tpu.memory_space<vmem>>, %arg6: memref<128x128xf32, #tpu.memory_space<vmem>>, %arg7: memref<1x16x8xf32, #tpu.memory_space<vmem>>, %arg8: memref<1x384xf32, #tpu.memory_space<vmem>>, %arg9: memref<1x8x16x32xf32, #tpu.memory_space<vmem>>, %arg10: memref<1x16x32xf32, #tpu.memory_space<vmem>>, %arg11: memref<16x128xf32, #tpu.memory_space<vmem>>) attributes {dimension_semantics = [#tpu.dimension_semantics<parallel>, #tpu.dimension_semantics<parallel>, #tpu.dimension_semantics<arbitrary>], iteration_bounds = array<i64: 2, 1, 1>, scalar_prefetch = 0 : i64, scratch_operands = 1 : i64, tpu.core_type = #tpu.core_type<tc>, window_params = [{transform_indices = @transform_0, window_bounds = array<i64: 1, 8, 16, 4>}, {pipeline_mode = #tpu.pipeline_mode<synchronous>, transform_indices = @transform_1, window_bounds = array<i64: 4, 384>}, {pipeline_mode = #tpu.pipeline_mode<synchronous>, transform_indices = @transform_2, window_bounds = array<i64: 128, 256>}, {pipeline_mode = #tpu.pipeline_mode<synchronous>, transform_indices = @transform_3, window_bounds = array<i64: 128, 128>}, {transform_indices = @transform_4, window_bounds = array<i64: 1, 16, 8>}, {pipeline_mode = #tpu.pipeline_mode<synchronous>, transform_indices = @transform_5, window_bounds = array<i64: 1, 384>}, {transform_indices = @transform_6, window_bounds = array<i64: 1, 8, 16, 32>}, {transform_indices = @transform_7, window_bounds = array<i64: 1, 16, 32>}]} {
    %c0_i32 = arith.constant 0 : i32
    %0 = arith.cmpi eq, %arg2, %c0_i32 : i32
    %1 = arith.extui %0 : i1 to i32
    %c0_i32_0 = arith.constant 0 : i32
    %2 = arith.cmpi ne, %1, %c0_i32_0 : i32
    scf.if %2 {
      %cst_97 = arith.constant 0.000000e+00 : f32
      %516 = vector.broadcast %cst_97 : f32 to vector<16x128xf32>
      %c0_98 = arith.constant 0 : index
      %c0_99 = arith.constant 0 : index
      %517 = vector.load %arg11[%c0_98, %c0_99] : memref<16x128xf32, #tpu.memory_space<vmem>>, vector<16x128xf32>
      tpu.vector_store %arg11[%c0_98, %c0_99], %516 {strides = array<i32>} : memref<16x128xf32, #tpu.memory_space<vmem>>, vector<16x128xf32>,
    } else {
    }
    %c0 = arith.constant 0 : index
    %c0_1 = arith.constant 0 : index
    %3 = vector.load %arg4[%c0, %c0_1] : memref<4x384xf32, #tpu.memory_space<vmem>>, vector<4x384xf32>
    %c0_2 = arith.constant 0 : index
    %c0_3 = arith.constant 0 : index
    %4 = vector.load %arg5[%c0_2, %c0_3] : memref<128x256xf32, #tpu.memory_space<vmem>>, vector<128x256xf32>
    %c0_4 = arith.constant 0 : index
    %c0_5 = arith.constant 0 : index
    %5 = vector.load %arg6[%c0_4, %c0_5] : memref<128x128xf32, #tpu.memory_space<vmem>>, vector<128x128xf32>
    %c0_6 = arith.constant 0 : index
    %c0_7 = arith.constant 0 : index
    %c0_8 = arith.constant 0 : index
    %6 = vector.load %arg7[%c0_6, %c0_7, %c0_8] : memref<1x16x8xf32, #tpu.memory_space<vmem>>, vector<1x16x8xf32>
    %7 = vector.shape_cast %6 : vector<1x16x8xf32> to vector<16x8xf32>
    %8 = vector.extract_strided_slice %7 {offsets = [0, 0], sizes = [16, 1], strides = [1, 1]} : vector<16x8xf32> to vector<16x1xf32>
    %9 = vector.shape_cast %8 : vector<16x1xf32> to vector<16x1xf32>
    %10 = vector.broadcast %9 : vector<16x1xf32> to vector<16x128xf32>
    %11 = vector.extract_strided_slice %7 {offsets = [0, 2], sizes = [16, 1], strides = [1, 1]} : vector<16x8xf32> to vector<16x1xf32>
    %12 = vector.shape_cast %11 : vector<16x1xf32> to vector<16x1xf32>
    %13 = vector.broadcast %12 : vector<16x1xf32> to vector<16x128xf32>
    %14 = vector.extract_strided_slice %7 {offsets = [0, 4], sizes = [16, 1], strides = [1, 1]} : vector<16x8xf32> to vector<16x1xf32>
    %15 = vector.shape_cast %14 : vector<16x1xf32> to vector<16x1xf32>
    %16 = vector.broadcast %15 : vector<16x1xf32> to vector<16x128xf32>
    %17 = tpu.concatenate %10, %13, %16 in 1 : vector<16x128xf32>, vector<16x128xf32>, vector<16x128xf32> -> vector<16x384xf32>
    %18 = vector.extract_strided_slice %7 {offsets = [0, 1], sizes = [16, 1], strides = [1, 1]} : vector<16x8xf32> to vector<16x1xf32>
    %19 = vector.shape_cast %18 : vector<16x1xf32> to vector<16x1xf32>
    %20 = vector.broadcast %19 : vector<16x1xf32> to vector<16x128xf32>
    %21 = vector.extract_strided_slice %7 {offsets = [0, 3], sizes = [16, 1], strides = [1, 1]} : vector<16x8xf32> to vector<16x1xf32>
    %22 = vector.shape_cast %21 : vector<16x1xf32> to vector<16x1xf32>
    %23 = vector.broadcast %22 : vector<16x1xf32> to vector<16x128xf32>
    %24 = tpu.concatenate %20, %23 in 1 : vector<16x128xf32>, vector<16x128xf32> -> vector<16x256xf32>
    %25 = vector.extract_strided_slice %7 {offsets = [0, 5], sizes = [16, 1], strides = [1, 1]} : vector<16x8xf32> to vector<16x1xf32>
    %26 = vector.shape_cast %25 : vector<16x1xf32> to vector<16x1xf32>
    %27 = vector.broadcast %26 : vector<16x1xf32> to vector<16x128xf32>
    %c0_9 = arith.constant 0 : index
    %c0_10 = arith.constant 0 : index
    %28 = vector.load %arg8[%c0_9, %c0_10] : memref<1x384xf32, #tpu.memory_space<vmem>>, vector<1x384xf32>
    %29 = vector.shape_cast %28 : vector<1x384xf32> to vector<1x384xf32>
    %30 = vector.broadcast %29 : vector<1x384xf32> to vector<16x384xf32>
    %c0_11 = arith.constant 0 : index
    %c0_12 = arith.constant 0 : index
    %31 = vector.load %arg11[%c0_11, %c0_12] : memref<16x128xf32, #tpu.memory_space<vmem>>, vector<16x128xf32>
    %c0_i32_13 = arith.constant 0 : i32
    %c0_14 = arith.constant 0 : index
    %32 = arith.index_cast %c0_i32_13 : i32 to index
    %c0_15 = arith.constant 0 : index
    %c0_16 = arith.constant 0 : index
    %33 = vector.load %arg3[%c0_14, %32, %c0_15, %c0_16] : memref<1x8x16x4xf32, #tpu.memory_space<vmem>>, vector<1x1x16x4xf32>
    %34 = vector.shape_cast %33 : vector<1x1x16x4xf32> to vector<16x4xf32>
    %35 = vector.extract_strided_slice %34 {offsets = [0, 0], sizes = [16, 1], strides = [1, 1]} : vector<16x4xf32> to vector<16x1xf32>
    %36 = vector.extract_strided_slice %3 {offsets = [0, 0], sizes = [1, 384], strides = [1, 1]} : vector<4x384xf32> to vector<1x384xf32>
    %37 = vector.broadcast %35 : vector<16x1xf32> to vector<16x384xf32>
    %38 = vector.broadcast %36 : vector<1x384xf32> to vector<16x384xf32>
    %39 = arith.mulf %37, %38 : vector<16x384xf32>
    %40 = vector.extract_strided_slice %34 {offsets = [0, 1], sizes = [16, 1], strides = [1, 1]} : vector<16x4xf32> to vector<16x1xf32>
    %41 = vector.extract_strided_slice %3 {offsets = [1, 0], sizes = [1, 384], strides = [1, 1]} : vector<4x384xf32> to vector<1x384xf32>
    %42 = vector.broadcast %40 : vector<16x1xf32> to vector<16x384xf32>
    %43 = vector.broadcast %41 : vector<1x384xf32> to vector<16x384xf32>
    %44 = arith.mulf %42, %43 : vector<16x384xf32>
    %45 = arith.addf %39, %44 : vector<16x384xf32>
    %46 = vector.extract_strided_slice %34 {offsets = [0, 2], sizes = [16, 1], strides = [1, 1]} : vector<16x4xf32> to vector<16x1xf32>
    %47 = vector.extract_strided_slice %3 {offsets = [2, 0], sizes = [1, 384], strides = [1, 1]} : vector<4x384xf32> to vector<1x384xf32>
    %48 = vector.broadcast %46 : vector<16x1xf32> to vector<16x384xf32>
    %49 = vector.broadcast %47 : vector<1x384xf32> to vector<16x384xf32>
    %50 = arith.mulf %48, %49 : vector<16x384xf32>
    %51 = arith.addf %45, %50 : vector<16x384xf32>
    %52 = vector.extract_strided_slice %34 {offsets = [0, 3], sizes = [16, 1], strides = [1, 1]} : vector<16x4xf32> to vector<16x1xf32>
    %53 = vector.extract_strided_slice %3 {offsets = [3, 0], sizes = [1, 384], strides = [1, 1]} : vector<4x384xf32> to vector<1x384xf32>
    %54 = vector.broadcast %52 : vector<16x1xf32> to vector<16x384xf32>
    %55 = vector.broadcast %53 : vector<1x384xf32> to vector<16x384xf32>
    %56 = arith.mulf %54, %55 : vector<16x384xf32>
    %57 = arith.addf %51, %56 : vector<16x384xf32>
    %58 = arith.mulf %17, %57 : vector<16x384xf32>
    %59 = arith.addf %58, %30 : vector<16x384xf32>
    %cst = arith.constant dense<0.000000e+00> : vector<16x256xf32>
    %60 = tpu.matmul %31, %4, %cst {dimension_numbers = #tpu.dot_dimension_numbers<[1], [0], [0], [1], [0, 0, 1, 1], [], []>} : vector<16x128xf32>, vector<128x256xf32>, vector<16x256xf32> -> vector<16x256xf32>
    %61 = arith.mulf %24, %60 : vector<16x256xf32>
    %62 = vector.extract_strided_slice %59 {offsets = [0, 0], sizes = [16, 128], strides = [1, 1]} : vector<16x384xf32> to vector<16x128xf32>
    %63 = vector.extract_strided_slice %61 {offsets = [0, 0], sizes = [16, 128], strides = [1, 1]} : vector<16x256xf32> to vector<16x128xf32>
    %64 = arith.addf %62, %63 : vector<16x128xf32>
    %65 = arith.negf %64 : vector<16x128xf32>
    %66 = math.exp %65 : vector<16x128xf32>
    %cst_17 = arith.constant 1.000000e+00 : f32
    %67 = vector.broadcast %cst_17 : f32 to vector<16x128xf32>
    %68 = arith.addf %67, %66 : vector<16x128xf32>
    %69 = arith.divf %67, %68 : vector<16x128xf32>
    %70 = vector.extract_strided_slice %59 {offsets = [0, 128], sizes = [16, 128], strides = [1, 1]} : vector<16x384xf32> to vector<16x128xf32>
    %71 = vector.extract_strided_slice %61 {offsets = [0, 128], sizes = [16, 128], strides = [1, 1]} : vector<16x256xf32> to vector<16x128xf32>
    %72 = arith.addf %70, %71 : vector<16x128xf32>
    %73 = arith.negf %72 : vector<16x128xf32>
    %74 = math.exp %73 : vector<16x128xf32>
    %cst_18 = arith.constant 1.000000e+00 : f32
    %75 = vector.broadcast %cst_18 : f32 to vector<16x128xf32>
    %76 = arith.addf %75, %74 : vector<16x128xf32>
    %77 = arith.divf %75, %76 : vector<16x128xf32>
    %78 = arith.mulf %31, %77 : vector<16x128xf32>
    %79 = arith.mulf %27, %78 : vector<16x128xf32>
    %cst_19 = arith.constant dense<0.000000e+00> : vector<16x128xf32>
    %80 = tpu.matmul %79, %5, %cst_19 {dimension_numbers = #tpu.dot_dimension_numbers<[1], [0], [0], [1], [0, 0, 1, 1], [], []>} : vector<16x128xf32>, vector<128x128xf32>, vector<16x128xf32> -> vector<16x128xf32>
    %81 = vector.extract_strided_slice %59 {offsets = [0, 256], sizes = [16, 128], strides = [1, 1]} : vector<16x384xf32> to vector<16x128xf32>
    %82 = arith.addf %81, %80 : vector<16x128xf32>
    %83 = math.tanh %82 : vector<16x128xf32>
    %84 = arith.subf %31, %83 : vector<16x128xf32>
    %85 = arith.mulf %69, %84 : vector<16x128xf32>
    %86 = arith.addf %83, %85 : vector<16x128xf32>
    %87 = vector.extract_strided_slice %86 {offsets = [0, 0], sizes = [16, 32], strides = [1, 1]} : vector<16x128xf32> to vector<16x32xf32>
    %c0_20 = arith.constant 0 : index
    %88 = arith.index_cast %c0_i32_13 : i32 to index
    %c0_21 = arith.constant 0 : index
    %c0_22 = arith.constant 0 : index
    %89 = vector.load %arg9[%c0_20, %88, %c0_21, %c0_22] : memref<1x8x16x32xf32, #tpu.memory_space<vmem>>, vector<1x1x16x32xf32>
    %90 = vector.shape_cast %89 : vector<1x1x16x32xf32> to vector<16x32xf32>
    %91 = vector.shape_cast %87 : vector<16x32xf32> to vector<1x1x16x32xf32>
    tpu.vector_store %arg9[%c0_20, %88, %c0_21, %c0_22], %91 {strides = array<i32>} : memref<1x8x16x32xf32, #tpu.memory_space<vmem>>, vector<1x1x16x32xf32>,
    %c1_i32 = arith.constant 1 : i32
    %c0_23 = arith.constant 0 : index
    %92 = arith.index_cast %c1_i32 : i32 to index
    %c0_24 = arith.constant 0 : index
    %c0_25 = arith.constant 0 : index
    %93 = vector.load %arg3[%c0_23, %92, %c0_24, %c0_25] : memref<1x8x16x4xf32, #tpu.memory_space<vmem>>, vector<1x1x16x4xf32>
    %94 = vector.shape_cast %93 : vector<1x1x16x4xf32> to vector<16x4xf32>
    %95 = vector.extract_strided_slice %94 {offsets = [0, 0], sizes = [16, 1], strides = [1, 1]} : vector<16x4xf32> to vector<16x1xf32>
    %96 = vector.extract_strided_slice %3 {offsets = [0, 0], sizes = [1, 384], strides = [1, 1]} : vector<4x384xf32> to vector<1x384xf32>
    %97 = vector.broadcast %95 : vector<16x1xf32> to vector<16x384xf32>
    %98 = vector.broadcast %96 : vector<1x384xf32> to vector<16x384xf32>
    %99 = arith.mulf %97, %98 : vector<16x384xf32>
    %100 = vector.extract_strided_slice %94 {offsets = [0, 1], sizes = [16, 1], strides = [1, 1]} : vector<16x4xf32> to vector<16x1xf32>
    %101 = vector.extract_strided_slice %3 {offsets = [1, 0], sizes = [1, 384], strides = [1, 1]} : vector<4x384xf32> to vector<1x384xf32>
    %102 = vector.broadcast %100 : vector<16x1xf32> to vector<16x384xf32>
    %103 = vector.broadcast %101 : vector<1x384xf32> to vector<16x384xf32>
    %104 = arith.mulf %102, %103 : vector<16x384xf32>
    %105 = arith.addf %99, %104 : vector<16x384xf32>
    %106 = vector.extract_strided_slice %94 {offsets = [0, 2], sizes = [16, 1], strides = [1, 1]} : vector<16x4xf32> to vector<16x1xf32>
    %107 = vector.extract_strided_slice %3 {offsets = [2, 0], sizes = [1, 384], strides = [1, 1]} : vector<4x384xf32> to vector<1x384xf32>
    %108 = vector.broadcast %106 : vector<16x1xf32> to vector<16x384xf32>
    %109 = vector.broadcast %107 : vector<1x384xf32> to vector<16x384xf32>
    %110 = arith.mulf %108, %109 : vector<16x384xf32>
    %111 = arith.addf %105, %110 : vector<16x384xf32>
    %112 = vector.extract_strided_slice %94 {offsets = [0, 3], sizes = [16, 1], strides = [1, 1]} : vector<16x4xf32> to vector<16x1xf32>
    %113 = vector.extract_strided_slice %3 {offsets = [3, 0], sizes = [1, 384], strides = [1, 1]} : vector<4x384xf32> to vector<1x384xf32>
    %114 = vector.broadcast %112 : vector<16x1xf32> to vector<16x384xf32>
    %115 = vector.broadcast %113 : vector<1x384xf32> to vector<16x384xf32>
    %116 = arith.mulf %114, %115 : vector<16x384xf32>
    %117 = arith.addf %111, %116 : vector<16x384xf32>
    %118 = arith.mulf %17, %117 : vector<16x384xf32>
    %119 = arith.addf %118, %30 : vector<16x384xf32>
    %cst_26 = arith.constant dense<0.000000e+00> : vector<16x256xf32>
    %120 = tpu.matmul %86, %4, %cst_26 {dimension_numbers = #tpu.dot_dimension_numbers<[1], [0], [0], [1], [0, 0, 1, 1], [], []>} : vector<16x128xf32>, vector<128x256xf32>, vector<16x256xf32> -> vector<16x256xf32>
    %121 = arith.mulf %24, %120 : vector<16x256xf32>
    %122 = vector.extract_strided_slice %119 {offsets = [0, 0], sizes = [16, 128], strides = [1, 1]} : vector<16x384xf32> to vector<16x128xf32>
    %123 = vector.extract_strided_slice %121 {offsets = [0, 0], sizes = [16, 128], strides = [1, 1]} : vector<16x256xf32> to vector<16x128xf32>
    %124 = arith.addf %122, %123 : vector<16x128xf32>
    %125 = arith.negf %124 : vector<16x128xf32>
    %126 = math.exp %125 : vector<16x128xf32>
    %cst_27 = arith.constant 1.000000e+00 : f32
    %127 = vector.broadcast %cst_27 : f32 to vector<16x128xf32>
    %128 = arith.addf %127, %126 : vector<16x128xf32>
    %129 = arith.divf %127, %128 : vector<16x128xf32>
    %130 = vector.extract_strided_slice %119 {offsets = [0, 128], sizes = [16, 128], strides = [1, 1]} : vector<16x384xf32> to vector<16x128xf32>
    %131 = vector.extract_strided_slice %121 {offsets = [0, 128], sizes = [16, 128], strides = [1, 1]} : vector<16x256xf32> to vector<16x128xf32>
    %132 = arith.addf %130, %131 : vector<16x128xf32>
    %133 = arith.negf %132 : vector<16x128xf32>
    %134 = math.exp %133 : vector<16x128xf32>
    %cst_28 = arith.constant 1.000000e+00 : f32
    %135 = vector.broadcast %cst_28 : f32 to vector<16x128xf32>
    %136 = arith.addf %135, %134 : vector<16x128xf32>
    %137 = arith.divf %135, %136 : vector<16x128xf32>
    %138 = arith.mulf %86, %137 : vector<16x128xf32>
    %139 = arith.mulf %27, %138 : vector<16x128xf32>
    %cst_29 = arith.constant dense<0.000000e+00> : vector<16x128xf32>
    %140 = tpu.matmul %139, %5, %cst_29 {dimension_numbers = #tpu.dot_dimension_numbers<[1], [0], [0], [1], [0, 0, 1, 1], [], []>} : vector<16x128xf32>, vector<128x128xf32>, vector<16x128xf32> -> vector<16x128xf32>
    %141 = vector.extract_strided_slice %119 {offsets = [0, 256], sizes = [16, 128], strides = [1, 1]} : vector<16x384xf32> to vector<16x128xf32>
    %142 = arith.addf %141, %140 : vector<16x128xf32>
    %143 = math.tanh %142 : vector<16x128xf32>
    %144 = arith.subf %86, %143 : vector<16x128xf32>
    %145 = arith.mulf %129, %144 : vector<16x128xf32>
    %146 = arith.addf %143, %145 : vector<16x128xf32>
    %147 = vector.extract_strided_slice %146 {offsets = [0, 0], sizes = [16, 32], strides = [1, 1]} : vector<16x128xf32> to vector<16x32xf32>
    %c0_30 = arith.constant 0 : index
    %148 = arith.index_cast %c1_i32 : i32 to index
    %c0_31 = arith.constant 0 : index
    %c0_32 = arith.constant 0 : index
    %149 = vector.load %arg9[%c0_30, %148, %c0_31, %c0_32] : memref<1x8x16x32xf32, #tpu.memory_space<vmem>>, vector<1x1x16x32xf32>
    %150 = vector.shape_cast %149 : vector<1x1x16x32xf32> to vector<16x32xf32>
    %151 = vector.shape_cast %147 : vector<16x32xf32> to vector<1x1x16x32xf32>
    tpu.vector_store %arg9[%c0_30, %148, %c0_31, %c0_32], %151 {strides = array<i32>} : memref<1x8x16x32xf32, #tpu.memory_space<vmem>>, vector<1x1x16x32xf32>,
    %c2_i32 = arith.constant 2 : i32
    %c0_33 = arith.constant 0 : index
    %152 = arith.index_cast %c2_i32 : i32 to index
    %c0_34 = arith.constant 0 : index
    %c0_35 = arith.constant 0 : index
    %153 = vector.load %arg3[%c0_33, %152, %c0_34, %c0_35] : memref<1x8x16x4xf32, #tpu.memory_space<vmem>>, vector<1x1x16x4xf32>
    %154 = vector.shape_cast %153 : vector<1x1x16x4xf32> to vector<16x4xf32>
    %155 = vector.extract_strided_slice %154 {offsets = [0, 0], sizes = [16, 1], strides = [1, 1]} : vector<16x4xf32> to vector<16x1xf32>
    %156 = vector.extract_strided_slice %3 {offsets = [0, 0], sizes = [1, 384], strides = [1, 1]} : vector<4x384xf32> to vector<1x384xf32>
    %157 = vector.broadcast %155 : vector<16x1xf32> to vector<16x384xf32>
    %158 = vector.broadcast %156 : vector<1x384xf32> to vector<16x384xf32>
    %159 = arith.mulf %157, %158 : vector<16x384xf32>
    %160 = vector.extract_strided_slice %154 {offsets = [0, 1], sizes = [16, 1], strides = [1, 1]} : vector<16x4xf32> to vector<16x1xf32>
    %161 = vector.extract_strided_slice %3 {offsets = [1, 0], sizes = [1, 384], strides = [1, 1]} : vector<4x384xf32> to vector<1x384xf32>
    %162 = vector.broadcast %160 : vector<16x1xf32> to vector<16x384xf32>
    %163 = vector.broadcast %161 : vector<1x384xf32> to vector<16x384xf32>
    %164 = arith.mulf %162, %163 : vector<16x384xf32>
    %165 = arith.addf %159, %164 : vector<16x384xf32>
    %166 = vector.extract_strided_slice %154 {offsets = [0, 2], sizes = [16, 1], strides = [1, 1]} : vector<16x4xf32> to vector<16x1xf32>
    %167 = vector.extract_strided_slice %3 {offsets = [2, 0], sizes = [1, 384], strides = [1, 1]} : vector<4x384xf32> to vector<1x384xf32>
    %168 = vector.broadcast %166 : vector<16x1xf32> to vector<16x384xf32>
    %169 = vector.broadcast %167 : vector<1x384xf32> to vector<16x384xf32>
    %170 = arith.mulf %168, %169 : vector<16x384xf32>
    %171 = arith.addf %165, %170 : vector<16x384xf32>
    %172 = vector.extract_strided_slice %154 {offsets = [0, 3], sizes = [16, 1], strides = [1, 1]} : vector<16x4xf32> to vector<16x1xf32>
    %173 = vector.extract_strided_slice %3 {offsets = [3, 0], sizes = [1, 384], strides = [1, 1]} : vector<4x384xf32> to vector<1x384xf32>
    %174 = vector.broadcast %172 : vector<16x1xf32> to vector<16x384xf32>
    %175 = vector.broadcast %173 : vector<1x384xf32> to vector<16x384xf32>
    %176 = arith.mulf %174, %175 : vector<16x384xf32>
    %177 = arith.addf %171, %176 : vector<16x384xf32>
    %178 = arith.mulf %17, %177 : vector<16x384xf32>
    %179 = arith.addf %178, %30 : vector<16x384xf32>
    %cst_36 = arith.constant dense<0.000000e+00> : vector<16x256xf32>
    %180 = tpu.matmul %146, %4, %cst_36 {dimension_numbers = #tpu.dot_dimension_numbers<[1], [0], [0], [1], [0, 0, 1, 1], [], []>} : vector<16x128xf32>, vector<128x256xf32>, vector<16x256xf32> -> vector<16x256xf32>
    %181 = arith.mulf %24, %180 : vector<16x256xf32>
    %182 = vector.extract_strided_slice %179 {offsets = [0, 0], sizes = [16, 128], strides = [1, 1]} : vector<16x384xf32> to vector<16x128xf32>
    %183 = vector.extract_strided_slice %181 {offsets = [0, 0], sizes = [16, 128], strides = [1, 1]} : vector<16x256xf32> to vector<16x128xf32>
    %184 = arith.addf %182, %183 : vector<16x128xf32>
    %185 = arith.negf %184 : vector<16x128xf32>
    %186 = math.exp %185 : vector<16x128xf32>
    %cst_37 = arith.constant 1.000000e+00 : f32
    %187 = vector.broadcast %cst_37 : f32 to vector<16x128xf32>
    %188 = arith.addf %187, %186 : vector<16x128xf32>
    %189 = arith.divf %187, %188 : vector<16x128xf32>
    %190 = vector.extract_strided_slice %179 {offsets = [0, 128], sizes = [16, 128], strides = [1, 1]} : vector<16x384xf32> to vector<16x128xf32>
    %191 = vector.extract_strided_slice %181 {offsets = [0, 128], sizes = [16, 128], strides = [1, 1]} : vector<16x256xf32> to vector<16x128xf32>
    %192 = arith.addf %190, %191 : vector<16x128xf32>
    %193 = arith.negf %192 : vector<16x128xf32>
    %194 = math.exp %193 : vector<16x128xf32>
    %cst_38 = arith.constant 1.000000e+00 : f32
    %195 = vector.broadcast %cst_38 : f32 to vector<16x128xf32>
    %196 = arith.addf %195, %194 : vector<16x128xf32>
    %197 = arith.divf %195, %196 : vector<16x128xf32>
    %198 = arith.mulf %146, %197 : vector<16x128xf32>
    %199 = arith.mulf %27, %198 : vector<16x128xf32>
    %cst_39 = arith.constant dense<0.000000e+00> : vector<16x128xf32>
    %200 = tpu.matmul %199, %5, %cst_39 {dimension_numbers = #tpu.dot_dimension_numbers<[1], [0], [0], [1], [0, 0, 1, 1], [], []>} : vector<16x128xf32>, vector<128x128xf32>, vector<16x128xf32> -> vector<16x128xf32>
    %201 = vector.extract_strided_slice %179 {offsets = [0, 256], sizes = [16, 128], strides = [1, 1]} : vector<16x384xf32> to vector<16x128xf32>
    %202 = arith.addf %201, %200 : vector<16x128xf32>
    %203 = math.tanh %202 : vector<16x128xf32>
    %204 = arith.subf %146, %203 : vector<16x128xf32>
    %205 = arith.mulf %189, %204 : vector<16x128xf32>
    %206 = arith.addf %203, %205 : vector<16x128xf32>
    %207 = vector.extract_strided_slice %206 {offsets = [0, 0], sizes = [16, 32], strides = [1, 1]} : vector<16x128xf32> to vector<16x32xf32>
    %c0_40 = arith.constant 0 : index
    %208 = arith.index_cast %c2_i32 : i32 to index
    %c0_41 = arith.constant 0 : index
    %c0_42 = arith.constant 0 : index
    %209 = vector.load %arg9[%c0_40, %208, %c0_41, %c0_42] : memref<1x8x16x32xf32, #tpu.memory_space<vmem>>, vector<1x1x16x32xf32>
    %210 = vector.shape_cast %209 : vector<1x1x16x32xf32> to vector<16x32xf32>
    %211 = vector.shape_cast %207 : vector<16x32xf32> to vector<1x1x16x32xf32>
    tpu.vector_store %arg9[%c0_40, %208, %c0_41, %c0_42], %211 {strides = array<i32>} : memref<1x8x16x32xf32, #tpu.memory_space<vmem>>, vector<1x1x16x32xf32>,
    %c3_i32 = arith.constant 3 : i32
    %c0_43 = arith.constant 0 : index
    %212 = arith.index_cast %c3_i32 : i32 to index
    %c0_44 = arith.constant 0 : index
    %c0_45 = arith.constant 0 : index
    %213 = vector.load %arg3[%c0_43, %212, %c0_44, %c0_45] : memref<1x8x16x4xf32, #tpu.memory_space<vmem>>, vector<1x1x16x4xf32>
    %214 = vector.shape_cast %213 : vector<1x1x16x4xf32> to vector<16x4xf32>
    %215 = vector.extract_strided_slice %214 {offsets = [0, 0], sizes = [16, 1], strides = [1, 1]} : vector<16x4xf32> to vector<16x1xf32>
    %216 = vector.extract_strided_slice %3 {offsets = [0, 0], sizes = [1, 384], strides = [1, 1]} : vector<4x384xf32> to vector<1x384xf32>
    %217 = vector.broadcast %215 : vector<16x1xf32> to vector<16x384xf32>
    %218 = vector.broadcast %216 : vector<1x384xf32> to vector<16x384xf32>
    %219 = arith.mulf %217, %218 : vector<16x384xf32>
    %220 = vector.extract_strided_slice %214 {offsets = [0, 1], sizes = [16, 1], strides = [1, 1]} : vector<16x4xf32> to vector<16x1xf32>
    %221 = vector.extract_strided_slice %3 {offsets = [1, 0], sizes = [1, 384], strides = [1, 1]} : vector<4x384xf32> to vector<1x384xf32>
    %222 = vector.broadcast %220 : vector<16x1xf32> to vector<16x384xf32>
    %223 = vector.broadcast %221 : vector<1x384xf32> to vector<16x384xf32>
    %224 = arith.mulf %222, %223 : vector<16x384xf32>
    %225 = arith.addf %219, %224 : vector<16x384xf32>
    %226 = vector.extract_strided_slice %214 {offsets = [0, 2], sizes = [16, 1], strides = [1, 1]} : vector<16x4xf32> to vector<16x1xf32>
    %227 = vector.extract_strided_slice %3 {offsets = [2, 0], sizes = [1, 384], strides = [1, 1]} : vector<4x384xf32> to vector<1x384xf32>
    %228 = vector.broadcast %226 : vector<16x1xf32> to vector<16x384xf32>
    %229 = vector.broadcast %227 : vector<1x384xf32> to vector<16x384xf32>
    %230 = arith.mulf %228, %229 : vector<16x384xf32>
    %231 = arith.addf %225, %230 : vector<16x384xf32>
    %232 = vector.extract_strided_slice %214 {offsets = [0, 3], sizes = [16, 1], strides = [1, 1]} : vector<16x4xf32> to vector<16x1xf32>
    %233 = vector.extract_strided_slice %3 {offsets = [3, 0], sizes = [1, 384], strides = [1, 1]} : vector<4x384xf32> to vector<1x384xf32>
    %234 = vector.broadcast %232 : vector<16x1xf32> to vector<16x384xf32>
    %235 = vector.broadcast %233 : vector<1x384xf32> to vector<16x384xf32>
    %236 = arith.mulf %234, %235 : vector<16x384xf32>
    %237 = arith.addf %231, %236 : vector<16x384xf32>
    %238 = arith.mulf %17, %237 : vector<16x384xf32>
    %239 = arith.addf %238, %30 : vector<16x384xf32>
    %cst_46 = arith.constant dense<0.000000e+00> : vector<16x256xf32>
    %240 = tpu.matmul %206, %4, %cst_46 {dimension_numbers = #tpu.dot_dimension_numbers<[1], [0], [0], [1], [0, 0, 1, 1], [], []>} : vector<16x128xf32>, vector<128x256xf32>, vector<16x256xf32> -> vector<16x256xf32>
    %241 = arith.mulf %24, %240 : vector<16x256xf32>
    %242 = vector.extract_strided_slice %239 {offsets = [0, 0], sizes = [16, 128], strides = [1, 1]} : vector<16x384xf32> to vector<16x128xf32>
    %243 = vector.extract_strided_slice %241 {offsets = [0, 0], sizes = [16, 128], strides = [1, 1]} : vector<16x256xf32> to vector<16x128xf32>
    %244 = arith.addf %242, %243 : vector<16x128xf32>
    %245 = arith.negf %244 : vector<16x128xf32>
    %246 = math.exp %245 : vector<16x128xf32>
    %cst_47 = arith.constant 1.000000e+00 : f32
    %247 = vector.broadcast %cst_47 : f32 to vector<16x128xf32>
    %248 = arith.addf %247, %246 : vector<16x128xf32>
    %249 = arith.divf %247, %248 : vector<16x128xf32>
    %250 = vector.extract_strided_slice %239 {offsets = [0, 128], sizes = [16, 128], strides = [1, 1]} : vector<16x384xf32> to vector<16x128xf32>
    %251 = vector.extract_strided_slice %241 {offsets = [0, 128], sizes = [16, 128], strides = [1, 1]} : vector<16x256xf32> to vector<16x128xf32>
    %252 = arith.addf %250, %251 : vector<16x128xf32>
    %253 = arith.negf %252 : vector<16x128xf32>
    %254 = math.exp %253 : vector<16x128xf32>
    %cst_48 = arith.constant 1.000000e+00 : f32
    %255 = vector.broadcast %cst_48 : f32 to vector<16x128xf32>
    %256 = arith.addf %255, %254 : vector<16x128xf32>
    %257 = arith.divf %255, %256 : vector<16x128xf32>
    %258 = arith.mulf %206, %257 : vector<16x128xf32>
    %259 = arith.mulf %27, %258 : vector<16x128xf32>
    %cst_49 = arith.constant dense<0.000000e+00> : vector<16x128xf32>
    %260 = tpu.matmul %259, %5, %cst_49 {dimension_numbers = #tpu.dot_dimension_numbers<[1], [0], [0], [1], [0, 0, 1, 1], [], []>} : vector<16x128xf32>, vector<128x128xf32>, vector<16x128xf32> -> vector<16x128xf32>
    %261 = vector.extract_strided_slice %239 {offsets = [0, 256], sizes = [16, 128], strides = [1, 1]} : vector<16x384xf32> to vector<16x128xf32>
    %262 = arith.addf %261, %260 : vector<16x128xf32>
    %263 = math.tanh %262 : vector<16x128xf32>
    %264 = arith.subf %206, %263 : vector<16x128xf32>
    %265 = arith.mulf %249, %264 : vector<16x128xf32>
    %266 = arith.addf %263, %265 : vector<16x128xf32>
    %267 = vector.extract_strided_slice %266 {offsets = [0, 0], sizes = [16, 32], strides = [1, 1]} : vector<16x128xf32> to vector<16x32xf32>
    %c0_50 = arith.constant 0 : index
    %268 = arith.index_cast %c3_i32 : i32 to index
    %c0_51 = arith.constant 0 : index
    %c0_52 = arith.constant 0 : index
    %269 = vector.load %arg9[%c0_50, %268, %c0_51, %c0_52] : memref<1x8x16x32xf32, #tpu.memory_space<vmem>>, vector<1x1x16x32xf32>
    %270 = vector.shape_cast %269 : vector<1x1x16x32xf32> to vector<16x32xf32>
    %271 = vector.shape_cast %267 : vector<16x32xf32> to vector<1x1x16x32xf32>
    tpu.vector_store %arg9[%c0_50, %268, %c0_51, %c0_52], %271 {strides = array<i32>} : memref<1x8x16x32xf32, #tpu.memory_space<vmem>>, vector<1x1x16x32xf32>,
    %c4_i32 = arith.constant 4 : i32
    %c0_53 = arith.constant 0 : index
    %272 = arith.index_cast %c4_i32 : i32 to index
    %c0_54 = arith.constant 0 : index
    %c0_55 = arith.constant 0 : index
    %273 = vector.load %arg3[%c0_53, %272, %c0_54, %c0_55] : memref<1x8x16x4xf32, #tpu.memory_space<vmem>>, vector<1x1x16x4xf32>
    %274 = vector.shape_cast %273 : vector<1x1x16x4xf32> to vector<16x4xf32>
    %275 = vector.extract_strided_slice %274 {offsets = [0, 0], sizes = [16, 1], strides = [1, 1]} : vector<16x4xf32> to vector<16x1xf32>
    %276 = vector.extract_strided_slice %3 {offsets = [0, 0], sizes = [1, 384], strides = [1, 1]} : vector<4x384xf32> to vector<1x384xf32>
    %277 = vector.broadcast %275 : vector<16x1xf32> to vector<16x384xf32>
    %278 = vector.broadcast %276 : vector<1x384xf32> to vector<16x384xf32>
    %279 = arith.mulf %277, %278 : vector<16x384xf32>
    %280 = vector.extract_strided_slice %274 {offsets = [0, 1], sizes = [16, 1], strides = [1, 1]} : vector<16x4xf32> to vector<16x1xf32>
    %281 = vector.extract_strided_slice %3 {offsets = [1, 0], sizes = [1, 384], strides = [1, 1]} : vector<4x384xf32> to vector<1x384xf32>
    %282 = vector.broadcast %280 : vector<16x1xf32> to vector<16x384xf32>
    %283 = vector.broadcast %281 : vector<1x384xf32> to vector<16x384xf32>
    %284 = arith.mulf %282, %283 : vector<16x384xf32>
    %285 = arith.addf %279, %284 : vector<16x384xf32>
    %286 = vector.extract_strided_slice %274 {offsets = [0, 2], sizes = [16, 1], strides = [1, 1]} : vector<16x4xf32> to vector<16x1xf32>
    %287 = vector.extract_strided_slice %3 {offsets = [2, 0], sizes = [1, 384], strides = [1, 1]} : vector<4x384xf32> to vector<1x384xf32>
    %288 = vector.broadcast %286 : vector<16x1xf32> to vector<16x384xf32>
    %289 = vector.broadcast %287 : vector<1x384xf32> to vector<16x384xf32>
    %290 = arith.mulf %288, %289 : vector<16x384xf32>
    %291 = arith.addf %285, %290 : vector<16x384xf32>
    %292 = vector.extract_strided_slice %274 {offsets = [0, 3], sizes = [16, 1], strides = [1, 1]} : vector<16x4xf32> to vector<16x1xf32>
    %293 = vector.extract_strided_slice %3 {offsets = [3, 0], sizes = [1, 384], strides = [1, 1]} : vector<4x384xf32> to vector<1x384xf32>
    %294 = vector.broadcast %292 : vector<16x1xf32> to vector<16x384xf32>
    %295 = vector.broadcast %293 : vector<1x384xf32> to vector<16x384xf32>
    %296 = arith.mulf %294, %295 : vector<16x384xf32>
    %297 = arith.addf %291, %296 : vector<16x384xf32>
    %298 = arith.mulf %17, %297 : vector<16x384xf32>
    %299 = arith.addf %298, %30 : vector<16x384xf32>
    %cst_56 = arith.constant dense<0.000000e+00> : vector<16x256xf32>
    %300 = tpu.matmul %266, %4, %cst_56 {dimension_numbers = #tpu.dot_dimension_numbers<[1], [0], [0], [1], [0, 0, 1, 1], [], []>} : vector<16x128xf32>, vector<128x256xf32>, vector<16x256xf32> -> vector<16x256xf32>
    %301 = arith.mulf %24, %300 : vector<16x256xf32>
    %302 = vector.extract_strided_slice %299 {offsets = [0, 0], sizes = [16, 128], strides = [1, 1]} : vector<16x384xf32> to vector<16x128xf32>
    %303 = vector.extract_strided_slice %301 {offsets = [0, 0], sizes = [16, 128], strides = [1, 1]} : vector<16x256xf32> to vector<16x128xf32>
    %304 = arith.addf %302, %303 : vector<16x128xf32>
    %305 = arith.negf %304 : vector<16x128xf32>
    %306 = math.exp %305 : vector<16x128xf32>
    %cst_57 = arith.constant 1.000000e+00 : f32
    %307 = vector.broadcast %cst_57 : f32 to vector<16x128xf32>
    %308 = arith.addf %307, %306 : vector<16x128xf32>
    %309 = arith.divf %307, %308 : vector<16x128xf32>
    %310 = vector.extract_strided_slice %299 {offsets = [0, 128], sizes = [16, 128], strides = [1, 1]} : vector<16x384xf32> to vector<16x128xf32>
    %311 = vector.extract_strided_slice %301 {offsets = [0, 128], sizes = [16, 128], strides = [1, 1]} : vector<16x256xf32> to vector<16x128xf32>
    %312 = arith.addf %310, %311 : vector<16x128xf32>
    %313 = arith.negf %312 : vector<16x128xf32>
    %314 = math.exp %313 : vector<16x128xf32>
    %cst_58 = arith.constant 1.000000e+00 : f32
    %315 = vector.broadcast %cst_58 : f32 to vector<16x128xf32>
    %316 = arith.addf %315, %314 : vector<16x128xf32>
    %317 = arith.divf %315, %316 : vector<16x128xf32>
    %318 = arith.mulf %266, %317 : vector<16x128xf32>
    %319 = arith.mulf %27, %318 : vector<16x128xf32>
    %cst_59 = arith.constant dense<0.000000e+00> : vector<16x128xf32>
    %320 = tpu.matmul %319, %5, %cst_59 {dimension_numbers = #tpu.dot_dimension_numbers<[1], [0], [0], [1], [0, 0, 1, 1], [], []>} : vector<16x128xf32>, vector<128x128xf32>, vector<16x128xf32> -> vector<16x128xf32>
    %321 = vector.extract_strided_slice %299 {offsets = [0, 256], sizes = [16, 128], strides = [1, 1]} : vector<16x384xf32> to vector<16x128xf32>
    %322 = arith.addf %321, %320 : vector<16x128xf32>
    %323 = math.tanh %322 : vector<16x128xf32>
    %324 = arith.subf %266, %323 : vector<16x128xf32>
    %325 = arith.mulf %309, %324 : vector<16x128xf32>
    %326 = arith.addf %323, %325 : vector<16x128xf32>
    %327 = vector.extract_strided_slice %326 {offsets = [0, 0], sizes = [16, 32], strides = [1, 1]} : vector<16x128xf32> to vector<16x32xf32>
    %c0_60 = arith.constant 0 : index
    %328 = arith.index_cast %c4_i32 : i32 to index
    %c0_61 = arith.constant 0 : index
    %c0_62 = arith.constant 0 : index
    %329 = vector.load %arg9[%c0_60, %328, %c0_61, %c0_62] : memref<1x8x16x32xf32, #tpu.memory_space<vmem>>, vector<1x1x16x32xf32>
    %330 = vector.shape_cast %329 : vector<1x1x16x32xf32> to vector<16x32xf32>
    %331 = vector.shape_cast %327 : vector<16x32xf32> to vector<1x1x16x32xf32>
    tpu.vector_store %arg9[%c0_60, %328, %c0_61, %c0_62], %331 {strides = array<i32>} : memref<1x8x16x32xf32, #tpu.memory_space<vmem>>, vector<1x1x16x32xf32>,
    %c5_i32 = arith.constant 5 : i32
    %c0_63 = arith.constant 0 : index
    %332 = arith.index_cast %c5_i32 : i32 to index
    %c0_64 = arith.constant 0 : index
    %c0_65 = arith.constant 0 : index
    %333 = vector.load %arg3[%c0_63, %332, %c0_64, %c0_65] : memref<1x8x16x4xf32, #tpu.memory_space<vmem>>, vector<1x1x16x4xf32>
    %334 = vector.shape_cast %333 : vector<1x1x16x4xf32> to vector<16x4xf32>
    %335 = vector.extract_strided_slice %334 {offsets = [0, 0], sizes = [16, 1], strides = [1, 1]} : vector<16x4xf32> to vector<16x1xf32>
    %336 = vector.extract_strided_slice %3 {offsets = [0, 0], sizes = [1, 384], strides = [1, 1]} : vector<4x384xf32> to vector<1x384xf32>
    %337 = vector.broadcast %335 : vector<16x1xf32> to vector<16x384xf32>
    %338 = vector.broadcast %336 : vector<1x384xf32> to vector<16x384xf32>
    %339 = arith.mulf %337, %338 : vector<16x384xf32>
    %340 = vector.extract_strided_slice %334 {offsets = [0, 1], sizes = [16, 1], strides = [1, 1]} : vector<16x4xf32> to vector<16x1xf32>
    %341 = vector.extract_strided_slice %3 {offsets = [1, 0], sizes = [1, 384], strides = [1, 1]} : vector<4x384xf32> to vector<1x384xf32>
    %342 = vector.broadcast %340 : vector<16x1xf32> to vector<16x384xf32>
    %343 = vector.broadcast %341 : vector<1x384xf32> to vector<16x384xf32>
    %344 = arith.mulf %342, %343 : vector<16x384xf32>
    %345 = arith.addf %339, %344 : vector<16x384xf32>
    %346 = vector.extract_strided_slice %334 {offsets = [0, 2], sizes = [16, 1], strides = [1, 1]} : vector<16x4xf32> to vector<16x1xf32>
    %347 = vector.extract_strided_slice %3 {offsets = [2, 0], sizes = [1, 384], strides = [1, 1]} : vector<4x384xf32> to vector<1x384xf32>
    %348 = vector.broadcast %346 : vector<16x1xf32> to vector<16x384xf32>
    %349 = vector.broadcast %347 : vector<1x384xf32> to vector<16x384xf32>
    %350 = arith.mulf %348, %349 : vector<16x384xf32>
    %351 = arith.addf %345, %350 : vector<16x384xf32>
    %352 = vector.extract_strided_slice %334 {offsets = [0, 3], sizes = [16, 1], strides = [1, 1]} : vector<16x4xf32> to vector<16x1xf32>
    %353 = vector.extract_strided_slice %3 {offsets = [3, 0], sizes = [1, 384], strides = [1, 1]} : vector<4x384xf32> to vector<1x384xf32>
    %354 = vector.broadcast %352 : vector<16x1xf32> to vector<16x384xf32>
    %355 = vector.broadcast %353 : vector<1x384xf32> to vector<16x384xf32>
    %356 = arith.mulf %354, %355 : vector<16x384xf32>
    %357 = arith.addf %351, %356 : vector<16x384xf32>
    %358 = arith.mulf %17, %357 : vector<16x384xf32>
    %359 = arith.addf %358, %30 : vector<16x384xf32>
    %cst_66 = arith.constant dense<0.000000e+00> : vector<16x256xf32>
    %360 = tpu.matmul %326, %4, %cst_66 {dimension_numbers = #tpu.dot_dimension_numbers<[1], [0], [0], [1], [0, 0, 1, 1], [], []>} : vector<16x128xf32>, vector<128x256xf32>, vector<16x256xf32> -> vector<16x256xf32>
    %361 = arith.mulf %24, %360 : vector<16x256xf32>
    %362 = vector.extract_strided_slice %359 {offsets = [0, 0], sizes = [16, 128], strides = [1, 1]} : vector<16x384xf32> to vector<16x128xf32>
    %363 = vector.extract_strided_slice %361 {offsets = [0, 0], sizes = [16, 128], strides = [1, 1]} : vector<16x256xf32> to vector<16x128xf32>
    %364 = arith.addf %362, %363 : vector<16x128xf32>
    %365 = arith.negf %364 : vector<16x128xf32>
    %366 = math.exp %365 : vector<16x128xf32>
    %cst_67 = arith.constant 1.000000e+00 : f32
    %367 = vector.broadcast %cst_67 : f32 to vector<16x128xf32>
    %368 = arith.addf %367, %366 : vector<16x128xf32>
    %369 = arith.divf %367, %368 : vector<16x128xf32>
    %370 = vector.extract_strided_slice %359 {offsets = [0, 128], sizes = [16, 128], strides = [1, 1]} : vector<16x384xf32> to vector<16x128xf32>
    %371 = vector.extract_strided_slice %361 {offsets = [0, 128], sizes = [16, 128], strides = [1, 1]} : vector<16x256xf32> to vector<16x128xf32>
    %372 = arith.addf %370, %371 : vector<16x128xf32>
    %373 = arith.negf %372 : vector<16x128xf32>
    %374 = math.exp %373 : vector<16x128xf32>
    %cst_68 = arith.constant 1.000000e+00 : f32
    %375 = vector.broadcast %cst_68 : f32 to vector<16x128xf32>
    %376 = arith.addf %375, %374 : vector<16x128xf32>
    %377 = arith.divf %375, %376 : vector<16x128xf32>
    %378 = arith.mulf %326, %377 : vector<16x128xf32>
    %379 = arith.mulf %27, %378 : vector<16x128xf32>
    %cst_69 = arith.constant dense<0.000000e+00> : vector<16x128xf32>
    %380 = tpu.matmul %379, %5, %cst_69 {dimension_numbers = #tpu.dot_dimension_numbers<[1], [0], [0], [1], [0, 0, 1, 1], [], []>} : vector<16x128xf32>, vector<128x128xf32>, vector<16x128xf32> -> vector<16x128xf32>
    %381 = vector.extract_strided_slice %359 {offsets = [0, 256], sizes = [16, 128], strides = [1, 1]} : vector<16x384xf32> to vector<16x128xf32>
    %382 = arith.addf %381, %380 : vector<16x128xf32>
    %383 = math.tanh %382 : vector<16x128xf32>
    %384 = arith.subf %326, %383 : vector<16x128xf32>
    %385 = arith.mulf %369, %384 : vector<16x128xf32>
    %386 = arith.addf %383, %385 : vector<16x128xf32>
    %387 = vector.extract_strided_slice %386 {offsets = [0, 0], sizes = [16, 32], strides = [1, 1]} : vector<16x128xf32> to vector<16x32xf32>
    %c0_70 = arith.constant 0 : index
    %388 = arith.index_cast %c5_i32 : i32 to index
    %c0_71 = arith.constant 0 : index
    %c0_72 = arith.constant 0 : index
    %389 = vector.load %arg9[%c0_70, %388, %c0_71, %c0_72] : memref<1x8x16x32xf32, #tpu.memory_space<vmem>>, vector<1x1x16x32xf32>
    %390 = vector.shape_cast %389 : vector<1x1x16x32xf32> to vector<16x32xf32>
    %391 = vector.shape_cast %387 : vector<16x32xf32> to vector<1x1x16x32xf32>
    tpu.vector_store %arg9[%c0_70, %388, %c0_71, %c0_72], %391 {strides = array<i32>} : memref<1x8x16x32xf32, #tpu.memory_space<vmem>>, vector<1x1x16x32xf32>,
    %c6_i32 = arith.constant 6 : i32
    %c0_73 = arith.constant 0 : index
    %392 = arith.index_cast %c6_i32 : i32 to index
    %c0_74 = arith.constant 0 : index
    %c0_75 = arith.constant 0 : index
    %393 = vector.load %arg3[%c0_73, %392, %c0_74, %c0_75] : memref<1x8x16x4xf32, #tpu.memory_space<vmem>>, vector<1x1x16x4xf32>
    %394 = vector.shape_cast %393 : vector<1x1x16x4xf32> to vector<16x4xf32>
    %395 = vector.extract_strided_slice %394 {offsets = [0, 0], sizes = [16, 1], strides = [1, 1]} : vector<16x4xf32> to vector<16x1xf32>
    %396 = vector.extract_strided_slice %3 {offsets = [0, 0], sizes = [1, 384], strides = [1, 1]} : vector<4x384xf32> to vector<1x384xf32>
    %397 = vector.broadcast %395 : vector<16x1xf32> to vector<16x384xf32>
    %398 = vector.broadcast %396 : vector<1x384xf32> to vector<16x384xf32>
    %399 = arith.mulf %397, %398 : vector<16x384xf32>
    %400 = vector.extract_strided_slice %394 {offsets = [0, 1], sizes = [16, 1], strides = [1, 1]} : vector<16x4xf32> to vector<16x1xf32>
    %401 = vector.extract_strided_slice %3 {offsets = [1, 0], sizes = [1, 384], strides = [1, 1]} : vector<4x384xf32> to vector<1x384xf32>
    %402 = vector.broadcast %400 : vector<16x1xf32> to vector<16x384xf32>
    %403 = vector.broadcast %401 : vector<1x384xf32> to vector<16x384xf32>
    %404 = arith.mulf %402, %403 : vector<16x384xf32>
    %405 = arith.addf %399, %404 : vector<16x384xf32>
    %406 = vector.extract_strided_slice %394 {offsets = [0, 2], sizes = [16, 1], strides = [1, 1]} : vector<16x4xf32> to vector<16x1xf32>
    %407 = vector.extract_strided_slice %3 {offsets = [2, 0], sizes = [1, 384], strides = [1, 1]} : vector<4x384xf32> to vector<1x384xf32>
    %408 = vector.broadcast %406 : vector<16x1xf32> to vector<16x384xf32>
    %409 = vector.broadcast %407 : vector<1x384xf32> to vector<16x384xf32>
    %410 = arith.mulf %408, %409 : vector<16x384xf32>
    %411 = arith.addf %405, %410 : vector<16x384xf32>
    %412 = vector.extract_strided_slice %394 {offsets = [0, 3], sizes = [16, 1], strides = [1, 1]} : vector<16x4xf32> to vector<16x1xf32>
    %413 = vector.extract_strided_slice %3 {offsets = [3, 0], sizes = [1, 384], strides = [1, 1]} : vector<4x384xf32> to vector<1x384xf32>
    %414 = vector.broadcast %412 : vector<16x1xf32> to vector<16x384xf32>
    %415 = vector.broadcast %413 : vector<1x384xf32> to vector<16x384xf32>
    %416 = arith.mulf %414, %415 : vector<16x384xf32>
    %417 = arith.addf %411, %416 : vector<16x384xf32>
    %418 = arith.mulf %17, %417 : vector<16x384xf32>
    %419 = arith.addf %418, %30 : vector<16x384xf32>
    %cst_76 = arith.constant dense<0.000000e+00> : vector<16x256xf32>
    %420 = tpu.matmul %386, %4, %cst_76 {dimension_numbers = #tpu.dot_dimension_numbers<[1], [0], [0], [1], [0, 0, 1, 1], [], []>} : vector<16x128xf32>, vector<128x256xf32>, vector<16x256xf32> -> vector<16x256xf32>
    %421 = arith.mulf %24, %420 : vector<16x256xf32>
    %422 = vector.extract_strided_slice %419 {offsets = [0, 0], sizes = [16, 128], strides = [1, 1]} : vector<16x384xf32> to vector<16x128xf32>
    %423 = vector.extract_strided_slice %421 {offsets = [0, 0], sizes = [16, 128], strides = [1, 1]} : vector<16x256xf32> to vector<16x128xf32>
    %424 = arith.addf %422, %423 : vector<16x128xf32>
    %425 = arith.negf %424 : vector<16x128xf32>
    %426 = math.exp %425 : vector<16x128xf32>
    %cst_77 = arith.constant 1.000000e+00 : f32
    %427 = vector.broadcast %cst_77 : f32 to vector<16x128xf32>
    %428 = arith.addf %427, %426 : vector<16x128xf32>
    %429 = arith.divf %427, %428 : vector<16x128xf32>
    %430 = vector.extract_strided_slice %419 {offsets = [0, 128], sizes = [16, 128], strides = [1, 1]} : vector<16x384xf32> to vector<16x128xf32>
    %431 = vector.extract_strided_slice %421 {offsets = [0, 128], sizes = [16, 128], strides = [1, 1]} : vector<16x256xf32> to vector<16x128xf32>
    %432 = arith.addf %430, %431 : vector<16x128xf32>
    %433 = arith.negf %432 : vector<16x128xf32>
    %434 = math.exp %433 : vector<16x128xf32>
    %cst_78 = arith.constant 1.000000e+00 : f32
    %435 = vector.broadcast %cst_78 : f32 to vector<16x128xf32>
    %436 = arith.addf %435, %434 : vector<16x128xf32>
    %437 = arith.divf %435, %436 : vector<16x128xf32>
    %438 = arith.mulf %386, %437 : vector<16x128xf32>
    %439 = arith.mulf %27, %438 : vector<16x128xf32>
    %cst_79 = arith.constant dense<0.000000e+00> : vector<16x128xf32>
    %440 = tpu.matmul %439, %5, %cst_79 {dimension_numbers = #tpu.dot_dimension_numbers<[1], [0], [0], [1], [0, 0, 1, 1], [], []>} : vector<16x128xf32>, vector<128x128xf32>, vector<16x128xf32> -> vector<16x128xf32>
    %441 = vector.extract_strided_slice %419 {offsets = [0, 256], sizes = [16, 128], strides = [1, 1]} : vector<16x384xf32> to vector<16x128xf32>
    %442 = arith.addf %441, %440 : vector<16x128xf32>
    %443 = math.tanh %442 : vector<16x128xf32>
    %444 = arith.subf %386, %443 : vector<16x128xf32>
    %445 = arith.mulf %429, %444 : vector<16x128xf32>
    %446 = arith.addf %443, %445 : vector<16x128xf32>
    %447 = vector.extract_strided_slice %446 {offsets = [0, 0], sizes = [16, 32], strides = [1, 1]} : vector<16x128xf32> to vector<16x32xf32>
    %c0_80 = arith.constant 0 : index
    %448 = arith.index_cast %c6_i32 : i32 to index
    %c0_81 = arith.constant 0 : index
    %c0_82 = arith.constant 0 : index
    %449 = vector.load %arg9[%c0_80, %448, %c0_81, %c0_82] : memref<1x8x16x32xf32, #tpu.memory_space<vmem>>, vector<1x1x16x32xf32>
    %450 = vector.shape_cast %449 : vector<1x1x16x32xf32> to vector<16x32xf32>
    %451 = vector.shape_cast %447 : vector<16x32xf32> to vector<1x1x16x32xf32>
    tpu.vector_store %arg9[%c0_80, %448, %c0_81, %c0_82], %451 {strides = array<i32>} : memref<1x8x16x32xf32, #tpu.memory_space<vmem>>, vector<1x1x16x32xf32>,
    %c7_i32 = arith.constant 7 : i32
    %c0_83 = arith.constant 0 : index
    %452 = arith.index_cast %c7_i32 : i32 to index
    %c0_84 = arith.constant 0 : index
    %c0_85 = arith.constant 0 : index
    %453 = vector.load %arg3[%c0_83, %452, %c0_84, %c0_85] : memref<1x8x16x4xf32, #tpu.memory_space<vmem>>, vector<1x1x16x4xf32>
    %454 = vector.shape_cast %453 : vector<1x1x16x4xf32> to vector<16x4xf32>
    %455 = vector.extract_strided_slice %454 {offsets = [0, 0], sizes = [16, 1], strides = [1, 1]} : vector<16x4xf32> to vector<16x1xf32>
    %456 = vector.extract_strided_slice %3 {offsets = [0, 0], sizes = [1, 384], strides = [1, 1]} : vector<4x384xf32> to vector<1x384xf32>
    %457 = vector.broadcast %455 : vector<16x1xf32> to vector<16x384xf32>
    %458 = vector.broadcast %456 : vector<1x384xf32> to vector<16x384xf32>
    %459 = arith.mulf %457, %458 : vector<16x384xf32>
    %460 = vector.extract_strided_slice %454 {offsets = [0, 1], sizes = [16, 1], strides = [1, 1]} : vector<16x4xf32> to vector<16x1xf32>
    %461 = vector.extract_strided_slice %3 {offsets = [1, 0], sizes = [1, 384], strides = [1, 1]} : vector<4x384xf32> to vector<1x384xf32>
    %462 = vector.broadcast %460 : vector<16x1xf32> to vector<16x384xf32>
    %463 = vector.broadcast %461 : vector<1x384xf32> to vector<16x384xf32>
    %464 = arith.mulf %462, %463 : vector<16x384xf32>
    %465 = arith.addf %459, %464 : vector<16x384xf32>
    %466 = vector.extract_strided_slice %454 {offsets = [0, 2], sizes = [16, 1], strides = [1, 1]} : vector<16x4xf32> to vector<16x1xf32>
    %467 = vector.extract_strided_slice %3 {offsets = [2, 0], sizes = [1, 384], strides = [1, 1]} : vector<4x384xf32> to vector<1x384xf32>
    %468 = vector.broadcast %466 : vector<16x1xf32> to vector<16x384xf32>
    %469 = vector.broadcast %467 : vector<1x384xf32> to vector<16x384xf32>
    %470 = arith.mulf %468, %469 : vector<16x384xf32>
    %471 = arith.addf %465, %470 : vector<16x384xf32>
    %472 = vector.extract_strided_slice %454 {offsets = [0, 3], sizes = [16, 1], strides = [1, 1]} : vector<16x4xf32> to vector<16x1xf32>
    %473 = vector.extract_strided_slice %3 {offsets = [3, 0], sizes = [1, 384], strides = [1, 1]} : vector<4x384xf32> to vector<1x384xf32>
    %474 = vector.broadcast %472 : vector<16x1xf32> to vector<16x384xf32>
    %475 = vector.broadcast %473 : vector<1x384xf32> to vector<16x384xf32>
    %476 = arith.mulf %474, %475 : vector<16x384xf32>
    %477 = arith.addf %471, %476 : vector<16x384xf32>
    %478 = arith.mulf %17, %477 : vector<16x384xf32>
    %479 = arith.addf %478, %30 : vector<16x384xf32>
    %cst_86 = arith.constant dense<0.000000e+00> : vector<16x256xf32>
    %480 = tpu.matmul %446, %4, %cst_86 {dimension_numbers = #tpu.dot_dimension_numbers<[1], [0], [0], [1], [0, 0, 1, 1], [], []>} : vector<16x128xf32>, vector<128x256xf32>, vector<16x256xf32> -> vector<16x256xf32>
    %481 = arith.mulf %24, %480 : vector<16x256xf32>
    %482 = vector.extract_strided_slice %479 {offsets = [0, 0], sizes = [16, 128], strides = [1, 1]} : vector<16x384xf32> to vector<16x128xf32>
    %483 = vector.extract_strided_slice %481 {offsets = [0, 0], sizes = [16, 128], strides = [1, 1]} : vector<16x256xf32> to vector<16x128xf32>
    %484 = arith.addf %482, %483 : vector<16x128xf32>
    %485 = arith.negf %484 : vector<16x128xf32>
    %486 = math.exp %485 : vector<16x128xf32>
    %cst_87 = arith.constant 1.000000e+00 : f32
    %487 = vector.broadcast %cst_87 : f32 to vector<16x128xf32>
    %488 = arith.addf %487, %486 : vector<16x128xf32>
    %489 = arith.divf %487, %488 : vector<16x128xf32>
    %490 = vector.extract_strided_slice %479 {offsets = [0, 128], sizes = [16, 128], strides = [1, 1]} : vector<16x384xf32> to vector<16x128xf32>
    %491 = vector.extract_strided_slice %481 {offsets = [0, 128], sizes = [16, 128], strides = [1, 1]} : vector<16x256xf32> to vector<16x128xf32>
    %492 = arith.addf %490, %491 : vector<16x128xf32>
    %493 = arith.negf %492 : vector<16x128xf32>
    %494 = math.exp %493 : vector<16x128xf32>
    %cst_88 = arith.constant 1.000000e+00 : f32
    %495 = vector.broadcast %cst_88 : f32 to vector<16x128xf32>
    %496 = arith.addf %495, %494 : vector<16x128xf32>
    %497 = arith.divf %495, %496 : vector<16x128xf32>
    %498 = arith.mulf %446, %497 : vector<16x128xf32>
    %499 = arith.mulf %27, %498 : vector<16x128xf32>
    %cst_89 = arith.constant dense<0.000000e+00> : vector<16x128xf32>
    %500 = tpu.matmul %499, %5, %cst_89 {dimension_numbers = #tpu.dot_dimension_numbers<[1], [0], [0], [1], [0, 0, 1, 1], [], []>} : vector<16x128xf32>, vector<128x128xf32>, vector<16x128xf32> -> vector<16x128xf32>
    %501 = vector.extract_strided_slice %479 {offsets = [0, 256], sizes = [16, 128], strides = [1, 1]} : vector<16x384xf32> to vector<16x128xf32>
    %502 = arith.addf %501, %500 : vector<16x128xf32>
    %503 = math.tanh %502 : vector<16x128xf32>
    %504 = arith.subf %446, %503 : vector<16x128xf32>
    %505 = arith.mulf %489, %504 : vector<16x128xf32>
    %506 = arith.addf %503, %505 : vector<16x128xf32>
    %507 = vector.extract_strided_slice %506 {offsets = [0, 0], sizes = [16, 32], strides = [1, 1]} : vector<16x128xf32> to vector<16x32xf32>
    %c0_90 = arith.constant 0 : index
    %508 = arith.index_cast %c7_i32 : i32 to index
    %c0_91 = arith.constant 0 : index
    %c0_92 = arith.constant 0 : index
    %509 = vector.load %arg9[%c0_90, %508, %c0_91, %c0_92] : memref<1x8x16x32xf32, #tpu.memory_space<vmem>>, vector<1x1x16x32xf32>
    %510 = vector.shape_cast %509 : vector<1x1x16x32xf32> to vector<16x32xf32>
    %511 = vector.shape_cast %507 : vector<16x32xf32> to vector<1x1x16x32xf32>
    tpu.vector_store %arg9[%c0_90, %508, %c0_91, %c0_92], %511 {strides = array<i32>} : memref<1x8x16x32xf32, #tpu.memory_space<vmem>>, vector<1x1x16x32xf32>,
    %c8_i32 = arith.constant 8 : i32
    %c0_93 = arith.constant 0 : index
    %c0_94 = arith.constant 0 : index
    %512 = vector.load %arg11[%c0_93, %c0_94] : memref<16x128xf32, #tpu.memory_space<vmem>>, vector<16x128xf32>
    tpu.vector_store %arg11[%c0_93, %c0_94], %506 {strides = array<i32>} : memref<16x128xf32, #tpu.memory_space<vmem>>, vector<16x128xf32>,
    %c0_i32_95 = arith.constant 0 : i32
    %513 = arith.cmpi eq, %arg2, %c0_i32_95 : i32
    %514 = arith.extui %513 : i1 to i32
    %c0_i32_96 = arith.constant 0 : i32
    %515 = arith.cmpi ne, %514, %c0_i32_96 : i32
    scf.if %515 {
      %516 = vector.extract_strided_slice %506 {offsets = [0, 0], sizes = [16, 32], strides = [1, 1]} : vector<16x128xf32> to vector<16x32xf32>
      %c0_97 = arith.constant 0 : index
      %c0_98 = arith.constant 0 : index
      %c0_99 = arith.constant 0 : index
      %517 = vector.load %arg10[%c0_97, %c0_98, %c0_99] : memref<1x16x32xf32, #tpu.memory_space<vmem>>, vector<1x16x32xf32>
      %518 = vector.shape_cast %517 : vector<1x16x32xf32> to vector<16x32xf32>
      %519 = vector.shape_cast %516 : vector<16x32xf32> to vector<1x16x32xf32>
      tpu.vector_store %arg10[%c0_97, %c0_98, %c0_99], %519 {strides = array<i32>} : memref<1x16x32xf32, #tpu.memory_space<vmem>>, vector<1x16x32xf32>,
    } else {
    }
    return
  }
  func.func @transform_0(%arg0: i32, %arg1: i32, %arg2: i32) -> (i32, i32, i32, i32) {
    %c0_i32 = arith.constant 0 : i32
    %c0_i32_0 = arith.constant 0 : i32
    return %arg0, %arg2, %arg1, %c0_i32 : i32, i32, i32, i32
  }
  func.func @transform_1(%arg0: i32, %arg1: i32, %arg2: i32) -> (i32, i32) {
    %c0_i32 = arith.constant 0 : i32
    %c0_i32_0 = arith.constant 0 : i32
    %c0_i32_1 = arith.constant 0 : i32
    return %c0_i32, %c0_i32_0 : i32, i32
  }
  func.func @transform_2(%arg0: i32, %arg1: i32, %arg2: i32) -> (i32, i32) {
    %c0_i32 = arith.constant 0 : i32
    %c0_i32_0 = arith.constant 0 : i32
    %c0_i32_1 = arith.constant 0 : i32
    return %c0_i32, %c0_i32_0 : i32, i32
  }
  func.func @transform_3(%arg0: i32, %arg1: i32, %arg2: i32) -> (i32, i32) {
    %c0_i32 = arith.constant 0 : i32
    %c0_i32_0 = arith.constant 0 : i32
    %c0_i32_1 = arith.constant 0 : i32
    return %c0_i32, %c0_i32_0 : i32, i32
  }
  func.func @transform_4(%arg0: i32, %arg1: i32, %arg2: i32) -> (i32, i32, i32) {
    %c0_i32 = arith.constant 0 : i32
    %c0_i32_0 = arith.constant 0 : i32
    return %arg0, %arg1, %c0_i32 : i32, i32, i32
  }
  func.func @transform_5(%arg0: i32, %arg1: i32, %arg2: i32) -> (i32, i32) {
    %c0_i32 = arith.constant 0 : i32
    %c0_i32_0 = arith.constant 0 : i32
    %c0_i32_1 = arith.constant 0 : i32
    return %c0_i32, %c0_i32_0 : i32, i32
  }
  func.func @transform_6(%arg0: i32, %arg1: i32, %arg2: i32) -> (i32, i32, i32, i32) {
    %c0_i32 = arith.constant 0 : i32
    %c0_i32_0 = arith.constant 0 : i32
    return %arg0, %arg2, %arg1, %c0_i32 : i32, i32, i32, i32
  }
  func.func @transform_7(%arg0: i32, %arg1: i32, %arg2: i32) -> (i32, i32, i32) {
    %c0_i32 = arith.constant 0 : i32
    %c0_i32_0 = arith.constant 0 : i32
    return %arg0, %arg1, %c0_i32 : i32, i32, i32
  }
}

</mosaic_0001>

<llo_original>
// kernel: integer_pow.7
$region0: #{integer_pow.7}
  #allocation0 [shape = 's32[1]{0}', space=sflag, size = 0x4, scoped, tag = 'scoped memory for integer_pow.7']
  %s0 = inlined_call_operand.vmem [shape: f32[2,16,1], index: 0, kind: input, shape index: {}, may-alias: {0,1}]
  %s1 = inlined_call_operand.vmem [shape: f32[2,16,1], index: 1, kind: input, shape index: {}, may-alias: {0,1}]
  %s2 = inlined_call_operand.vmem [shape: bf16[2,16,1], index: 2, kind: output, shape index: {}]
  %v3 = vld [vmem:[%s0] sm:$0x3]
  %v4 = vld [vmem:[%s1] sm:$0x3]
  %5 = xla_tuple %v3, %v4
  %6 = xla_tuple %5
  %v7 = vmul.f32 %v3, %v4
  %8 = xla_tuple %v7
  %v9 = vpack.c.bf16 0.0, %v7
  %10 = vst [vmem:[%s2] sm:$0x1] %v9

// kernel: sggru_forward.1
$region0: #{sggru_forward.1}
  #allocation0 [shape = 'u32[]', space=smem, size = 0x4, offset = 0x4, fixed_abs, tag = 'smem constant byte address 0x4 - core index']
  #allocation1 [shape = 'u32[144,128]{1,0:T(1,128)}', space=vmem, size = 0x12000, scoped, tag = 'internal scratch']
  #allocation2 [shape = 'f32[16,128]{1,0:T(8,128)}', space=vmem, size = 0x2000, scoped, tag = 'scratch operand']
  %s0 = inlined_call_operand.vmem [shape: f32[2,8,16,4], index: 0, kind: input, shape index: {}]
  %s1 = inlined_call_operand.vmem [shape: f32[4,384], index: 1, kind: input, shape index: {}]
  %s2 = inlined_call_operand.vmem [shape: f32[128,256], index: 2, kind: input, shape index: {}]
  %s3 = inlined_call_operand.vmem [shape: f32[128,128], index: 3, kind: input, shape index: {}]
  %s4 = inlined_call_operand.vmem [shape: f32[2,16,8], index: 4, kind: input, shape index: {}]
  %s5 = inlined_call_operand.vmem [shape: f32[1,384], index: 5, kind: input, shape index: {}]
  %s6 = inlined_call_operand.hbm [shape: f32[2,8,16,32], index: 6, kind: output, shape index: {0}]
  %s7 = inlined_call_operand.hbm [shape: f32[2,16,32], index: 7, kind: output, shape index: {1}]
  %8 = xla_tuple %s6, %s7
  %s9 = sld [smem:[#allocation0]]
  $region73: #{sggru_forward.1} parent=0
    _
  %s11 = ssub.s32 1, %s9
  %s12 = scalar_select 0, %s11, %s9
  $region1: #{sggru_forward.1} parent=0
    #allocation3 [shape = 'u8[131072]{0}', space=vmem, size = 0x20000, scoped, tag = 'output window, operand 0']
    #allocation4 [shape = 's32[2]{0}', space=sflag, size = 0x8, scoped, tag = 'scoped memory for sggru_forward.1']
    #allocation5 [shape = 'u8[16384]{0}', space=vmem, size = 0x4000, scoped, tag = 'output window, operand 1']
    #allocation6 [shape = 's32[2]{0}', space=sflag, size = 0x8, scoped, tag = 'scoped memory for sggru_forward.1']
    %13 = vsyncpa [#allocation4], 0
    %s14 = scalar_lea.sflag [#allocation4], 1
    %15 = vsyncpa %s14, 0
    %16 = vsyncpa [#allocation6], 0
    %s17 = scalar_lea.sflag [#allocation6], 1
    %18 = vsyncpa %s17, 0
    loop: start=0, step=1, limit=4
    $region2: #{sggru_forward.1} parent=1 // loop_pre_header
      _
    $region3: #{sggru_forward.1} parent=1 // loop_header
      %s20 = sphi 0, %s24
      %p21 = scmp.ge.s32.totalorder %s20, 4
      %s27 = sphi 0, %s46
      %s28 = sphi 0, %s42
      %s29 = sphi 0, %s38
      %s30 = sphi 0, %s27
      %s31 = sphi 0, %s28
      %s32 = sphi 0, %s29
      %s33 = sphi 0, %s30
      %s34 = sphi 0, %s31
      %s35 = sphi 0, %s32
      %s53 = sphi 0, %s55
      %s56 = sphi 0, %s53
      %s57 = sphi 0, %s56
      %s73 = sphi 0, %s57
      %s77 = sphi 0, %s77
      %s79 = sphi 0, %s77
      %s80 = sphi 0, %s79
      %s94 = sphi 0, %s80
      %s98 = sphi 0, %s98
      %s100 = sphi 0, %s98
      %s101 = sphi 0, %s100
      %s115 = sphi 0, %s101
      %s119 = sphi 0, %s119
      %s121 = sphi 0, %s119
      %s122 = sphi 0, %s121
      %s136 = sphi 0, %s122
      %s144 = sphi 0, %s146
      %s147 = sphi 0, %s144
      %s148 = sphi 0, %s147
      %s164 = sphi 0, %s148
      %s168 = sphi 0, %s168
      %s170 = sphi 0, %s168
      %s171 = sphi 0, %s170
      %s185 = sphi 0, %s171
      %s195 = sphi 0, %s197
      %s198 = sphi 0, %s195
      %s199 = sphi 0, %s198
      %s215 = sphi 0, %s199
      %s223 = sphi 0, %s225
      %s226 = sphi 0, %s223
      %s227 = sphi 0, %s226
      %s243 = sphi 0, %s227
    $region4: #{sggru_forward.1} parent=1 // loop_header_branch
      %23 = sbr.rel (%p21) target = $region8
    $region5: #{sggru_forward.1} parent=1 // loop_body
      %s25 = ssub.s32 %s20, 1
      %s26 = ssub.s32 %s20, 2
      %s36 = sadd.s32 1, %s29
      %p37 = scmp.ge.s32.totalorder %s36, 1
      %s38 = scalar_select %p37, 0, %s36
      %s39 = sadd.s32 1, %s28
      %s40 = scalar_select %p37, %s39, %s28
      %p41 = scmp.ge.s32.totalorder %s40, 1
      %s42 = scalar_select %p41, 0, %s40
      %s43 = sadd.s32 1, %s27
      %s44 = scalar_select %p41, %s43, %s27
      %p45 = scmp.ge.s32.totalorder %s44, 2
      %s46 = scalar_select %p45, 0, %s44
      %s47 = ssub.s32 %s27, %s46
      %s48 = ssub.s32 %s29, %s38
      %s49 = sor.u32 %s47, %s48
      %s50 = ssub.s32 %s28, %s42
      %s51 = sor.u32 %s49, %s50
      %p52 = scmp.eq.s32.totalorder %s51, 0
      %s54 = sadd.s32 %s53, 1
      %s55 = scalar_select %p52, %s53, %s54
      %p58 = pneg %p52
      %p59 = scmp.eq.s32.totalorder %s20, 1
      %p60 = por %p58, %p59
      %p61 = scmp.ne.s32.totalorder %s53, %s56
      %p62 = scmp.eq.s32.totalorder %s20, 0
      %p63 = por %p61, %p62
      %p64 = scmp.ne.s32.totalorder %s53, %s56
      %p65 = scmp.eq.s32.totalorder %s25, 1
      %p66 = por %p64, %p65
      %p67 = scmp.ne.s32.totalorder %s56, %s57
      %p68 = scmp.eq.s32.totalorder %s25, 0
      %p69 = por %p67, %p68
      %p70 = scmp.ne.s32.totalorder %s56, %s57
      %p71 = scmp.eq.s32.totalorder %s26, 1
      %p72 = por %p70, %p71
      %p74 = scmp.ne.s32.totalorder %s57, %s73
      %p75 = scmp.eq.s32.totalorder %s26, 0
      %p76 = por %p74, %p75
      %s78 = sadd.s32 %s77, 1
      %p81 = scmp.eq.s32.totalorder %s20, 1
      %p82 = scmp.ne.s32.totalorder %s77, %s79
      %p83 = scmp.eq.s32.totalorder %s20, 0
      %p84 = por %p82, %p83
      %p85 = scmp.ne.s32.totalorder %s77, %s79
      %p86 = scmp.eq.s32.totalorder %s25, 1
      %p87 = por %p85, %p86
      %p88 = scmp.ne.s32.totalorder %s79, %s80
      %p89 = scmp.eq.s32.totalorder %s25, 0
      %p90 = por %p88, %p89
      %p91 = scmp.ne.s32.totalorder %s79, %s80
      %p92 = scmp.eq.s32.totalorder %s26, 1
      %p93 = por %p91, %p92
      %p95 = scmp.ne.s32.totalorder %s80, %s94
      %p96 = scmp.eq.s32.totalorder %s26, 0
      %p97 = por %p95, %p96
      %s99 = sadd.s32 %s98, 1
      %p102 = scmp.eq.s32.totalorder %s20, 1
      %p103 = scmp.ne.s32.totalorder %s98, %s100
      %p104 = scmp.eq.s32.totalorder %s20, 0
      %p105 = por %p103, %p104
      %p106 = scmp.ne.s32.totalorder %s98, %s100
      %p107 = scmp.eq.s32.totalorder %s25, 1
      %p108 = por %p106, %p107
      %p109 = scmp.ne.s32.totalorder %s100, %s101
      %p110 = scmp.eq.s32.totalorder %s25, 0
      %p111 = por %p109, %p110
      %p112 = scmp.ne.s32.totalorder %s100, %s101
      %p113 = scmp.eq.s32.totalorder %s26, 1
      %p114 = por %p112, %p113
      %p116 = scmp.ne.s32.totalorder %s101, %s115
      %p117 = scmp.eq.s32.totalorder %s26, 0
      %p118 = por %p116, %p117
      %s120 = sadd.s32 %s119, 1
      %p123 = scmp.eq.s32.totalorder %s20, 1
      %p124 = scmp.ne.s32.totalorder %s119, %s121
      %p125 = scmp.eq.s32.totalorder %s20, 0
      %p126 = por %p124, %p125
      %p127 = scmp.ne.s32.totalorder %s119, %s121
      %p128 = scmp.eq.s32.totalorder %s25, 1
      %p129 = por %p127, %p128
      %p130 = scmp.ne.s32.totalorder %s121, %s122
      %p131 = scmp.eq.s32.totalorder %s25, 0
      %p132 = por %p130, %p131
      %p133 = scmp.ne.s32.totalorder %s121, %s122
      %p134 = scmp.eq.s32.totalorder %s26, 1
      %p135 = por %p133, %p134
      %p137 = scmp.ne.s32.totalorder %s122, %s136
      %p138 = scmp.eq.s32.totalorder %s26, 0
      %p139 = por %p137, %p138
      %s140 = ssub.s32 %s27, %s46
      %s141 = ssub.s32 %s28, %s42
      %s142 = sor.u32 %s140, %s141
      %p143 = scmp.eq.s32.totalorder %s142, 0
      %s145 = sadd.s32 %s144, 1
      %s146 = scalar_select %p143, %s144, %s145
      %p149 = pneg %p143
      %p150 = scmp.eq.s32.totalorder %s20, 1
      %p151 = por %p149, %p150
      %p152 = scmp.ne.s32.totalorder %s144, %s147
      %p153 = scmp.eq.s32.totalorder %s20, 0
      %p154 = por %p152, %p153
      %p155 = scmp.ne.s32.totalorder %s144, %s147
      %p156 = scmp.eq.s32.totalorder %s25, 1
      %p157 = por %p155, %p156
      %p158 = scmp.ne.s32.totalorder %s147, %s148
      %p159 = scmp.eq.s32.totalorder %s25, 0
      %p160 = por %p158, %p159
      %p161 = scmp.ne.s32.totalorder %s147, %s148
      %p162 = scmp.eq.s32.totalorder %s26, 1
      %p163 = por %p161, %p162
      %p165 = scmp.ne.s32.totalorder %s148, %s164
      %p166 = scmp.eq.s32.totalorder %s26, 0
      %p167 = por %p165, %p166
      %s169 = sadd.s32 %s168, 1
      %p172 = scmp.eq.s32.totalorder %s20, 1
      %p173 = scmp.ne.s32.totalorder %s168, %s170
      %p174 = scmp.eq.s32.totalorder %s20, 0
      %p175 = por %p173, %p174
      %p176 = scmp.ne.s32.totalorder %s168, %s170
      %p177 = scmp.eq.s32.totalorder %s25, 1
      %p178 = por %p176, %p177
      %p179 = scmp.ne.s32.totalorder %s170, %s171
      %p180 = scmp.eq.s32.totalorder %s25, 0
      %p181 = por %p179, %p180
      %p182 = scmp.ne.s32.totalorder %s170, %s171
      %p183 = scmp.eq.s32.totalorder %s26, 1
      %p184 = por %p182, %p183
      %p186 = scmp.ne.s32.totalorder %s171, %s185
      %p187 = scmp.eq.s32.totalorder %s26, 0
      %p188 = por %p186, %p187
      %s189 = ssub.s32 %s27, %s46
      %s190 = ssub.s32 %s29, %s38
      %s191 = sor.u32 %s189, %s190
      %s192 = ssub.s32 %s28, %s42
      %s193 = sor.u32 %s191, %s192
      %p194 = scmp.eq.s32.totalorder %s193, 0
      %s196 = sadd.s32 %s195, 1
      %s197 = scalar_select %p194, %s195, %s196
      %p200 = pneg %p194
      %p201 = scmp.eq.s32.totalorder %s20, 1
      %p202 = por %p200, %p201
      %p203 = scmp.ne.s32.totalorder %s195, %s198
      %p204 = scmp.eq.s32.totalorder %s20, 0
      %p205 = por %p203, %p204
      %p206 = scmp.ne.s32.totalorder %s195, %s198
      %p207 = scmp.eq.s32.totalorder %s25, 1
      %p208 = por %p206, %p207
      %p209 = scmp.ne.s32.totalorder %s198, %s199
      %p210 = scmp.eq.s32.totalorder %s25, 0
      %p211 = por %p209, %p210
      %p212 = scmp.ne.s32.totalorder %s198, %s199
      %p213 = scmp.eq.s32.totalorder %s26, 1
      %p214 = por %p212, %p213
      %p216 = scmp.ne.s32.totalorder %s199, %s215
      %p217 = scmp.eq.s32.totalorder %s26, 0
      %p218 = por %p216, %p217
      %s219 = ssub.s32 %s27, %s46
      %s220 = ssub.s32 %s28, %s42
      %s221 = sor.u32 %s219, %s220
      %p222 = scmp.eq.s32.totalorder %s221, 0
      %s224 = sadd.s32 %s223, 1
      %s225 = scalar_select %p222, %s223, %s224
      %p228 = pneg %p222
      %p229 = scmp.eq.s32.totalorder %s20, 1
      %p230 = por %p228, %p229
      %p231 = scmp.ne.s32.totalorder %s223, %s226
      %p232 = scmp.eq.s32.totalorder %s20, 0
      %p233 = por %p231, %p232
      %p234 = scmp.ne.s32.totalorder %s223, %s226
      %p235 = scmp.eq.s32.totalorder %s25, 1
      %p236 = por %p234, %p235
      %p237 = scmp.ne.s32.totalorder %s226, %s227
      %p238 = scmp.eq.s32.totalorder %s25, 0
      %p239 = por %p237, %p238
      %p240 = scmp.ne.s32.totalorder %s226, %s227
      %p241 = scmp.eq.s32.totalorder %s26, 1
      %p242 = por %p240, %p241
      %p244 = scmp.ne.s32.totalorder %s227, %s243
      %p245 = scmp.eq.s32.totalorder %s26, 0
      %p246 = por %p244, %p245
      %p247 = scmp.le.s32.totalorder 1, %s20
      %p248 = scmp.lt.s32.totalorder %s20, 3
      %p249 = pnand %p247, %p248
      %p250 = pneg %p249
      // Predicated region
      $region9: #{sggru_forward.1} parent=5 // pred_check
        _
      $region10: #{sggru_forward.1} parent=5 // pred_check_branch
        %252 = sbr.rel (%p249) target = $region12
      $region11: #{sggru_forward.1} parent=5 // pred_region
        %s253 = ssub.s32 %s20, 1
        // Predicated region
        $region13: #{sggru_forward.1} parent=11 // pred_check
          %p254 = pneg %p90
        $region14: #{sggru_forward.1} parent=11 // pred_check_branch
          %256 = sbr.rel (%p254) target = $region16
        $region15: #{sggru_forward.1} parent=11 // pred_region
          _
        $region16: #{sggru_forward.1} parent=11 // pred_fallthru
          _
        // Predicated region
        $region17: #{sggru_forward.1} parent=11 // pred_check
          %p257 = pneg %p111
        $region18: #{sggru_forward.1} parent=11 // pred_check_branch
          %259 = sbr.rel (%p257) target = $region20
        $region19: #{sggru_forward.1} parent=11 // pred_region
          _
        $region20: #{sggru_forward.1} parent=11 // pred_fallthru
          _
        // Predicated region
        $region21: #{sggru_forward.1} parent=11 // pred_check
          %p260 = pneg %p132
        $region22: #{sggru_forward.1} parent=11 // pred_check_branch
          %262 = sbr.rel (%p260) target = $region24
        $region23: #{sggru_forward.1} parent=11 // pred_region
          _
        $region24: #{sggru_forward.1} parent=11 // pred_fallthru
          _
        // Predicated region
        $region25: #{sggru_forward.1} parent=11 // pred_check
          %p263 = pneg %p181
        $region26: #{sggru_forward.1} parent=11 // pred_check_branch
          %265 = sbr.rel (%p263) target = $region28
        $region27: #{sggru_forward.1} parent=11 // pred_region
          _
        $region28: #{sggru_forward.1} parent=11 // pred_fallthru
          _
      $region12: #{sggru_forward.1} parent=5 // pred_fallthru
        _
      %p266 = scmp.lt.s32.totalorder %s20, 2
      // Predicated region
      $region29: #{sggru_forward.1} parent=5 // pred_check
        %p267 = pneg %p266
      $region30: #{sggru_forward.1} parent=5 // pred_check_branch
        %269 = sbr.rel (%p267) target = $region32
      $region31: #{sggru_forward.1} parent=5 // pred_region
        // Predicated region
        $region33: #{sggru_forward.1} parent=31 // pred_check
          %p270 = pneg %p63
        $region34: #{sggru_forward.1} parent=31 // pred_check_branch
          %272 = sbr.rel (%p270) target = $region36
        $region35: #{sggru_forward.1} parent=31 // pred_region
          %s273 = smul.u32 8, %s29
          %s274 = smul.u32 2, %s28
          %p275 = scmp.lt.s32.totalorder %s27, 1
          %s276 = scalar_select %p275, %s27, 1
          %p277 = scmp.lt.s32.totalorder %s273, 7
          %s278 = scalar_select %p277, %s273, 7
          %p279 = scmp.lt.s32.totalorder %s274, 1
          %s280 = scalar_select %p279, %s274, 1
          %s281 = smul.addr %s278, 2
          %s282 = sadd.s32 %s280, %s281
          %s283 = smul.addr %s276, 16
          %s284 = sadd.s32 %s282, %s283
          %s285 = smul.addr %s284, 8
          %s286 = scalar_lea.vmem %s0, %s285
          %s287 = smul.u32 8, %s29
          %s288 = smul.u32 2, %s28
        $region36: #{sggru_forward.1} parent=31 // pred_fallthru
          _
        // Predicated region
        $region37: #{sggru_forward.1} parent=31 // pred_check
          %p289 = pneg %p154
        $region38: #{sggru_forward.1} parent=31 // pred_check_branch
          %291 = sbr.rel (%p289) target = $region40
        $region39: #{sggru_forward.1} parent=31 // pred_region
          %s292 = smul.u32 2, %s28
          %p293 = scmp.lt.s32.totalorder %s27, 1
          %s294 = scalar_select %p293, %s27, 1
          %p295 = scmp.lt.s32.totalorder %s292, 1
          %s296 = scalar_select %p295, %s292, 1
          %s297 = smul.addr %s294, 2
          %s298 = sadd.s32 %s296, %s297
          %s299 = smul.addr %s298, 8
          %s300 = scalar_lea.vmem %s4, %s299
          %s301 = smul.u32 2, %s28
        $region40: #{sggru_forward.1} parent=31 // pred_fallthru
          _
      $region32: #{sggru_forward.1} parent=5 // pred_fallthru
        _
      %p302 = scmp.le.s32.totalorder 1, %s20
      %p303 = scmp.lt.s32.totalorder %s20, 3
      %p304 = pnand %p302, %p303
      %p305 = pneg %p304
      // Predicated region
      $region41: #{sggru_forward.1} parent=5 // pred_check
        _
      $region42: #{sggru_forward.1} parent=5 // pred_check_branch
        %307 = sbr.rel (%p304) target = $region44
      $region43: #{sggru_forward.1} parent=5 // pred_region
        %s308 = ssub.s32 %s20, 1
        %s309 = smul.u32 8, %s32
        %s310 = smul.u32 2, %s31
        %p311 = scmp.lt.s32.totalorder %s30, 1
        %s312 = scalar_select %p311, %s30, 1
        %p313 = scmp.lt.s32.totalorder %s309, 7
        %s314 = scalar_select %p313, %s309, 7
        %p315 = scmp.lt.s32.totalorder %s310, 1
        %s316 = scalar_select %p315, %s310, 1
        %s317 = smul.addr %s314, 2
        %s318 = sadd.s32 %s316, %s317
        %s319 = smul.addr %s312, 16
        %s320 = sadd.s32 %s318, %s319
        %s321 = smul.addr %s320, 8
        %s322 = scalar_lea.vmem %s0, %s321
        %p323 = pneg %p69
        %p324 = pneg %p66
        %p325 = pneg %p90
        %p326 = pneg %p87
        %p327 = pneg %p111
        %p328 = pneg %p108
        %p329 = pneg %p132
        %p330 = pneg %p129
        %s331 = smul.u32 2, %s31
        %p332 = scmp.lt.s32.totalorder %s30, 1
        %s333 = scalar_select %p332, %s30, 1
        %p334 = scmp.lt.s32.totalorder %s331, 1
        %s335 = scalar_select %p334, %s331, 1
        %s336 = smul.addr %s333, 2
        %s337 = sadd.s32 %s335, %s336
        %s338 = smul.addr %s337, 8
        %s339 = scalar_lea.vmem %s4, %s338
        %p340 = pneg %p160
        %p341 = pneg %p157
        %p342 = pneg %p181
        %p343 = pneg %p178
        %p344 = pneg %p211
        %p345 = pneg %p208
        %s346 = sand.u32 %s198, 1
        %s347 = scalar_lea.sflag [#allocation4], %s346
        %s348 = sand.u32 %s198, 1
        %s349 = smul.addr %s348, 128
        %s350 = scalar_lea.vmem [#allocation3], %s349
        %p351 = pneg %p239
        %p352 = pneg %p236
        %s353 = sand.u32 %s226, 1
        %s354 = scalar_lea.sflag [#allocation6], %s353
        %s355 = sand.u32 %s226, 1
        %s356 = smul.addr %s355, 16
        %s357 = scalar_lea.vmem [#allocation5], %s356
        %s358 = smul.u32 8, %s32
        %s359 = smul.u32 2, %s31
        %p360 = scmp.lt.s32.totalorder %s30, 1
        %s361 = scalar_select %p360, %s30, 1
        %p362 = scmp.lt.s32.totalorder %s358, 7
        %s363 = scalar_select %p362, %s358, 7
        %p364 = scmp.lt.s32.totalorder %s359, 1
        %s365 = scalar_select %p364, %s359, 1
        %s366 = smul.addr %s363, 2
        %s367 = sadd.s32 %s365, %s366
        %s368 = smul.addr %s361, 16
        %s369 = sadd.s32 %s367, %s368
        %s370 = smul.addr %s369, 8
        %s371 = scalar_lea.vmem %s0, %s370
        %s372 = smul.u32 8, %s32
        %s373 = smul.u32 2, %s31
        %s374 = smul.u32 2, %s31
        %p375 = scmp.lt.s32.totalorder %s30, 1
        %s376 = scalar_select %p375, %s30, 1
        %p377 = scmp.lt.s32.totalorder %s374, 1
        %s378 = scalar_select %p377, %s374, 1
        %s379 = smul.addr %s376, 2
        %s380 = sadd.s32 %s378, %s379
        %s381 = smul.addr %s380, 8
        %s382 = scalar_lea.vmem %s4, %s381
        %s383 = smul.u32 2, %s31
        %s384 = smul.u32 8, %s32
        %s385 = smul.u32 2, %s31
        %s386 = smul.u32 2, %s31
        %p387 = scmp.eq.s32.totalorder %s32, 0
        // Predicated region
        $region45: #{sggru_forward.1} parent=43 // pred_check
          %p388 = pneg %p387
        $region46: #{sggru_forward.1} parent=43 // pred_check_branch
          %390 = sbr.rel (%p388) target = $region48
        $region47: #{sggru_forward.1} parent=43 // pred_region
          %391 = vst [vmem:[#allocation2] sm:$0xff] 0.0
          %392 = vst [vmem:[#allocation2 + $0x8] sm:$0xff] 0.0
        $region48: #{sggru_forward.1} parent=43 // pred_fallthru
          _
        %v393 = vld [vmem:[%s1] sm:$0xff]
        %v394 = vld [vmem:[%s1 + $0x8] sm:$0xf]
        %v395 = vld [vmem:[%s2] sm:$0xff]
        %v396 = vld [vmem:[%s2 + $0x8] sm:$0xff]
        %v397 = vld [vmem:[%s2 + $0x10] sm:$0xff]
        %v398 = vld [vmem:[%s2 + $0x18] sm:$0xff]
        %v399 = vld [vmem:[%s2 + $0x20] sm:$0xff]
        %v400 = vld [vmem:[%s2 + $0x28] sm:$0xff]
        %v401 = vld [vmem:[%s2 + $0x30] sm:$0xff]
        %v402 = vld [vmem:[%s2 + $0x38] sm:$0xff]
        %v403 = vld [vmem:[%s2 + $0x40] sm:$0xff]
        %v404 = vld [vmem:[%s2 + $0x48] sm:$0xff]
        %v405 = vld [vmem:[%s2 + $0x50] sm:$0xff]
        %v406 = vld [vmem:[%s2 + $0x58] sm:$0xff]
        %v407 = vld [vmem:[%s2 + $0x60] sm:$0xff]
        %v408 = vld [vmem:[%s2 + $0x68] sm:$0xff]
        %v409 = vld [vmem:[%s2 + $0x70] sm:$0xff]
        %v410 = vld [vmem:[%s2 + $0x78] sm:$0xff]
        %v411 = vld [vmem:[%s2 + $0x80] sm:$0xff]
        %v412 = vld [vmem:[%s2 + $0x88] sm:$0xff]
        %v413 = vld [vmem:[%s2 + $0x90] sm:$0xff]
        %v414 = vld [vmem:[%s2 + $0x98] sm:$0xff]
        %v415 = vld [vmem:[%s2 + $0xa0] sm:$0xff]
        %v416 = vld [vmem:[%s2 + $0xa8] sm:$0xff]
        %v417 = vld [vmem:[%s2 + $0xb0] sm:$0xff]
        %v418 = vld [vmem:[%s2 + $0xb8] sm:$0xff]
        %v419 = vld [vmem:[%s2 + $0xc0] sm:$0xff]
        %v420 = vld [vmem:[%s2 + $0xc8] sm:$0xff]
        %v421 = vld [vmem:[%s2 + $0xd0] sm:$0xff]
        %v422 = vld [vmem:[%s2 + $0xd8] sm:$0xff]
        %v423 = vld [vmem:[%s2 + $0xe0] sm:$0xff]
        %v424 = vld [vmem:[%s2 + $0xe8] sm:$0xff]
        %v425 = vld [vmem:[%s2 + $0xf0] sm:$0xff]
        %v426 = vld [vmem:[%s2 + $0xf8] sm:$0xff]
        %v427 = vld [vmem:[%s3] sm:$0xff]
        %v428 = vld [vmem:[%s3 + $0x8] sm:$0xff]
        %v429 = vld [vmem:[%s3 + $0x10] sm:$0xff]
        %v430 = vld [vmem:[%s3 + $0x18] sm:$0xff]
        %v431 = vld [vmem:[%s3 + $0x20] sm:$0xff]
        %v432 = vld [vmem:[%s3 + $0x28] sm:$0xff]
        %v433 = vld [vmem:[%s3 + $0x30] sm:$0xff]
        %v434 = vld [vmem:[%s3 + $0x38] sm:$0xff]
        %v435 = vld [vmem:[%s3 + $0x40] sm:$0xff]
        %v436 = vld [vmem:[%s3 + $0x48] sm:$0xff]
        %v437 = vld [vmem:[%s3 + $0x50] sm:$0xff]
        %v438 = vld [vmem:[%s3 + $0x58] sm:$0xff]
        %v439 = vld [vmem:[%s3 + $0x60] sm:$0xff]
        %v440 = vld [vmem:[%s3 + $0x68] sm:$0xff]
        %v441 = vld [vmem:[%s3 + $0x70] sm:$0xff]
        %v442 = vld [vmem:[%s3 + $0x78] sm:$0xff]
        %v443 = vld [vmem:[%s382] sm:$0xff]
        %v444 = vld [vmem:[%s382 + $0x8] sm:$0xff]
        %446 = vset.pattern.permute.xlu0 0
        %447 = vperm.xlu0 %446, %v443
        %v448 = vpop.permute.xlu0 %447
        %451 = vset.pattern.permute.xlu0 0
        %452 = vperm.xlu0 %451, %v444
        %v453 = vpop.permute.xlu0 %452
        %455 = vset.pattern.permute.xlu0 2
        %456 = vperm.xlu0 %455, %v443
        %v457 = vpop.permute.xlu0 %456
        %459 = vset.pattern.permute.xlu0 2
        %460 = vperm.xlu0 %459, %v444
        %v461 = vpop.permute.xlu0 %460
        %463 = vset.pattern.permute.xlu0 4
        %464 = vperm.xlu0 %463, %v443
        %v465 = vpop.permute.xlu0 %464
        %467 = vset.pattern.permute.xlu0 4
        %468 = vperm.xlu0 %467, %v444
        %v469 = vpop.permute.xlu0 %468
        %471 = vset.pattern.permute.xlu0 1
        %472 = vperm.xlu0 %471, %v443
        %v473 = vpop.permute.xlu0 %472
        %475 = vset.pattern.permute.xlu0 1
        %476 = vperm.xlu0 %475, %v444
        %v477 = vpop.permute.xlu0 %476
        %479 = vset.pattern.permute.xlu0 3
        %480 = vperm.xlu0 %479, %v443
        %v481 = vpop.permute.xlu0 %480
        %483 = vset.pattern.permute.xlu0 3
        %484 = vperm.xlu0 %483, %v444
        %v485 = vpop.permute.xlu0 %484
        %487 = vset.pattern.permute.xlu0 5
        %488 = vperm.xlu0 %487, %v443
        %v489 = vpop.permute.xlu0 %488
        %491 = vset.pattern.permute.xlu0 5
        %492 = vperm.xlu0 %491, %v444
        %v493 = vpop.permute.xlu0 %492
        %v495 = vld [vmem:[%s5] sm:$0x7]
        %v497 = vlaneseq
        %v498 = vshrl.u32 %v497, 7
        %v499 = vsub.s32 0, %v498
        %v500 = vrot.slane %v495, %v499
        %v501 = vlaneseq
        %v502 = vshrl.u32 %v501, 7
        %v503 = vsub.s32 1, %v502
        %v504 = vrot.slane %v495, %v503
        %v505 = vlaneseq
        %v506 = vshrl.u32 %v505, 7
        %v507 = vsub.s32 2, %v506
        %v508 = vrot.slane %v495, %v507
        %v512 = vld [vmem:[#allocation2] sm:$0xff]
        %v513 = vld [vmem:[#allocation2 + $0x8] sm:$0xff]
        %v514 = vld [vmem:[%s371] sm:$0xff]
        %v515 = vld [vmem:[%s371 + $0x8] sm:$0xff]
        %517 = vset.pattern.permute.xlu0 0
        %518 = vperm.xlu0 %517, %v514
        %v519 = vpop.permute.xlu0 %518
        %522 = vset.pattern.permute.xlu0 0
        %523 = vperm.xlu0 %522, %v515
        %v524 = vpop.permute.xlu0 %523
        %v528 = vlaneseq
        %v529 = vshrl.u32 %v528, 7
        %v530 = vsub.s32 0, %v529
        %v531 = vrot.slane %v393, %v530
        %v532 = vlaneseq
        %v533 = vshrl.u32 %v532, 7
        %v534 = vsub.s32 4, %v533
        %v535 = vrot.slane %v393, %v534
        %v536 = vlaneseq
        %v537 = vshrl.u32 %v536, 7
        %v538 = vsub.s32 0, %v537
        %v539 = vrot.slane %v394, %v538
        %v543 = vlaneseq
        %v544 = vshrl.u32 %v543, 7
        %v545 = vsub.s32 0, %v544
        %v546 = vrot.slane %v531, %v545
        %v547 = vlaneseq
        %v548 = vshrl.u32 %v547, 7
        %v549 = vsub.s32 0, %v548
        %v550 = vrot.slane %v535, %v549
        %v551 = vlaneseq
        %v552 = vshrl.u32 %v551, 7
        %v553 = vsub.s32 0, %v552
        %v554 = vrot.slane %v539, %v553
        %v555 = vmul.f32 %v519, %v546
        %v556 = vmul.f32 %v519, %v550
        %v557 = vmul.f32 %v519, %v554
        %v558 = vmul.f32 %v524, %v546
        %v559 = vmul.f32 %v524, %v550
        %v560 = vmul.f32 %v524, %v554
        %561 = vset.pattern.permute.xlu0 1
        %562 = vperm.xlu0 %561, %v514
        %v563 = vpop.permute.xlu0 %562
        %565 = vset.pattern.permute.xlu0 1
        %566 = vperm.xlu0 %565, %v515
        %v567 = vpop.permute.xlu0 %566
        %v569 = vlaneseq
        %v570 = vshrl.u32 %v569, 7
        %v571 = vsub.s32 1, %v570
        %v572 = vrot.slane %v393, %v571
        %v573 = vlaneseq
        %v574 = vshrl.u32 %v573, 7
        %v575 = vsub.s32 5, %v574
        %v576 = vrot.slane %v393, %v575
        %v577 = vlaneseq
        %v578 = vshrl.u32 %v577, 7
        %v579 = vsub.s32 1, %v578
        %v580 = vrot.slane %v394, %v579
        %v584 = vlaneseq
        %v585 = vshrl.u32 %v584, 7
        %v586 = vsub.s32 1, %v585
        %v587 = vrot.slane %v572, %v586
        %v588 = vlaneseq
        %v589 = vshrl.u32 %v588, 7
        %v590 = vsub.s32 1, %v589
        %v591 = vrot.slane %v576, %v590
        %v592 = vlaneseq
        %v593 = vshrl.u32 %v592, 7
        %v594 = vsub.s32 1, %v593
        %v595 = vrot.slane %v580, %v594
        %v596 = vmul.f32 %v563, %v587
        %v597 = vmul.f32 %v563, %v591
        %v598 = vmul.f32 %v563, %v595
        %v599 = vmul.f32 %v567, %v587
        %v600 = vmul.f32 %v567, %v591
        %v601 = vmul.f32 %v567, %v595
        %v602 = vadd.f32 %v555, %v596
        %v603 = vadd.f32 %v556, %v597
        %v604 = vadd.f32 %v557, %v598
        %v605 = vadd.f32 %v558, %v599
        %v606 = vadd.f32 %v559, %v600
        %v607 = vadd.f32 %v560, %v601
        %608 = vset.pattern.permute.xlu0 2
        %609 = vperm.xlu0 %608, %v514
        %v610 = vpop.permute.xlu0 %609
        %612 = vset.pattern.permute.xlu0 2
        %613 = vperm.xlu0 %612, %v515
        %v614 = vpop.permute.xlu0 %613
        %v616 = vlaneseq
        %v617 = vshrl.u32 %v616, 7
        %v618 = vsub.s32 2, %v617
        %v619 = vrot.slane %v393, %v618
        %v620 = vlaneseq
        %v621 = vshrl.u32 %v620, 7
        %v622 = vsub.s32 6, %v621
        %v623 = vrot.slane %v393, %v622
        %v624 = vlaneseq
        %v625 = vshrl.u32 %v624, 7
        %v626 = vsub.s32 2, %v625
        %v627 = vrot.slane %v394, %v626
        %v631 = vlaneseq
        %v632 = vshrl.u32 %v631, 7
        %v633 = vsub.s32 2, %v632
        %v634 = vrot.slane %v619, %v633
        %v635 = vlaneseq
        %v636 = vshrl.u32 %v635, 7
        %v637 = vsub.s32 2, %v636
        %v638 = vrot.slane %v623, %v637
        %v639 = vlaneseq
        %v640 = vshrl.u32 %v639, 7
        %v641 = vsub.s32 2, %v640
        %v642 = vrot.slane %v627, %v641
        %v643 = vmul.f32 %v610, %v634
        %v644 = vmul.f32 %v610, %v638
        %v645 = vmul.f32 %v610, %v642
        %v646 = vmul.f32 %v614, %v634
        %v647 = vmul.f32 %v614, %v638
        %v648 = vmul.f32 %v614, %v642
        %v649 = vadd.f32 %v602, %v643
        %v650 = vadd.f32 %v603, %v644
        %v651 = vadd.f32 %v604, %v645
        %v652 = vadd.f32 %v605, %v646
        %v653 = vadd.f32 %v606, %v647
        %v654 = vadd.f32 %v607, %v648
        %655 = vset.pattern.permute.xlu0 3
        %656 = vperm.xlu0 %655, %v514
        %v657 = vpop.permute.xlu0 %656
        %659 = vset.pattern.permute.xlu0 3
        %660 = vperm.xlu0 %659, %v515
        %v661 = vpop.permute.xlu0 %660
        %v663 = vlaneseq
        %v664 = vshrl.u32 %v663, 7
        %v665 = vsub.s32 3, %v664
        %v666 = vrot.slane %v393, %v665
        %v667 = vlaneseq
        %v668 = vshrl.u32 %v667, 7
        %v669 = vsub.s32 7, %v668
        %v670 = vrot.slane %v393, %v669
        %v671 = vlaneseq
        %v672 = vshrl.u32 %v671, 7
        %v673 = vsub.s32 3, %v672
        %v674 = vrot.slane %v394, %v673
        %v678 = vlaneseq
        %v679 = vshrl.u32 %v678, 7
        %v680 = vsub.s32 3, %v679
        %v681 = vrot.slane %v666, %v680
        %v682 = vlaneseq
        %v683 = vshrl.u32 %v682, 7
        %v684 = vsub.s32 3, %v683
        %v685 = vrot.slane %v670, %v684
        %v686 = vlaneseq
        %v687 = vshrl.u32 %v686, 7
        %v688 = vsub.s32 3, %v687
        %v689 = vrot.slane %v674, %v688
        %v690 = vmul.f32 %v657, %v681
        %v691 = vmul.f32 %v657, %v685
        %v692 = vmul.f32 %v657, %v689
        %v693 = vmul.f32 %v661, %v681
        %v694 = vmul.f32 %v661, %v685
        %v695 = vmul.f32 %v661, %v689
        %v696 = vadd.f32 %v649, %v690
        %v697 = vadd.f32 %v650, %v691
        %v698 = vadd.f32 %v651, %v692
        %v699 = vadd.f32 %v652, %v693
        %v700 = vadd.f32 %v653, %v694
        %v701 = vadd.f32 %v654, %v695
        %v702 = vmul.f32 %v448, %v696
        %v703 = vmul.f32 %v457, %v697
        %v704 = vmul.f32 %v465, %v698
        %v705 = vmul.f32 %v453, %v699
        %v706 = vmul.f32 %v461, %v700
        %v707 = vmul.f32 %v469, %v701
        %v708 = vadd.f32 %v702, %v500
        %v709 = vadd.f32 %v703, %v504
        %v710 = vadd.f32 %v704, %v508
        %v711 = vadd.f32 %v705, %v500
        %v712 = vadd.f32 %v706, %v504
        %v713 = vadd.f32 %v707, %v508
        %714 = vmatprep.subr.mxu0 %v426
        %715 = vmatpush1.msra.mxu0 %v425
        %716 = vmatprep.subr.mxu0 %v424
        %717 = vmatpush1.msra.mxu0 %v423
        %718 = vmatprep.subr.mxu0 %v422
        %719 = vmatpush1.msra.mxu0 %v421
        %720 = vmatprep.subr.mxu0 %v420
        %721 = vmatpush1.msra.mxu0 %v419
        %722 = vmatprep.subr.mxu0 %v418
        %723 = vmatpush1.msra.mxu0 %v417
        %724 = vmatprep.subr.mxu0 %v416
        %725 = vmatpush1.msra.mxu0 %v415
        %726 = vmatprep.subr.mxu0 %v414
        %727 = vmatpush1.msra.mxu0 %v413
        %728 = vmatprep.subr.mxu0 %v412
        %729 = vmatpush1.msra.mxu0 %v411
        %730 = vmatprep.subr.mxu0 %v410
        %731 = vmatpush1.msra.mxu0 %v409
        %732 = vmatprep.subr.mxu0 %v408
        %733 = vmatpush1.msra.mxu0 %v407
        %734 = vmatprep.subr.mxu0 %v406
        %735 = vmatpush1.msra.mxu0 %v405
        %736 = vmatprep.subr.mxu0 %v404
        %737 = vmatpush1.msra.mxu0 %v403
        %738 = vmatprep.subr.mxu0 %v402
        %739 = vmatpush1.msra.mxu0 %v401
        %740 = vmatprep.subr.mxu0 %v400
        %741 = vmatpush1.msra.mxu0 %v399
        %742 = vmatprep.subr.mxu0 %v398
        %743 = vmatpush1.msra.mxu0 %v397
        %744 = vmatprep.subr.mxu0 %v396
        %745 = vmatpush1.msra.mxu0 %v395
        %746 = vmatprep.subr.mxu0 0.0
        %747 = vmatpush2.msra.mxu0 0.0
        %748 = vmatprep.subr.mxu0 0.0
        %749 = vmatpush2.msra.mxu0 0.0
        %750 = vmatprep.subr.mxu0 0.0
        %751 = vmatpush2.msra.mxu0 0.0
        %752 = vmatprep.subr.mxu0 0.0
        %753 = vmatpush2.msra.mxu0 0.0
        %754 = vmatprep.subr.mxu0 0.0
        %755 = vmatpush2.msra.mxu0 0.0
        %756 = vmatprep.subr.mxu0 0.0
        %757 = vmatpush2.msra.mxu0 0.0
        %758 = vmatprep.subr.mxu0 0.0
        %759 = vmatpush2.msra.mxu0 0.0
        %760 = vmatprep.subr.mxu0 0.0
        %761 = vmatpush2.msra.mxu0 0.0
        %762 = vmatprep.subr.mxu0 0.0
        %763 = vmatpush2.msra.mxu0 0.0
        %764 = vmatprep.subr.mxu0 0.0
        %765 = vmatpush2.msra.mxu0 0.0
        %766 = vmatprep.subr.mxu0 0.0
        %767 = vmatpush2.msra.mxu0 0.0
        %768 = vmatprep.subr.mxu0 0.0
        %769 = vmatpush2.msra.mxu0 0.0
        %770 = vmatprep.subr.mxu0 0.0
        %771 = vmatpush2.msra.mxu0 0.0
        %772 = vmatprep.subr.mxu0 0.0
        %773 = vmatpush2.msra.mxu0 0.0
        %774 = vmatprep.subr.mxu0 0.0
        %775 = vmatpush2.msra.mxu0 0.0
        %776 = vmatprep.subr.mxu0 0.0
        %777 = vmatpush2.msra.mxu0 0.0
        %778 = vmatprep.mubr.f32.mxu0 0.0
        %779 = vmatmul.mubr.f32.gmra.mxu0 %v512
        %v780 = vpop.f32.mrf.mxu0
        %v781 = vadd.f32 0.0, %v780
        %v782 = vpop.f32.mrf.mxu0
        %v783 = vadd.f32 0.0, %v782
        %784 = vmatprep.mubr.f32.mxu0 0.0
        %785 = vmatmul.mubr.f32.gmra.mxu0 %v513
        %v786 = vpop.f32.mrf.mxu0
        %v787 = vadd.f32 0.0, %v786
        %v788 = vpop.f32.mrf.mxu0
        %v789 = vadd.f32 0.0, %v788
        %790 = vdwg.mxu0
        %v791 = vmul.f32 %v473, %v781
        %v792 = vmul.f32 %v481, %v783
        %v793 = vmul.f32 %v477, %v787
        %v794 = vmul.f32 %v485, %v789
        %v795 = vadd.f32 %v708, %v791
        %v796 = vadd.f32 %v711, %v793
        %v797 = vxor.u32 %v795, 2147483648
        %v798 = vxor.u32 %v796, 2147483648
        %v799 = vmul.f32 %v797, 1.442695
        %v800 = vpow.pop %v799
        %v801 = vmul.f32 %v798, 1.442695
        %v802 = vpow.pop %v801
        %v803 = vadd.f32 %v800, 1.0
        %v804 = vadd.f32 %v802, 1.0
        %v805 = vrcp.pop %v803
        %v806 = vmul.f32 1.0, %v805
        %v807 = vrcp.pop %v804
        %v808 = vmul.f32 1.0, %v807
        %v809 = vadd.f32 %v709, %v792
        %v810 = vadd.f32 %v712, %v794
        %v811 = vxor.u32 %v809, 2147483648
        %v812 = vxor.u32 %v810, 2147483648
        %v813 = vmul.f32 %v811, 1.442695
        %v814 = vpow.pop %v813
        %v815 = vmul.f32 %v812, 1.442695
        %v816 = vpow.pop %v815
        %v817 = vadd.f32 %v814, 1.0
        %v818 = vadd.f32 %v816, 1.0
        %v819 = vrcp.pop %v817
        %v820 = vmul.f32 1.0, %v819
        %v821 = vrcp.pop %v818
        %v822 = vmul.f32 1.0, %v821
        %v823 = vmul.f32 %v512, %v820
        %v824 = vmul.f32 %v513, %v822
        %v825 = vmul.f32 %v489, %v823
        %v826 = vmul.f32 %v493, %v824
        %827 = vmatprep.subr.mxu0 0.0
        %828 = vmatpush1.msra.mxu0 %v442
        %829 = vmatprep.subr.mxu0 0.0
        %830 = vmatpush1.msra.mxu0 %v441
        %831 = vmatprep.subr.mxu0 0.0
        %832 = vmatpush1.msra.mxu0 %v440
        %833 = vmatprep.subr.mxu0 0.0
        %834 = vmatpush1.msra.mxu0 %v439
        %835 = vmatprep.subr.mxu0 0.0
        %836 = vmatpush1.msra.mxu0 %v438
        %837 = vmatprep.subr.mxu0 0.0
        %838 = vmatpush1.msra.mxu0 %v437
        %839 = vmatprep.subr.mxu0 0.0
        %840 = vmatpush1.msra.mxu0 %v436
        %841 = vmatprep.subr.mxu0 0.0
        %842 = vmatpush1.msra.mxu0 %v435
        %843 = vmatprep.subr.mxu0 0.0
        %844 = vmatpush1.msra.mxu0 %v434
        %845 = vmatprep.subr.mxu0 0.0
        %846 = vmatpush1.msra.mxu0 %v433
        %847 = vmatprep.subr.mxu0 0.0
        %848 = vmatpush1.msra.mxu0 %v432
        %849 = vmatprep.subr.mxu0 0.0
        %850 = vmatpush1.msra.mxu0 %v431
        %851 = vmatprep.subr.mxu0 0.0
        %852 = vmatpush1.msra.mxu0 %v430
        %853 = vmatprep.subr.mxu0 0.0
        %854 = vmatpush1.msra.mxu0 %v429
        %855 = vmatprep.subr.mxu0 0.0
        %856 = vmatpush1.msra.mxu0 %v428
        %857 = vmatprep.subr.mxu0 0.0
        %858 = vmatpush1.msra.mxu0 %v427
        %859 = vmatprep.subr.mxu0 0.0
        %860 = vmatpush2.msra.mxu0 0.0
        %861 = vmatprep.subr.mxu0 0.0
        %862 = vmatpush2.msra.mxu0 0.0
        %863 = vmatprep.subr.mxu0 0.0
        %864 = vmatpush2.msra.mxu0 0.0
        %865 = vmatprep.subr.mxu0 0.0
        %866 = vmatpush2.msra.mxu0 0.0
        %867 = vmatprep.subr.mxu0 0.0
        %868 = vmatpush2.msra.mxu0 0.0
        %869 = vmatprep.subr.mxu0 0.0
        %870 = vmatpush2.msra.mxu0 0.0
        %871 = vmatprep.subr.mxu0 0.0
        %872 = vmatpush2.msra.mxu0 0.0
        %873 = vmatprep.subr.mxu0 0.0
        %874 = vmatpush2.msra.mxu0 0.0
        %875 = vmatprep.subr.mxu0 0.0
        %876 = vmatpush2.msra.mxu0 0.0
        %877 = vmatprep.subr.mxu0 0.0
        %878 = vmatpush2.msra.mxu0 0.0
        %879 = vmatprep.subr.mxu0 0.0
        %880 = vmatpush2.msra.mxu0 0.0
        %881 = vmatprep.subr.mxu0 0.0
        %882 = vmatpush2.msra.mxu0 0.0
        %883 = vmatprep.subr.mxu0 0.0
        %884 = vmatpush2.msra.mxu0 0.0
        %885 = vmatprep.subr.mxu0 0.0
        %886 = vmatpush2.msra.mxu0 0.0
        %887 = vmatprep.subr.mxu0 0.0
        %888 = vmatpush2.msra.mxu0 0.0
        %889 = vmatprep.subr.mxu0 0.0
        %890 = vmatpush2.msra.mxu0 0.0
        %891 = vmatprep.mubr.f32.mxu0 0.0
        %892 = vmatmul.mubr.f32.gmra.mxu0 %v825
        %v893 = vpop.f32.mrf.mxu0
        %v894 = vadd.f32 0.0, %v893
        %v895 = vpop.f32.mrf.mxu0
        %896 = vmatprep.mubr.f32.mxu0 0.0
        %897 = vmatmul.mubr.f32.gmra.mxu0 %v826
        %v898 = vpop.f32.mrf.mxu0
        %v899 = vadd.f32 0.0, %v898
        %v900 = vpop.f32.mrf.mxu0
        %901 = vdwg.mxu0
        %v902 = vadd.f32 %v710, %v894
        %v903 = vadd.f32 %v713, %v899
        %v904 = vtanh.pop %v902
        %v905 = vtanh.pop %v903
        %v906 = vsub.f32 %v512, %v904
        %v907 = vsub.f32 %v513, %v905
        %v908 = vmul.f32 %v806, %v906
        %v909 = vmul.f32 %v808, %v907
        %v910 = vadd.f32 %v904, %v908
        %v911 = vadd.f32 %v905, %v909
        %vm912 = vcmask 261120
        %913 = vst.msk [vmem:[%s350] sm:$0xff] %vm912, %v910
        %914 = vst.msk [vmem:[%s350 + $0x8] sm:$0xff] %vm912, %v911
        %s915 = scalar_lea.vmem %s371, 16
        %v916 = vld [vmem:[%s915] sm:$0xff]
        %v917 = vld [vmem:[%s915 + $0x8] sm:$0xff]
        %919 = vset.pattern.permute.xlu0 0
        %920 = vperm.xlu0 %919, %v916
        %v921 = vpop.permute.xlu0 %920
        %924 = vset.pattern.permute.xlu0 0
        %925 = vperm.xlu0 %924, %v917
        %v926 = vpop.permute.xlu0 %925
        %v928 = vmul.f32 %v921, %v546
        %v929 = vmul.f32 %v921, %v550
        %v930 = vmul.f32 %v921, %v554
        %v931 = vmul.f32 %v926, %v546
        %v932 = vmul.f32 %v926, %v550
        %v933 = vmul.f32 %v926, %v554
        %934 = vset.pattern.permute.xlu0 1
        %935 = vperm.xlu0 %934, %v916
        %v936 = vpop.permute.xlu0 %935
        %938 = vset.pattern.permute.xlu0 1
        %939 = vperm.xlu0 %938, %v917
        %v940 = vpop.permute.xlu0 %939
        %v942 = vmul.f32 %v936, %v587
        %v943 = vmul.f32 %v936, %v591
        %v944 = vmul.f32 %v936, %v595
        %v945 = vmul.f32 %v940, %v587
        %v946 = vmul.f32 %v940, %v591
        %v947 = vmul.f32 %v940, %v595
        %v948 = vadd.f32 %v928, %v942
        %v949 = vadd.f32 %v929, %v943
        %v950 = vadd.f32 %v930, %v944
        %v951 = vadd.f32 %v931, %v945
        %v952 = vadd.f32 %v932, %v946
        %v953 = vadd.f32 %v933, %v947
        %954 = vset.pattern.permute.xlu0 2
        %955 = vperm.xlu0 %954, %v916
        %v956 = vpop.permute.xlu0 %955
        %958 = vset.pattern.permute.xlu0 2
        %959 = vperm.xlu0 %958, %v917
        %v960 = vpop.permute.xlu0 %959
        %v962 = vmul.f32 %v956, %v634
        %v963 = vmul.f32 %v956, %v638
        %v964 = vmul.f32 %v956, %v642
        %v965 = vmul.f32 %v960, %v634
        %v966 = vmul.f32 %v960, %v638
        %v967 = vmul.f32 %v960, %v642
        %v968 = vadd.f32 %v948, %v962
        %v969 = vadd.f32 %v949, %v963
        %v970 = vadd.f32 %v950, %v964
        %v971 = vadd.f32 %v951, %v965
        %v972 = vadd.f32 %v952, %v966
        %v973 = vadd.f32 %v953, %v967
        %974 = vset.pattern.permute.xlu0 3
        %975 = vperm.xlu0 %974, %v916
        %v976 = vpop.permute.xlu0 %975
        %978 = vset.pattern.permute.xlu0 3
        %979 = vperm.xlu0 %978, %v917
        %v980 = vpop.permute.xlu0 %979
        %v982 = vmul.f32 %v976, %v681
        %v983 = vmul.f32 %v976, %v685
        %v984 = vmul.f32 %v976, %v689
        %v985 = vmul.f32 %v980, %v681
        %v986 = vmul.f32 %v980, %v685
        %v987 = vmul.f32 %v980, %v689
        %v988 = vadd.f32 %v968, %v982
        %v989 = vadd.f32 %v969, %v983
        %v990 = vadd.f32 %v970, %v984
        %v991 = vadd.f32 %v971, %v985
        %v992 = vadd.f32 %v972, %v986
        %v993 = vadd.f32 %v973, %v987
        %v994 = vmul.f32 %v448, %v988
        %v995 = vmul.f32 %v457, %v989
        %v996 = vmul.f32 %v465, %v990
        %v997 = vmul.f32 %v453, %v991
        %v998 = vmul.f32 %v461, %v992
        %v999 = vmul.f32 %v469, %v993
        %v1000 = vadd.f32 %v994, %v500
        %v1001 = vadd.f32 %v995, %v504
        %v1002 = vadd.f32 %v996, %v508
        %v1003 = vadd.f32 %v997, %v500
        %v1004 = vadd.f32 %v998, %v504
        %v1005 = vadd.f32 %v999, %v508
        %1006 = vmatprep.subr.mxu0 %v426
        %1007 = vmatpush1.msra.mxu0 %v425
        %1008 = vmatprep.subr.mxu0 %v424
        %1009 = vmatpush1.msra.mxu0 %v423
        %1010 = vmatprep.subr.mxu0 %v422
        %1011 = vmatpush1.msra.mxu0 %v421
        %1012 = vmatprep.subr.mxu0 %v420
        %1013 = vmatpush1.msra.mxu0 %v419
        %1014 = vmatprep.subr.mxu0 %v418
        %1015 = vmatpush1.msra.mxu0 %v417
        %1016 = vmatprep.subr.mxu0 %v416
        %1017 = vmatpush1.msra.mxu0 %v415
        %1018 = vmatprep.subr.mxu0 %v414
        %1019 = vmatpush1.msra.mxu0 %v413
        %1020 = vmatprep.subr.mxu0 %v412
        %1021 = vmatpush1.msra.mxu0 %v411
        %1022 = vmatprep.subr.mxu0 %v410
        %1023 = vmatpush1.msra.mxu0 %v409
        %1024 = vmatprep.subr.mxu0 %v408
        %1025 = vmatpush1.msra.mxu0 %v407
        %1026 = vmatprep.subr.mxu0 %v406
        %1027 = vmatpush1.msra.mxu0 %v405
        %1028 = vmatprep.subr.mxu0 %v404
        %1029 = vmatpush1.msra.mxu0 %v403
        %1030 = vmatprep.subr.mxu0 %v402
        %1031 = vmatpush1.msra.mxu0 %v401
        %1032 = vmatprep.subr.mxu0 %v400
        %1033 = vmatpush1.msra.mxu0 %v399
        %1034 = vmatprep.subr.mxu0 %v398
        %1035 = vmatpush1.msra.mxu0 %v397
        %1036 = vmatprep.subr.mxu0 %v396
        %1037 = vmatpush1.msra.mxu0 %v395
        %1038 = vmatprep.subr.mxu0 0.0
        %1039 = vmatpush2.msra.mxu0 0.0
        %1040 = vmatprep.subr.mxu0 0.0
        %1041 = vmatpush2.msra.mxu0 0.0
        %1042 = vmatprep.subr.mxu0 0.0
        %1043 = vmatpush2.msra.mxu0 0.0
        %1044 = vmatprep.subr.mxu0 0.0
        %1045 = vmatpush2.msra.mxu0 0.0
        %1046 = vmatprep.subr.mxu0 0.0
        %1047 = vmatpush2.msra.mxu0 0.0
        %1048 = vmatprep.subr.mxu0 0.0
        %1049 = vmatpush2.msra.mxu0 0.0
        %1050 = vmatprep.subr.mxu0 0.0
        %1051 = vmatpush2.msra.mxu0 0.0
        %1052 = vmatprep.subr.mxu0 0.0
        %1053 = vmatpush2.msra.mxu0 0.0
        %1054 = vmatprep.subr.mxu0 0.0
        %1055 = vmatpush2.msra.mxu0 0.0
        %1056 = vmatprep.subr.mxu0 0.0
        %1057 = vmatpush2.msra.mxu0 0.0
        %1058 = vmatprep.subr.mxu0 0.0
        %1059 = vmatpush2.msra.mxu0 0.0
        %1060 = vmatprep.subr.mxu0 0.0
        %1061 = vmatpush2.msra.mxu0 0.0
        %1062 = vmatprep.subr.mxu0 0.0
        %1063 = vmatpush2.msra.mxu0 0.0
        %1064 = vmatprep.subr.mxu0 0.0
        %1065 = vmatpush2.msra.mxu0 0.0
        %1066 = vmatprep.subr.mxu0 0.0
        %1067 = vmatpush2.msra.mxu0 0.0
        %1068 = vmatprep.subr.mxu0 0.0
        %1069 = vmatpush2.msra.mxu0 0.0
        %1070 = vmatprep.mubr.f32.mxu0 0.0
        %1071 = vmatmul.mubr.f32.gmra.mxu0 %v910
        %v1072 = vpop.f32.mrf.mxu0
        %v1073 = vadd.f32 0.0, %v1072
        %v1074 = vpop.f32.mrf.mxu0
        %v1075 = vadd.f32 0.0, %v1074
        %1076 = vmatprep.mubr.f32.mxu0 0.0
        %1077 = vmatmul.mubr.f32.gmra.mxu0 %v911
        %v1078 = vpop.f32.mrf.mxu0
        %v1079 = vadd.f32 0.0, %v1078
        %v1080 = vpop.f32.mrf.mxu0
        %v1081 = vadd.f32 0.0, %v1080
        %1082 = vdwg.mxu0
        %v1083 = vmul.f32 %v473, %v1073
        %v1084 = vmul.f32 %v481, %v1075
        %v1085 = vmul.f32 %v477, %v1079
        %v1086 = vmul.f32 %v485, %v1081
        %v1087 = vadd.f32 %v1000, %v1083
        %v1088 = vadd.f32 %v1003, %v1085
        %v1089 = vxor.u32 %v1087, 2147483648
        %v1090 = vxor.u32 %v1088, 2147483648
        %v1091 = vmul.f32 %v1089, 1.442695
        %v1092 = vpow.pop %v1091
        %v1093 = vmul.f32 %v1090, 1.442695
        %v1094 = vpow.pop %v1093
        %v1095 = vadd.f32 %v1092, 1.0
        %v1096 = vadd.f32 %v1094, 1.0
        %v1097 = vrcp.pop %v1095
        %v1098 = vmul.f32 1.0, %v1097
        %v1099 = vrcp.pop %v1096
        %v1100 = vmul.f32 1.0, %v1099
        %v1101 = vadd.f32 %v1001, %v1084
        %v1102 = vadd.f32 %v1004, %v1086
        %v1103 = vxor.u32 %v1101, 2147483648
        %v1104 = vxor.u32 %v1102, 2147483648
        %v1105 = vmul.f32 %v1103, 1.442695
        %v1106 = vpow.pop %v1105
        %v1107 = vmul.f32 %v1104, 1.442695
        %v1108 = vpow.pop %v1107
        %v1109 = vadd.f32 %v1106, 1.0
        %v1110 = vadd.f32 %v1108, 1.0
        %v1111 = vrcp.pop %v1109
        %v1112 = vmul.f32 1.0, %v1111
        %v1113 = vrcp.pop %v1110
        %v1114 = vmul.f32 1.0, %v1113
        %v1115 = vmul.f32 %v910, %v1112
        %v1116 = vmul.f32 %v911, %v1114
        %v1117 = vmul.f32 %v489, %v1115
        %v1118 = vmul.f32 %v493, %v1116
        %1119 = vmatprep.subr.mxu0 0.0
        %1120 = vmatpush1.msra.mxu0 %v442
        %1121 = vmatprep.subr.mxu0 0.0
        %1122 = vmatpush1.msra.mxu0 %v441
        %1123 = vmatprep.subr.mxu0 0.0
        %1124 = vmatpush1.msra.mxu0 %v440
        %1125 = vmatprep.subr.mxu0 0.0
        %1126 = vmatpush1.msra.mxu0 %v439
        %1127 = vmatprep.subr.mxu0 0.0
        %1128 = vmatpush1.msra.mxu0 %v438
        %1129 = vmatprep.subr.mxu0 0.0
        %1130 = vmatpush1.msra.mxu0 %v437
        %1131 = vmatprep.subr.mxu0 0.0
        %1132 = vmatpush1.msra.mxu0 %v436
        %1133 = vmatprep.subr.mxu0 0.0
        %1134 = vmatpush1.msra.mxu0 %v435
        %1135 = vmatprep.subr.mxu0 0.0
        %1136 = vmatpush1.msra.mxu0 %v434
        %1137 = vmatprep.subr.mxu0 0.0
        %1138 = vmatpush1.msra.mxu0 %v433
        %1139 = vmatprep.subr.mxu0 0.0
        %1140 = vmatpush1.msra.mxu0 %v432
        %1141 = vmatprep.subr.mxu0 0.0
        %1142 = vmatpush1.msra.mxu0 %v431
        %1143 = vmatprep.subr.mxu0 0.0
        %1144 = vmatpush1.msra.mxu0 %v430
        %1145 = vmatprep.subr.mxu0 0.0
        %1146 = vmatpush1.msra.mxu0 %v429
        %1147 = vmatprep.subr.mxu0 0.0
        %1148 = vmatpush1.msra.mxu0 %v428
        %1149 = vmatprep.subr.mxu0 0.0
        %1150 = vmatpush1.msra.mxu0 %v427
        %1151 = vmatprep.subr.mxu0 0.0
        %1152 = vmatpush2.msra.mxu0 0.0
        %1153 = vmatprep.subr.mxu0 0.0
        %1154 = vmatpush2.msra.mxu0 0.0
        %1155 = vmatprep.subr.mxu0 0.0
        %1156 = vmatpush2.msra.mxu0 0.0
        %1157 = vmatprep.subr.mxu0 0.0
        %1158 = vmatpush2.msra.mxu0 0.0
        %1159 = vmatprep.subr.mxu0 0.0
        %1160 = vmatpush2.msra.mxu0 0.0
        %1161 = vmatprep.subr.mxu0 0.0
        %1162 = vmatpush2.msra.mxu0 0.0
        %1163 = vmatprep.subr.mxu0 0.0
        %1164 = vmatpush2.msra.mxu0 0.0
        %1165 = vmatprep.subr.mxu0 0.0
        %1166 = vmatpush2.msra.mxu0 0.0
        %1167 = vmatprep.subr.mxu0 0.0
        %1168 = vmatpush2.msra.mxu0 0.0
        %1169 = vmatprep.subr.mxu0 0.0
        %1170 = vmatpush2.msra.mxu0 0.0
        %1171 = vmatprep.subr.mxu0 0.0
        %1172 = vmatpush2.msra.mxu0 0.0
        %1173 = vmatprep.subr.mxu0 0.0
        %1174 = vmatpush2.msra.mxu0 0.0
        %1175 = vmatprep.subr.mxu0 0.0
        %1176 = vmatpush2.msra.mxu0 0.0
        %1177 = vmatprep.subr.mxu0 0.0
        %1178 = vmatpush2.msra.mxu0 0.0
        %1179 = vmatprep.subr.mxu0 0.0
        %1180 = vmatpush2.msra.mxu0 0.0
        %1181 = vmatprep.subr.mxu0 0.0
        %1182 = vmatpush2.msra.mxu0 0.0
        %1183 = vmatprep.mubr.f32.mxu0 0.0
        %1184 = vmatmul.mubr.f32.gmra.mxu0 %v1117
        %v1185 = vpop.f32.mrf.mxu0
        %v1186 = vadd.f32 0.0, %v1185
        %v1187 = vpop.f32.mrf.mxu0
        %1188 = vmatprep.mubr.f32.mxu0 0.0
        %1189 = vmatmul.mubr.f32.gmra.mxu0 %v1118
        %v1190 = vpop.f32.mrf.mxu0
        %v1191 = vadd.f32 0.0, %v1190
        %v1192 = vpop.f32.mrf.mxu0
        %1193 = vdwg.mxu0
        %v1194 = vadd.f32 %v1002, %v1186
        %v1195 = vadd.f32 %v1005, %v1191
        %v1196 = vtanh.pop %v1194
        %v1197 = vtanh.pop %v1195
        %v1198 = vsub.f32 %v910, %v1196
        %v1199 = vsub.f32 %v911, %v1197
        %v1200 = vmul.f32 %v1098, %v1198
        %v1201 = vmul.f32 %v1100, %v1199
        %v1202 = vadd.f32 %v1196, %v1200
        %v1203 = vadd.f32 %v1197, %v1201
        %s1204 = scalar_lea.vmem %s350, 16 [#allocation3]
        %1205 = vst.msk [vmem:[%s1204] sm:$0xff] %vm912, %v1202
        %1206 = vst.msk [vmem:[%s1204 + $0x8] sm:$0xff] %vm912, %v1203
        %s1207 = scalar_lea.vmem %s371, 32
        %v1208 = vld [vmem:[%s1207] sm:$0xff]
        %v1209 = vld [vmem:[%s1207 + $0x8] sm:$0xff]
        %1211 = vset.pattern.permute.xlu0 0
        %1212 = vperm.xlu0 %1211, %v1208
        %v1213 = vpop.permute.xlu0 %1212
        %1216 = vset.pattern.permute.xlu0 0
        %1217 = vperm.xlu0 %1216, %v1209
        %v1218 = vpop.permute.xlu0 %1217
        %v1220 = vmul.f32 %v1213, %v546
        %v1221 = vmul.f32 %v1213, %v550
        %v1222 = vmul.f32 %v1213, %v554
        %v1223 = vmul.f32 %v1218, %v546
        %v1224 = vmul.f32 %v1218, %v550
        %v1225 = vmul.f32 %v1218, %v554
        %1226 = vset.pattern.permute.xlu0 1
        %1227 = vperm.xlu0 %1226, %v1208
        %v1228 = vpop.permute.xlu0 %1227
        %1230 = vset.pattern.permute.xlu0 1
        %1231 = vperm.xlu0 %1230, %v1209
        %v1232 = vpop.permute.xlu0 %1231
        %v1234 = vmul.f32 %v1228, %v587
        %v1235 = vmul.f32 %v1228, %v591
        %v1236 = vmul.f32 %v1228, %v595
        %v1237 = vmul.f32 %v1232, %v587
        %v1238 = vmul.f32 %v1232, %v591
        %v1239 = vmul.f32 %v1232, %v595
        %v1240 = vadd.f32 %v1220, %v1234
        %v1241 = vadd.f32 %v1221, %v1235
        %v1242 = vadd.f32 %v1222, %v1236
        %v1243 = vadd.f32 %v1223, %v1237
        %v1244 = vadd.f32 %v1224, %v1238
        %v1245 = vadd.f32 %v1225, %v1239
        %1246 = vset.pattern.permute.xlu0 2
        %1247 = vperm.xlu0 %1246, %v1208
        %v1248 = vpop.permute.xlu0 %1247
        %1250 = vset.pattern.permute.xlu0 2
        %1251 = vperm.xlu0 %1250, %v1209
        %v1252 = vpop.permute.xlu0 %1251
        %v1254 = vmul.f32 %v1248, %v634
        %v1255 = vmul.f32 %v1248, %v638
        %v1256 = vmul.f32 %v1248, %v642
        %v1257 = vmul.f32 %v1252, %v634
        %v1258 = vmul.f32 %v1252, %v638
        %v1259 = vmul.f32 %v1252, %v642
        %v1260 = vadd.f32 %v1240, %v1254
        %v1261 = vadd.f32 %v1241, %v1255
        %v1262 = vadd.f32 %v1242, %v1256
        %v1263 = vadd.f32 %v1243, %v1257
        %v1264 = vadd.f32 %v1244, %v1258
        %v1265 = vadd.f32 %v1245, %v1259
        %1266 = vset.pattern.permute.xlu0 3
        %1267 = vperm.xlu0 %1266, %v1208
        %v1268 = vpop.permute.xlu0 %1267
        %1270 = vset.pattern.permute.xlu0 3
        %1271 = vperm.xlu0 %1270, %v1209
        %v1272 = vpop.permute.xlu0 %1271
        %v1274 = vmul.f32 %v1268, %v681
        %v1275 = vmul.f32 %v1268, %v685
        %v1276 = vmul.f32 %v1268, %v689
        %v1277 = vmul.f32 %v1272, %v681
        %v1278 = vmul.f32 %v1272, %v685
        %v1279 = vmul.f32 %v1272, %v689
        %v1280 = vadd.f32 %v1260, %v1274
        %v1281 = vadd.f32 %v1261, %v1275
        %v1282 = vadd.f32 %v1262, %v1276
        %v1283 = vadd.f32 %v1263, %v1277
        %v1284 = vadd.f32 %v1264, %v1278
        %v1285 = vadd.f32 %v1265, %v1279
        %v1286 = vmul.f32 %v448, %v1280
        %v1287 = vmul.f32 %v457, %v1281
        %v1288 = vmul.f32 %v465, %v1282
        %v1289 = vmul.f32 %v453, %v1283
        %v1290 = vmul.f32 %v461, %v1284
        %v1291 = vmul.f32 %v469, %v1285
        %v1292 = vadd.f32 %v1286, %v500
        %v1293 = vadd.f32 %v1287, %v504
        %v1294 = vadd.f32 %v1288, %v508
        %v1295 = vadd.f32 %v1289, %v500
        %v1296 = vadd.f32 %v1290, %v504
        %v1297 = vadd.f32 %v1291, %v508
        %1298 = vmatprep.subr.mxu0 %v426
        %1299 = vmatpush1.msra.mxu0 %v425
        %1300 = vmatprep.subr.mxu0 %v424
        %1301 = vmatpush1.msra.mxu0 %v423
        %1302 = vmatprep.subr.mxu0 %v422
        %1303 = vmatpush1.msra.mxu0 %v421
        %1304 = vmatprep.subr.mxu0 %v420
        %1305 = vmatpush1.msra.mxu0 %v419
        %1306 = vmatprep.subr.mxu0 %v418
        %1307 = vmatpush1.msra.mxu0 %v417
        %1308 = vmatprep.subr.mxu0 %v416
        %1309 = vmatpush1.msra.mxu0 %v415
        %1310 = vmatprep.subr.mxu0 %v414
        %1311 = vmatpush1.msra.mxu0 %v413
        %1312 = vmatprep.subr.mxu0 %v412
        %1313 = vmatpush1.msra.mxu0 %v411
        %1314 = vmatprep.subr.mxu0 %v410
        %1315 = vmatpush1.msra.mxu0 %v409
        %1316 = vmatprep.subr.mxu0 %v408
        %1317 = vmatpush1.msra.mxu0 %v407
        %1318 = vmatprep.subr.mxu0 %v406
        %1319 = vmatpush1.msra.mxu0 %v405
        %1320 = vmatprep.subr.mxu0 %v404
        %1321 = vmatpush1.msra.mxu0 %v403
        %1322 = vmatprep.subr.mxu0 %v402
        %1323 = vmatpush1.msra.mxu0 %v401
        %1324 = vmatprep.subr.mxu0 %v400
        %1325 = vmatpush1.msra.mxu0 %v399
        %1326 = vmatprep.subr.mxu0 %v398
        %1327 = vmatpush1.msra.mxu0 %v397
        %1328 = vmatprep.subr.mxu0 %v396
        %1329 = vmatpush1.msra.mxu0 %v395
        %1330 = vmatprep.subr.mxu0 0.0
        %1331 = vmatpush2.msra.mxu0 0.0
        %1332 = vmatprep.subr.mxu0 0.0
        %1333 = vmatpush2.msra.mxu0 0.0
        %1334 = vmatprep.subr.mxu0 0.0
        %1335 = vmatpush2.msra.mxu0 0.0
        %1336 = vmatprep.subr.mxu0 0.0
        %1337 = vmatpush2.msra.mxu0 0.0
        %1338 = vmatprep.subr.mxu0 0.0
        %1339 = vmatpush2.msra.mxu0 0.0
        %1340 = vmatprep.subr.mxu0 0.0
        %1341 = vmatpush2.msra.mxu0 0.0
        %1342 = vmatprep.subr.mxu0 0.0
        %1343 = vmatpush2.msra.mxu0 0.0
        %1344 = vmatprep.subr.mxu0 0.0
        %1345 = vmatpush2.msra.mxu0 0.0
        %1346 = vmatprep.subr.mxu0 0.0
        %1347 = vmatpush2.msra.mxu0 0.0
        %1348 = vmatprep.subr.mxu0 0.0
        %1349 = vmatpush2.msra.mxu0 0.0
        %1350 = vmatprep.subr.mxu0 0.0
        %1351 = vmatpush2.msra.mxu0 0.0
        %1352 = vmatprep.subr.mxu0 0.0
        %1353 = vmatpush2.msra.mxu0 0.0
        %1354 = vmatprep.subr.mxu0 0.0
        %1355 = vmatpush2.msra.mxu0 0.0
        %1356 = vmatprep.subr.mxu0 0.0
        %1357 = vmatpush2.msra.mxu0 0.0
        %1358 = vmatprep.subr.mxu0 0.0
        %1359 = vmatpush2.msra.mxu0 0.0
        %1360 = vmatprep.subr.mxu0 0.0
        %1361 = vmatpush2.msra.mxu0 0.0
        %1362 = vmatprep.mubr.f32.mxu0 0.0
        %1363 = vmatmul.mubr.f32.gmra.mxu0 %v1202
        %v1364 = vpop.f32.mrf.mxu0
        %v1365 = vadd.f32 0.0, %v1364
        %v1366 = vpop.f32.mrf.mxu0
        %v1367 = vadd.f32 0.0, %v1366
        %1368 = vmatprep.mubr.f32.mxu0 0.0
        %1369 = vmatmul.mubr.f32.gmra.mxu0 %v1203
        %v1370 = vpop.f32.mrf.mxu0
        %v1371 = vadd.f32 0.0, %v1370
        %v1372 = vpop.f32.mrf.mxu0
        %v1373 = vadd.f32 0.0, %v1372
        %1374 = vdwg.mxu0
        %v1375 = vmul.f32 %v473, %v1365
        %v1376 = vmul.f32 %v481, %v1367
        %v1377 = vmul.f32 %v477, %v1371
        %v1378 = vmul.f32 %v485, %v1373
        %v1379 = vadd.f32 %v1292, %v1375
        %v1380 = vadd.f32 %v1295, %v1377
        %v1381 = vxor.u32 %v1379, 2147483648
        %v1382 = vxor.u32 %v1380, 2147483648
        %v1383 = vmul.f32 %v1381, 1.442695
        %v1384 = vpow.pop %v1383
        %v1385 = vmul.f32 %v1382, 1.442695
        %v1386 = vpow.pop %v1385
        %v1387 = vadd.f32 %v1384, 1.0
        %v1388 = vadd.f32 %v1386, 1.0
        %v1389 = vrcp.pop %v1387
        %v1390 = vmul.f32 1.0, %v1389
        %v1391 = vrcp.pop %v1388
        %v1392 = vmul.f32 1.0, %v1391
        %v1393 = vadd.f32 %v1293, %v1376
        %v1394 = vadd.f32 %v1296, %v1378
        %v1395 = vxor.u32 %v1393, 2147483648
        %v1396 = vxor.u32 %v1394, 2147483648
        %v1397 = vmul.f32 %v1395, 1.442695
        %v1398 = vpow.pop %v1397
        %v1399 = vmul.f32 %v1396, 1.442695
        %v1400 = vpow.pop %v1399
        %v1401 = vadd.f32 %v1398, 1.0
        %v1402 = vadd.f32 %v1400, 1.0
        %v1403 = vrcp.pop %v1401
        %v1404 = vmul.f32 1.0, %v1403
        %v1405 = vrcp.pop %v1402
        %v1406 = vmul.f32 1.0, %v1405
        %v1407 = vmul.f32 %v1202, %v1404
        %v1408 = vmul.f32 %v1203, %v1406
        %v1409 = vmul.f32 %v489, %v1407
        %v1410 = vmul.f32 %v493, %v1408
        %1411 = vmatprep.subr.mxu0 0.0
        %1412 = vmatpush1.msra.mxu0 %v442
        %1413 = vmatprep.subr.mxu0 0.0
        %1414 = vmatpush1.msra.mxu0 %v441
        %1415 = vmatprep.subr.mxu0 0.0
        %1416 = vmatpush1.msra.mxu0 %v440
        %1417 = vmatprep.subr.mxu0 0.0
        %1418 = vmatpush1.msra.mxu0 %v439
        %1419 = vmatprep.subr.mxu0 0.0
        %1420 = vmatpush1.msra.mxu0 %v438
        %1421 = vmatprep.subr.mxu0 0.0
        %1422 = vmatpush1.msra.mxu0 %v437
        %1423 = vmatprep.subr.mxu0 0.0
        %1424 = vmatpush1.msra.mxu0 %v436
        %1425 = vmatprep.subr.mxu0 0.0
        %1426 = vmatpush1.msra.mxu0 %v435
        %1427 = vmatprep.subr.mxu0 0.0
        %1428 = vmatpush1.msra.mxu0 %v434
        %1429 = vmatprep.subr.mxu0 0.0
        %1430 = vmatpush1.msra.mxu0 %v433
        %1431 = vmatprep.subr.mxu0 0.0
        %1432 = vmatpush1.msra.mxu0 %v432
        %1433 = vmatprep.subr.mxu0 0.0
        %1434 = vmatpush1.msra.mxu0 %v431
        %1435 = vmatprep.subr.mxu0 0.0
        %1436 = vmatpush1.msra.mxu0 %v430
        %1437 = vmatprep.subr.mxu0 0.0
        %1438 = vmatpush1.msra.mxu0 %v429
        %1439 = vmatprep.subr.mxu0 0.0
        %1440 = vmatpush1.msra.mxu0 %v428
        %1441 = vmatprep.subr.mxu0 0.0
        %1442 = vmatpush1.msra.mxu0 %v427
        %1443 = vmatprep.subr.mxu0 0.0
        %1444 = vmatpush2.msra.mxu0 0.0
        %1445 = vmatprep.subr.mxu0 0.0
        %1446 = vmatpush2.msra.mxu0 0.0
        %1447 = vmatprep.subr.mxu0 0.0
        %1448 = vmatpush2.msra.mxu0 0.0
        %1449 = vmatprep.subr.mxu0 0.0
        %1450 = vmatpush2.msra.mxu0 0.0
        %1451 = vmatprep.subr.mxu0 0.0
        %1452 = vmatpush2.msra.mxu0 0.0
        %1453 = vmatprep.subr.mxu0 0.0
        %1454 = vmatpush2.msra.mxu0 0.0
        %1455 = vmatprep.subr.mxu0 0.0
        %1456 = vmatpush2.msra.mxu0 0.0
        %1457 = vmatprep.subr.mxu0 0.0
        %1458 = vmatpush2.msra.mxu0 0.0
        %1459 = vmatprep.subr.mxu0 0.0
        %1460 = vmatpush2.msra.mxu0 0.0
        %1461 = vmatprep.subr.mxu0 0.0
        %1462 = vmatpush2.msra.mxu0 0.0
        %1463 = vmatprep.subr.mxu0 0.0
        %1464 = vmatpush2.msra.mxu0 0.0
        %1465 = vmatprep.subr.mxu0 0.0
        %1466 = vmatpush2.msra.mxu0 0.0
        %1467 = vmatprep.subr.mxu0 0.0
        %1468 = vmatpush2.msra.mxu0 0.0
        %1469 = vmatprep.subr.mxu0 0.0
        %1470 = vmatpush2.msra.mxu0 0.0
        %1471 = vmatprep.subr.mxu0 0.0
        %1472 = vmatpush2.msra.mxu0 0.0
        %1473 = vmatprep.subr.mxu0 0.0
        %1474 = vmatpush2.msra.mxu0 0.0
        %1475 = vmatprep.mubr.f32.mxu0 0.0
        %1476 = vmatmul.mubr.f32.gmra.mxu0 %v1409
        %v1477 = vpop.f32.mrf.mxu0
        %v1478 = vadd.f32 0.0, %v1477
        %v1479 = vpop.f32.mrf.mxu0
        %1480 = vmatprep.mubr.f32.mxu0 0.0
        %1481 = vmatmul.mubr.f32.gmra.mxu0 %v1410
        %v1482 = vpop.f32.mrf.mxu0
        %v1483 = vadd.f32 0.0, %v1482
        %v1484 = vpop.f32.mrf.mxu0
        %1485 = vdwg.mxu0
        %v1486 = vadd.f32 %v1294, %v1478
        %v1487 = vadd.f32 %v1297, %v1483
        %v1488 = vtanh.pop %v1486
        %v1489 = vtanh.pop %v1487
        %v1490 = vsub.f32 %v1202, %v1488
        %v1491 = vsub.f32 %v1203, %v1489
        %v1492 = vmul.f32 %v1390, %v1490
        %v1493 = vmul.f32 %v1392, %v1491
        %v1494 = vadd.f32 %v1488, %v1492
        %v1495 = vadd.f32 %v1489, %v1493
        %s1496 = scalar_lea.vmem %s350, 32 [#allocation3]
        %1497 = vst.msk [vmem:[%s1496] sm:$0xff] %vm912, %v1494
        %1498 = vst.msk [vmem:[%s1496 + $0x8] sm:$0xff] %vm912, %v1495
        %s1499 = scalar_lea.vmem %s371, 48
        %v1500 = vld [vmem:[%s1499] sm:$0xff]
        %v1501 = vld [vmem:[%s1499 + $0x8] sm:$0xff]
        %1503 = vset.pattern.permute.xlu0 0
        %1504 = vperm.xlu0 %1503, %v1500
        %v1505 = vpop.permute.xlu0 %1504
        %1508 = vset.pattern.permute.xlu0 0
        %1509 = vperm.xlu0 %1508, %v1501
        %v1510 = vpop.permute.xlu0 %1509
        %v1512 = vmul.f32 %v1505, %v546
        %v1513 = vmul.f32 %v1505, %v550
        %v1514 = vmul.f32 %v1505, %v554
        %v1515 = vmul.f32 %v1510, %v546
        %v1516 = vmul.f32 %v1510, %v550
        %v1517 = vmul.f32 %v1510, %v554
        %1518 = vset.pattern.permute.xlu0 1
        %1519 = vperm.xlu0 %1518, %v1500
        %v1520 = vpop.permute.xlu0 %1519
        %1522 = vset.pattern.permute.xlu0 1
        %1523 = vperm.xlu0 %1522, %v1501
        %v1524 = vpop.permute.xlu0 %1523
        %v1526 = vmul.f32 %v1520, %v587
        %v1527 = vmul.f32 %v1520, %v591
        %v1528 = vmul.f32 %v1520, %v595
        %v1529 = vmul.f32 %v1524, %v587
        %v1530 = vmul.f32 %v1524, %v591
        %v1531 = vmul.f32 %v1524, %v595
        %v1532 = vadd.f32 %v1512, %v1526
        %v1533 = vadd.f32 %v1513, %v1527
        %v1534 = vadd.f32 %v1514, %v1528
        %v1535 = vadd.f32 %v1515, %v1529
        %v1536 = vadd.f32 %v1516, %v1530
        %v1537 = vadd.f32 %v1517, %v1531
        %1538 = vset.pattern.permute.xlu0 2
        %1539 = vperm.xlu0 %1538, %v1500
        %v1540 = vpop.permute.xlu0 %1539
        %1542 = vset.pattern.permute.xlu0 2
        %1543 = vperm.xlu0 %1542, %v1501
        %v1544 = vpop.permute.xlu0 %1543
        %v1546 = vmul.f32 %v1540, %v634
        %v1547 = vmul.f32 %v1540, %v638
        %v1548 = vmul.f32 %v1540, %v642
        %v1549 = vmul.f32 %v1544, %v634
        %v1550 = vmul.f32 %v1544, %v638
        %v1551 = vmul.f32 %v1544, %v642
        %v1552 = vadd.f32 %v1532, %v1546
        %v1553 = vadd.f32 %v1533, %v1547
        %v1554 = vadd.f32 %v1534, %v1548
        %v1555 = vadd.f32 %v1535, %v1549
        %v1556 = vadd.f32 %v1536, %v1550
        %v1557 = vadd.f32 %v1537, %v1551
        %1558 = vset.pattern.permute.xlu0 3
        %1559 = vperm.xlu0 %1558, %v1500
        %v1560 = vpop.permute.xlu0 %1559
        %1562 = vset.pattern.permute.xlu0 3
        %1563 = vperm.xlu0 %1562, %v1501
        %v1564 = vpop.permute.xlu0 %1563
        %v1566 = vmul.f32 %v1560, %v681
        %v1567 = vmul.f32 %v1560, %v685
        %v1568 = vmul.f32 %v1560, %v689
        %v1569 = vmul.f32 %v1564, %v681
        %v1570 = vmul.f32 %v1564, %v685
        %v1571 = vmul.f32 %v1564, %v689
        %v1572 = vadd.f32 %v1552, %v1566
        %v1573 = vadd.f32 %v1553, %v1567
        %v1574 = vadd.f32 %v1554, %v1568
        %v1575 = vadd.f32 %v1555, %v1569
        %v1576 = vadd.f32 %v1556, %v1570
        %v1577 = vadd.f32 %v1557, %v1571
        %v1578 = vmul.f32 %v448, %v1572
        %v1579 = vmul.f32 %v457, %v1573
        %v1580 = vmul.f32 %v465, %v1574
        %v1581 = vmul.f32 %v453, %v1575
        %v1582 = vmul.f32 %v461, %v1576
        %v1583 = vmul.f32 %v469, %v1577
        %v1584 = vadd.f32 %v1578, %v500
        %v1585 = vadd.f32 %v1579, %v504
        %v1586 = vadd.f32 %v1580, %v508
        %v1587 = vadd.f32 %v1581, %v500
        %v1588 = vadd.f32 %v1582, %v504
        %v1589 = vadd.f32 %v1583, %v508
        %1590 = vmatprep.subr.mxu0 %v426
        %1591 = vmatpush1.msra.mxu0 %v425
        %1592 = vmatprep.subr.mxu0 %v424
        %1593 = vmatpush1.msra.mxu0 %v423
        %1594 = vmatprep.subr.mxu0 %v422
        %1595 = vmatpush1.msra.mxu0 %v421
        %1596 = vmatprep.subr.mxu0 %v420
        %1597 = vmatpush1.msra.mxu0 %v419
        %1598 = vmatprep.subr.mxu0 %v418
        %1599 = vmatpush1.msra.mxu0 %v417
        %1600 = vmatprep.subr.mxu0 %v416
        %1601 = vmatpush1.msra.mxu0 %v415
        %1602 = vmatprep.subr.mxu0 %v414
        %1603 = vmatpush1.msra.mxu0 %v413
        %1604 = vmatprep.subr.mxu0 %v412
        %1605 = vmatpush1.msra.mxu0 %v411
        %1606 = vmatprep.subr.mxu0 %v410
        %1607 = vmatpush1.msra.mxu0 %v409
        %1608 = vmatprep.subr.mxu0 %v408
        %1609 = vmatpush1.msra.mxu0 %v407
        %1610 = vmatprep.subr.mxu0 %v406
        %1611 = vmatpush1.msra.mxu0 %v405
        %1612 = vmatprep.subr.mxu0 %v404
        %1613 = vmatpush1.msra.mxu0 %v403
        %1614 = vmatprep.subr.mxu0 %v402
        %1615 = vmatpush1.msra.mxu0 %v401
        %1616 = vmatprep.subr.mxu0 %v400
        %1617 = vmatpush1.msra.mxu0 %v399
        %1618 = vmatprep.subr.mxu0 %v398
        %1619 = vmatpush1.msra.mxu0 %v397
        %1620 = vmatprep.subr.mxu0 %v396
        %1621 = vmatpush1.msra.mxu0 %v395
        %1622 = vmatprep.subr.mxu0 0.0
        %1623 = vmatpush2.msra.mxu0 0.0
        %1624 = vmatprep.subr.mxu0 0.0
        %1625 = vmatpush2.msra.mxu0 0.0
        %1626 = vmatprep.subr.mxu0 0.0
        %1627 = vmatpush2.msra.mxu0 0.0
        %1628 = vmatprep.subr.mxu0 0.0
        %1629 = vmatpush2.msra.mxu0 0.0
        %1630 = vmatprep.subr.mxu0 0.0
        %1631 = vmatpush2.msra.mxu0 0.0
        %1632 = vmatprep.subr.mxu0 0.0
        %1633 = vmatpush2.msra.mxu0 0.0
        %1634 = vmatprep.subr.mxu0 0.0
        %1635 = vmatpush2.msra.mxu0 0.0
        %1636 = vmatprep.subr.mxu0 0.0
        %1637 = vmatpush2.msra.mxu0 0.0
        %1638 = vmatprep.subr.mxu0 0.0
        %1639 = vmatpush2.msra.mxu0 0.0
        %1640 = vmatprep.subr.mxu0 0.0
        %1641 = vmatpush2.msra.mxu0 0.0
        %1642 = vmatprep.subr.mxu0 0.0
        %1643 = vmatpush2.msra.mxu0 0.0
        %1644 = vmatprep.subr.mxu0 0.0
        %1645 = vmatpush2.msra.mxu0 0.0
        %1646 = vmatprep.subr.mxu0 0.0
        %1647 = vmatpush2.msra.mxu0 0.0
        %1648 = vmatprep.subr.mxu0 0.0
        %1649 = vmatpush2.msra.mxu0 0.0
        %1650 = vmatprep.subr.mxu0 0.0
        %1651 = vmatpush2.msra.mxu0 0.0
        %1652 = vmatprep.subr.mxu0 0.0
        %1653 = vmatpush2.msra.mxu0 0.0
        %1654 = vmatprep.mubr.f32.mxu0 0.0
        %1655 = vmatmul.mubr.f32.gmra.mxu0 %v1494
        %v1656 = vpop.f32.mrf.mxu0
        %v1657 = vadd.f32 0.0, %v1656
        %v1658 = vpop.f32.mrf.mxu0
        %v1659 = vadd.f32 0.0, %v1658
        %1660 = vmatprep.mubr.f32.mxu0 0.0
        %1661 = vmatmul.mubr.f32.gmra.mxu0 %v1495
        %v1662 = vpop.f32.mrf.mxu0
        %v1663 = vadd.f32 0.0, %v1662
        %v1664 = vpop.f32.mrf.mxu0
        %v1665 = vadd.f32 0.0, %v1664
        %1666 = vdwg.mxu0
        %v1667 = vmul.f32 %v473, %v1657
        %v1668 = vmul.f32 %v481, %v1659
        %v1669 = vmul.f32 %v477, %v1663
        %v1670 = vmul.f32 %v485, %v1665
        %v1671 = vadd.f32 %v1584, %v1667
        %v1672 = vadd.f32 %v1587, %v1669
        %v1673 = vxor.u32 %v1671, 2147483648
        %v1674 = vxor.u32 %v1672, 2147483648
        %v1675 = vmul.f32 %v1673, 1.442695
        %v1676 = vpow.pop %v1675
        %v1677 = vmul.f32 %v1674, 1.442695
        %v1678 = vpow.pop %v1677
        %v1679 = vadd.f32 %v1676, 1.0
        %v1680 = vadd.f32 %v1678, 1.0
        %v1681 = vrcp.pop %v1679
        %v1682 = vmul.f32 1.0, %v1681
        %v1683 = vrcp.pop %v1680
        %v1684 = vmul.f32 1.0, %v1683
        %v1685 = vadd.f32 %v1585, %v1668
        %v1686 = vadd.f32 %v1588, %v1670
        %v1687 = vxor.u32 %v1685, 2147483648
        %v1688 = vxor.u32 %v1686, 2147483648
        %v1689 = vmul.f32 %v1687, 1.442695
        %v1690 = vpow.pop %v1689
        %v1691 = vmul.f32 %v1688, 1.442695
        %v1692 = vpow.pop %v1691
        %v1693 = vadd.f32 %v1690, 1.0
        %v1694 = vadd.f32 %v1692, 1.0
        %v1695 = vrcp.pop %v1693
        %v1696 = vmul.f32 1.0, %v1695
        %v1697 = vrcp.pop %v1694
        %v1698 = vmul.f32 1.0, %v1697
        %v1699 = vmul.f32 %v1494, %v1696
        %v1700 = vmul.f32 %v1495, %v1698
        %v1701 = vmul.f32 %v489, %v1699
        %v1702 = vmul.f32 %v493, %v1700
        %1703 = vmatprep.subr.mxu0 0.0
        %1704 = vmatpush1.msra.mxu0 %v442
        %1705 = vmatprep.subr.mxu0 0.0
        %1706 = vmatpush1.msra.mxu0 %v441
        %1707 = vmatprep.subr.mxu0 0.0
        %1708 = vmatpush1.msra.mxu0 %v440
        %1709 = vmatprep.subr.mxu0 0.0
        %1710 = vmatpush1.msra.mxu0 %v439
        %1711 = vmatprep.subr.mxu0 0.0
        %1712 = vmatpush1.msra.mxu0 %v438
        %1713 = vmatprep.subr.mxu0 0.0
        %1714 = vmatpush1.msra.mxu0 %v437
        %1715 = vmatprep.subr.mxu0 0.0
        %1716 = vmatpush1.msra.mxu0 %v436
        %1717 = vmatprep.subr.mxu0 0.0
        %1718 = vmatpush1.msra.mxu0 %v435
        %1719 = vmatprep.subr.mxu0 0.0
        %1720 = vmatpush1.msra.mxu0 %v434
        %1721 = vmatprep.subr.mxu0 0.0
        %1722 = vmatpush1.msra.mxu0 %v433
        %1723 = vmatprep.subr.mxu0 0.0
        %1724 = vmatpush1.msra.mxu0 %v432
        %1725 = vmatprep.subr.mxu0 0.0
        %1726 = vmatpush1.msra.mxu0 %v431
        %1727 = vmatprep.subr.mxu0 0.0
        %1728 = vmatpush1.msra.mxu0 %v430
        %1729 = vmatprep.subr.mxu0 0.0
        %1730 = vmatpush1.msra.mxu0 %v429
        %1731 = vmatprep.subr.mxu0 0.0
        %1732 = vmatpush1.msra.mxu0 %v428
        %1733 = vmatprep.subr.mxu0 0.0
        %1734 = vmatpush1.msra.mxu0 %v427
        %1735 = vmatprep.subr.mxu0 0.0
        %1736 = vmatpush2.msra.mxu0 0.0
        %1737 = vmatprep.subr.mxu0 0.0
        %1738 = vmatpush2.msra.mxu0 0.0
        %1739 = vmatprep.subr.mxu0 0.0
        %1740 = vmatpush2.msra.mxu0 0.0
        %1741 = vmatprep.subr.mxu0 0.0
        %1742 = vmatpush2.msra.mxu0 0.0
        %1743 = vmatprep.subr.mxu0 0.0
        %1744 = vmatpush2.msra.mxu0 0.0
        %1745 = vmatprep.subr.mxu0 0.0
        %1746 = vmatpush2.msra.mxu0 0.0
        %1747 = vmatprep.subr.mxu0 0.0
        %1748 = vmatpush2.msra.mxu0 0.0
        %1749 = vmatprep.subr.mxu0 0.0
        %1750 = vmatpush2.msra.mxu0 0.0
        %1751 = vmatprep.subr.mxu0 0.0
        %1752 = vmatpush2.msra.mxu0 0.0
        %1753 = vmatprep.subr.mxu0 0.0
        %1754 = vmatpush2.msra.mxu0 0.0
        %1755 = vmatprep.subr.mxu0 0.0
        %1756 = vmatpush2.msra.mxu0 0.0
        %1757 = vmatprep.subr.mxu0 0.0
        %1758 = vmatpush2.msra.mxu0 0.0
        %1759 = vmatprep.subr.mxu0 0.0
        %1760 = vmatpush2.msra.mxu0 0.0
        %1761 = vmatprep.subr.mxu0 0.0
        %1762 = vmatpush2.msra.mxu0 0.0
        %1763 = vmatprep.subr.mxu0 0.0
        %1764 = vmatpush2.msra.mxu0 0.0
        %1765 = vmatprep.subr.mxu0 0.0
        %1766 = vmatpush2.msra.mxu0 0.0
        %1767 = vmatprep.mubr.f32.mxu0 0.0
        %1768 = vmatmul.mubr.f32.gmra.mxu0 %v1701
        %v1769 = vpop.f32.mrf.mxu0
        %v1770 = vadd.f32 0.0, %v1769
        %v1771 = vpop.f32.mrf.mxu0
        %1772 = vmatprep.mubr.f32.mxu0 0.0
        %1773 = vmatmul.mubr.f32.gmra.mxu0 %v1702
        %v1774 = vpop.f32.mrf.mxu0
        %v1775 = vadd.f32 0.0, %v1774
        %v1776 = vpop.f32.mrf.mxu0
        %1777 = vdwg.mxu0
        %v1778 = vadd.f32 %v1586, %v1770
        %v1779 = vadd.f32 %v1589, %v1775
        %v1780 = vtanh.pop %v1778
        %v1781 = vtanh.pop %v1779
        %v1782 = vsub.f32 %v1494, %v1780
        %v1783 = vsub.f32 %v1495, %v1781
        %v1784 = vmul.f32 %v1682, %v1782
        %v1785 = vmul.f32 %v1684, %v1783
        %v1786 = vadd.f32 %v1780, %v1784
        %v1787 = vadd.f32 %v1781, %v1785
        %s1788 = scalar_lea.vmem %s350, 48 [#allocation3]
        %1789 = vst.msk [vmem:[%s1788] sm:$0xff] %vm912, %v1786
        %1790 = vst.msk [vmem:[%s1788 + $0x8] sm:$0xff] %vm912, %v1787
        %s1791 = scalar_lea.vmem %s371, 64
        %v1792 = vld [vmem:[%s1791] sm:$0xff]
        %v1793 = vld [vmem:[%s1791 + $0x8] sm:$0xff]
        %1795 = vset.pattern.permute.xlu0 0
        %1796 = vperm.xlu0 %1795, %v1792
        %v1797 = vpop.permute.xlu0 %1796
        %1800 = vset.pattern.permute.xlu0 0
        %1801 = vperm.xlu0 %1800, %v1793
        %v1802 = vpop.permute.xlu0 %1801
        %v1804 = vmul.f32 %v1797, %v546
        %v1805 = vmul.f32 %v1797, %v550
        %v1806 = vmul.f32 %v1797, %v554
        %v1807 = vmul.f32 %v1802, %v546
        %v1808 = vmul.f32 %v1802, %v550
        %v1809 = vmul.f32 %v1802, %v554
        %1810 = vset.pattern.permute.xlu0 1
        %1811 = vperm.xlu0 %1810, %v1792
        %v1812 = vpop.permute.xlu0 %1811
        %1814 = vset.pattern.permute.xlu0 1
        %1815 = vperm.xlu0 %1814, %v1793
        %v1816 = vpop.permute.xlu0 %1815
        %v1818 = vmul.f32 %v1812, %v587
        %v1819 = vmul.f32 %v1812, %v591
        %v1820 = vmul.f32 %v1812, %v595
        %v1821 = vmul.f32 %v1816, %v587
        %v1822 = vmul.f32 %v1816, %v591
        %v1823 = vmul.f32 %v1816, %v595
        %v1824 = vadd.f32 %v1804, %v1818
        %v1825 = vadd.f32 %v1805, %v1819
        %v1826 = vadd.f32 %v1806, %v1820
        %v1827 = vadd.f32 %v1807, %v1821
        %v1828 = vadd.f32 %v1808, %v1822
        %v1829 = vadd.f32 %v1809, %v1823
        %1830 = vset.pattern.permute.xlu0 2
        %1831 = vperm.xlu0 %1830, %v1792
        %v1832 = vpop.permute.xlu0 %1831
        %1834 = vset.pattern.permute.xlu0 2
        %1835 = vperm.xlu0 %1834, %v1793
        %v1836 = vpop.permute.xlu0 %1835
        %v1838 = vmul.f32 %v1832, %v634
        %v1839 = vmul.f32 %v1832, %v638
        %v1840 = vmul.f32 %v1832, %v642
        %v1841 = vmul.f32 %v1836, %v634
        %v1842 = vmul.f32 %v1836, %v638
        %v1843 = vmul.f32 %v1836, %v642
        %v1844 = vadd.f32 %v1824, %v1838
        %v1845 = vadd.f32 %v1825, %v1839
        %v1846 = vadd.f32 %v1826, %v1840
        %v1847 = vadd.f32 %v1827, %v1841
        %v1848 = vadd.f32 %v1828, %v1842
        %v1849 = vadd.f32 %v1829, %v1843
        %1850 = vset.pattern.permute.xlu0 3
        %1851 = vperm.xlu0 %1850, %v1792
        %v1852 = vpop.permute.xlu0 %1851
        %1854 = vset.pattern.permute.xlu0 3
        %1855 = vperm.xlu0 %1854, %v1793
        %v1856 = vpop.permute.xlu0 %1855
        %v1858 = vmul.f32 %v1852, %v681
        %v1859 = vmul.f32 %v1852, %v685
        %v1860 = vmul.f32 %v1852, %v689
        %v1861 = vmul.f32 %v1856, %v681
        %v1862 = vmul.f32 %v1856, %v685
        %v1863 = vmul.f32 %v1856, %v689
        %v1864 = vadd.f32 %v1844, %v1858
        %v1865 = vadd.f32 %v1845, %v1859
        %v1866 = vadd.f32 %v1846, %v1860
        %v1867 = vadd.f32 %v1847, %v1861
        %v1868 = vadd.f32 %v1848, %v1862
        %v1869 = vadd.f32 %v1849, %v1863
        %v1870 = vmul.f32 %v448, %v1864
        %v1871 = vmul.f32 %v457, %v1865
        %v1872 = vmul.f32 %v465, %v1866
        %v1873 = vmul.f32 %v453, %v1867
        %v1874 = vmul.f32 %v461, %v1868
        %v1875 = vmul.f32 %v469, %v1869
        %v1876 = vadd.f32 %v1870, %v500
        %v1877 = vadd.f32 %v1871, %v504
        %v1878 = vadd.f32 %v1872, %v508
        %v1879 = vadd.f32 %v1873, %v500
        %v1880 = vadd.f32 %v1874, %v504
        %v1881 = vadd.f32 %v1875, %v508
        %1882 = vmatprep.subr.mxu0 %v426
        %1883 = vmatpush1.msra.mxu0 %v425
        %1884 = vmatprep.subr.mxu0 %v424
        %1885 = vmatpush1.msra.mxu0 %v423
        %1886 = vmatprep.subr.mxu0 %v422
        %1887 = vmatpush1.msra.mxu0 %v421
        %1888 = vmatprep.subr.mxu0 %v420
        %1889 = vmatpush1.msra.mxu0 %v419
        %1890 = vmatprep.subr.mxu0 %v418
        %1891 = vmatpush1.msra.mxu0 %v417
        %1892 = vmatprep.subr.mxu0 %v416
        %1893 = vmatpush1.msra.mxu0 %v415
        %1894 = vmatprep.subr.mxu0 %v414
        %1895 = vmatpush1.msra.mxu0 %v413
        %1896 = vmatprep.subr.mxu0 %v412
        %1897 = vmatpush1.msra.mxu0 %v411
        %1898 = vmatprep.subr.mxu0 %v410
        %1899 = vmatpush1.msra.mxu0 %v409
        %1900 = vmatprep.subr.mxu0 %v408
        %1901 = vmatpush1.msra.mxu0 %v407
        %1902 = vmatprep.subr.mxu0 %v406
        %1903 = vmatpush1.msra.mxu0 %v405
        %1904 = vmatprep.subr.mxu0 %v404
        %1905 = vmatpush1.msra.mxu0 %v403
        %1906 = vmatprep.subr.mxu0 %v402
        %1907 = vmatpush1.msra.mxu0 %v401
        %1908 = vmatprep.subr.mxu0 %v400
        %1909 = vmatpush1.msra.mxu0 %v399
        %1910 = vmatprep.subr.mxu0 %v398
        %1911 = vmatpush1.msra.mxu0 %v397
        %1912 = vmatprep.subr.mxu0 %v396
        %1913 = vmatpush1.msra.mxu0 %v395
        %1914 = vmatprep.subr.mxu0 0.0
        %1915 = vmatpush2.msra.mxu0 0.0
        %1916 = vmatprep.subr.mxu0 0.0
        %1917 = vmatpush2.msra.mxu0 0.0
        %1918 = vmatprep.subr.mxu0 0.0
        %1919 = vmatpush2.msra.mxu0 0.0
        %1920 = vmatprep.subr.mxu0 0.0
        %1921 = vmatpush2.msra.mxu0 0.0
        %1922 = vmatprep.subr.mxu0 0.0
        %1923 = vmatpush2.msra.mxu0 0.0
        %1924 = vmatprep.subr.mxu0 0.0
        %1925 = vmatpush2.msra.mxu0 0.0
        %1926 = vmatprep.subr.mxu0 0.0
        %1927 = vmatpush2.msra.mxu0 0.0
        %1928 = vmatprep.subr.mxu0 0.0
        %1929 = vmatpush2.msra.mxu0 0.0
        %1930 = vmatprep.subr.mxu0 0.0
        %1931 = vmatpush2.msra.mxu0 0.0
        %1932 = vmatprep.subr.mxu0 0.0
        %1933 = vmatpush2.msra.mxu0 0.0
        %1934 = vmatprep.subr.mxu0 0.0
        %1935 = vmatpush2.msra.mxu0 0.0
        %1936 = vmatprep.subr.mxu0 0.0
        %1937 = vmatpush2.msra.mxu0 0.0
        %1938 = vmatprep.subr.mxu0 0.0
        %1939 = vmatpush2.msra.mxu0 0.0
        %1940 = vmatprep.subr.mxu0 0.0
        %1941 = vmatpush2.msra.mxu0 0.0
        %1942 = vmatprep.subr.mxu0 0.0
        %1943 = vmatpush2.msra.mxu0 0.0
        %1944 = vmatprep.subr.mxu0 0.0
        %1945 = vmatpush2.msra.mxu0 0.0
        %1946 = vmatprep.mubr.f32.mxu0 0.0
        %1947 = vmatmul.mubr.f32.gmra.mxu0 %v1786
        %v1948 = vpop.f32.mrf.mxu0
        %v1949 = vadd.f32 0.0, %v1948
        %v1950 = vpop.f32.mrf.mxu0
        %v1951 = vadd.f32 0.0, %v1950
        %1952 = vmatprep.mubr.f32.mxu0 0.0
        %1953 = vmatmul.mubr.f32.gmra.mxu0 %v1787
        %v1954 = vpop.f32.mrf.mxu0
        %v1955 = vadd.f32 0.0, %v1954
        %v1956 = vpop.f32.mrf.mxu0
        %v1957 = vadd.f32 0.0, %v1956
        %1958 = vdwg.mxu0
        %v1959 = vmul.f32 %v473, %v1949
        %v1960 = vmul.f32 %v481, %v1951
        %v1961 = vmul.f32 %v477, %v1955
        %v1962 = vmul.f32 %v485, %v1957
        %v1963 = vadd.f32 %v1876, %v1959
        %v1964 = vadd.f32 %v1879, %v1961
        %v1965 = vxor.u32 %v1963, 2147483648
        %v1966 = vxor.u32 %v1964, 2147483648
        %v1967 = vmul.f32 %v1965, 1.442695
        %v1968 = vpow.pop %v1967
        %v1969 = vmul.f32 %v1966, 1.442695
        %v1970 = vpow.pop %v1969
        %v1971 = vadd.f32 %v1968, 1.0
        %v1972 = vadd.f32 %v1970, 1.0
        %v1973 = vrcp.pop %v1971
        %v1974 = vmul.f32 1.0, %v1973
        %v1975 = vrcp.pop %v1972
        %v1976 = vmul.f32 1.0, %v1975
        %v1977 = vadd.f32 %v1877, %v1960
        %v1978 = vadd.f32 %v1880, %v1962
        %v1979 = vxor.u32 %v1977, 2147483648
        %v1980 = vxor.u32 %v1978, 2147483648
        %v1981 = vmul.f32 %v1979, 1.442695
        %v1982 = vpow.pop %v1981
        %v1983 = vmul.f32 %v1980, 1.442695
        %v1984 = vpow.pop %v1983
        %v1985 = vadd.f32 %v1982, 1.0
        %v1986 = vadd.f32 %v1984, 1.0
        %v1987 = vrcp.pop %v1985
        %v1988 = vmul.f32 1.0, %v1987
        %v1989 = vrcp.pop %v1986
        %v1990 = vmul.f32 1.0, %v1989
        %v1991 = vmul.f32 %v1786, %v1988
        %v1992 = vmul.f32 %v1787, %v1990
        %v1993 = vmul.f32 %v489, %v1991
        %v1994 = vmul.f32 %v493, %v1992
        %1995 = vmatprep.subr.mxu0 0.0
        %1996 = vmatpush1.msra.mxu0 %v442
        %1997 = vmatprep.subr.mxu0 0.0
        %1998 = vmatpush1.msra.mxu0 %v441
        %1999 = vmatprep.subr.mxu0 0.0
        %2000 = vmatpush1.msra.mxu0 %v440
        %2001 = vmatprep.subr.mxu0 0.0
        %2002 = vmatpush1.msra.mxu0 %v439
        %2003 = vmatprep.subr.mxu0 0.0
        %2004 = vmatpush1.msra.mxu0 %v438
        %2005 = vmatprep.subr.mxu0 0.0
        %2006 = vmatpush1.msra.mxu0 %v437
        %2007 = vmatprep.subr.mxu0 0.0
        %2008 = vmatpush1.msra.mxu0 %v436
        %2009 = vmatprep.subr.mxu0 0.0
        %2010 = vmatpush1.msra.mxu0 %v435
        %2011 = vmatprep.subr.mxu0 0.0
        %2012 = vmatpush1.msra.mxu0 %v434
        %2013 = vmatprep.subr.mxu0 0.0
        %2014 = vmatpush1.msra.mxu0 %v433
        %2015 = vmatprep.subr.mxu0 0.0
        %2016 = vmatpush1.msra.mxu0 %v432
        %2017 = vmatprep.subr.mxu0 0.0
        %2018 = vmatpush1.msra.mxu0 %v431
        %2019 = vmatprep.subr.mxu0 0.0
        %2020 = vmatpush1.msra.mxu0 %v430
        %2021 = vmatprep.subr.mxu0 0.0
        %2022 = vmatpush1.msra.mxu0 %v429
        %2023 = vmatprep.subr.mxu0 0.0
        %2024 = vmatpush1.msra.mxu0 %v428
        %2025 = vmatprep.subr.mxu0 0.0
        %2026 = vmatpush1.msra.mxu0 %v427
        %2027 = vmatprep.subr.mxu0 0.0
        %2028 = vmatpush2.msra.mxu0 0.0
        %2029 = vmatprep.subr.mxu0 0.0
        %2030 = vmatpush2.msra.mxu0 0.0
        %2031 = vmatprep.subr.mxu0 0.0
        %2032 = vmatpush2.msra.mxu0 0.0
        %2033 = vmatprep.subr.mxu0 0.0
        %2034 = vmatpush2.msra.mxu0 0.0
        %2035 = vmatprep.subr.mxu0 0.0
        %2036 = vmatpush2.msra.mxu0 0.0
        %2037 = vmatprep.subr.mxu0 0.0
        %2038 = vmatpush2.msra.mxu0 0.0
        %2039 = vmatprep.subr.mxu0 0.0
        %2040 = vmatpush2.msra.mxu0 0.0
        %2041 = vmatprep.subr.mxu0 0.0
        %2042 = vmatpush2.msra.mxu0 0.0
        %2043 = vmatprep.subr.mxu0 0.0
        %2044 = vmatpush2.msra.mxu0 0.0
        %2045 = vmatprep.subr.mxu0 0.0
        %2046 = vmatpush2.msra.mxu0 0.0
        %2047 = vmatprep.subr.mxu0 0.0
        %2048 = vmatpush2.msra.mxu0 0.0
        %2049 = vmatprep.subr.mxu0 0.0
        %2050 = vmatpush2.msra.mxu0 0.0
        %2051 = vmatprep.subr.mxu0 0.0
        %2052 = vmatpush2.msra.mxu0 0.0
        %2053 = vmatprep.subr.mxu0 0.0
        %2054 = vmatpush2.msra.mxu0 0.0
        %2055 = vmatprep.subr.mxu0 0.0
        %2056 = vmatpush2.msra.mxu0 0.0
        %2057 = vmatprep.subr.mxu0 0.0
        %2058 = vmatpush2.msra.mxu0 0.0
        %2059 = vmatprep.mubr.f32.mxu0 0.0
        %2060 = vmatmul.mubr.f32.gmra.mxu0 %v1993
        %v2061 = vpop.f32.mrf.mxu0
        %v2062 = vadd.f32 0.0, %v2061
        %v2063 = vpop.f32.mrf.mxu0
        %2064 = vmatprep.mubr.f32.mxu0 0.0
        %2065 = vmatmul.mubr.f32.gmra.mxu0 %v1994
        %v2066 = vpop.f32.mrf.mxu0
        %v2067 = vadd.f32 0.0, %v2066
        %v2068 = vpop.f32.mrf.mxu0
        %2069 = vdwg.mxu0
        %v2070 = vadd.f32 %v1878, %v2062
        %v2071 = vadd.f32 %v1881, %v2067
        %v2072 = vtanh.pop %v2070
        %v2073 = vtanh.pop %v2071
        %v2074 = vsub.f32 %v1786, %v2072
        %v2075 = vsub.f32 %v1787, %v2073
        %v2076 = vmul.f32 %v1974, %v2074
        %v2077 = vmul.f32 %v1976, %v2075
        %v2078 = vadd.f32 %v2072, %v2076
        %v2079 = vadd.f32 %v2073, %v2077
        %s2080 = scalar_lea.vmem %s350, 64 [#allocation3]
        %2081 = vst.msk [vmem:[%s2080] sm:$0xff] %vm912, %v2078
        %2082 = vst.msk [vmem:[%s2080 + $0x8] sm:$0xff] %vm912, %v2079
        %s2083 = scalar_lea.vmem %s371, 80
        %v2084 = vld [vmem:[%s2083] sm:$0xff]
        %v2085 = vld [vmem:[%s2083 + $0x8] sm:$0xff]
        %2087 = vset.pattern.permute.xlu0 0
        %2088 = vperm.xlu0 %2087, %v2084
        %v2089 = vpop.permute.xlu0 %2088
        %2092 = vset.pattern.permute.xlu0 0
        %2093 = vperm.xlu0 %2092, %v2085
        %v2094 = vpop.permute.xlu0 %2093
        %v2096 = vmul.f32 %v2089, %v546
        %v2097 = vmul.f32 %v2089, %v550
        %v2098 = vmul.f32 %v2089, %v554
        %v2099 = vmul.f32 %v2094, %v546
        %v2100 = vmul.f32 %v2094, %v550
        %v2101 = vmul.f32 %v2094, %v554
        %2102 = vset.pattern.permute.xlu0 1
        %2103 = vperm.xlu0 %2102, %v2084
        %v2104 = vpop.permute.xlu0 %2103
        %2106 = vset.pattern.permute.xlu0 1
        %2107 = vperm.xlu0 %2106, %v2085
        %v2108 = vpop.permute.xlu0 %2107
        %v2110 = vmul.f32 %v2104, %v587
        %v2111 = vmul.f32 %v2104, %v591
        %v2112 = vmul.f32 %v2104, %v595
        %v2113 = vmul.f32 %v2108, %v587
        %v2114 = vmul.f32 %v2108, %v591
        %v2115 = vmul.f32 %v2108, %v595
        %v2116 = vadd.f32 %v2096, %v2110
        %v2117 = vadd.f32 %v2097, %v2111
        %v2118 = vadd.f32 %v2098, %v2112
        %v2119 = vadd.f32 %v2099, %v2113
        %v2120 = vadd.f32 %v2100, %v2114
        %v2121 = vadd.f32 %v2101, %v2115
        %2122 = vset.pattern.permute.xlu0 2
        %2123 = vperm.xlu0 %2122, %v2084
        %v2124 = vpop.permute.xlu0 %2123
        %2126 = vset.pattern.permute.xlu0 2
        %2127 = vperm.xlu0 %2126, %v2085
        %v2128 = vpop.permute.xlu0 %2127
        %v2130 = vmul.f32 %v2124, %v634
        %v2131 = vmul.f32 %v2124, %v638
        %v2132 = vmul.f32 %v2124, %v642
        %v2133 = vmul.f32 %v2128, %v634
        %v2134 = vmul.f32 %v2128, %v638
        %v2135 = vmul.f32 %v2128, %v642
        %v2136 = vadd.f32 %v2116, %v2130
        %v2137 = vadd.f32 %v2117, %v2131
        %v2138 = vadd.f32 %v2118, %v2132
        %v2139 = vadd.f32 %v2119, %v2133
        %v2140 = vadd.f32 %v2120, %v2134
        %v2141 = vadd.f32 %v2121, %v2135
        %2142 = vset.pattern.permute.xlu0 3
        %2143 = vperm.xlu0 %2142, %v2084
        %v2144 = vpop.permute.xlu0 %2143
        %2146 = vset.pattern.permute.xlu0 3
        %2147 = vperm.xlu0 %2146, %v2085
        %v2148 = vpop.permute.xlu0 %2147
        %v2150 = vmul.f32 %v2144, %v681
        %v2151 = vmul.f32 %v2144, %v685
        %v2152 = vmul.f32 %v2144, %v689
        %v2153 = vmul.f32 %v2148, %v681
        %v2154 = vmul.f32 %v2148, %v685
        %v2155 = vmul.f32 %v2148, %v689
        %v2156 = vadd.f32 %v2136, %v2150
        %v2157 = vadd.f32 %v2137, %v2151
        %v2158 = vadd.f32 %v2138, %v2152
        %v2159 = vadd.f32 %v2139, %v2153
        %v2160 = vadd.f32 %v2140, %v2154
        %v2161 = vadd.f32 %v2141, %v2155
        %v2162 = vmul.f32 %v448, %v2156
        %v2163 = vmul.f32 %v457, %v2157
        %v2164 = vmul.f32 %v465, %v2158
        %v2165 = vmul.f32 %v453, %v2159
        %v2166 = vmul.f32 %v461, %v2160
        %v2167 = vmul.f32 %v469, %v2161
        %v2168 = vadd.f32 %v2162, %v500
        %v2169 = vadd.f32 %v2163, %v504
        %v2170 = vadd.f32 %v2164, %v508
        %v2171 = vadd.f32 %v2165, %v500
        %v2172 = vadd.f32 %v2166, %v504
        %v2173 = vadd.f32 %v2167, %v508
        %2174 = vmatprep.subr.mxu0 %v426
        %2175 = vmatpush1.msra.mxu0 %v425
        %2176 = vmatprep.subr.mxu0 %v424
        %2177 = vmatpush1.msra.mxu0 %v423
        %2178 = vmatprep.subr.mxu0 %v422
        %2179 = vmatpush1.msra.mxu0 %v421
        %2180 = vmatprep.subr.mxu0 %v420
        %2181 = vmatpush1.msra.mxu0 %v419
        %2182 = vmatprep.subr.mxu0 %v418
        %2183 = vmatpush1.msra.mxu0 %v417
        %2184 = vmatprep.subr.mxu0 %v416
        %2185 = vmatpush1.msra.mxu0 %v415
        %2186 = vmatprep.subr.mxu0 %v414
        %2187 = vmatpush1.msra.mxu0 %v413
        %2188 = vmatprep.subr.mxu0 %v412
        %2189 = vmatpush1.msra.mxu0 %v411
        %2190 = vmatprep.subr.mxu0 %v410
        %2191 = vmatpush1.msra.mxu0 %v409
        %2192 = vmatprep.subr.mxu0 %v408
        %2193 = vmatpush1.msra.mxu0 %v407
        %2194 = vmatprep.subr.mxu0 %v406
        %2195 = vmatpush1.msra.mxu0 %v405
        %2196 = vmatprep.subr.mxu0 %v404
        %2197 = vmatpush1.msra.mxu0 %v403
        %2198 = vmatprep.subr.mxu0 %v402
        %2199 = vmatpush1.msra.mxu0 %v401
        %2200 = vmatprep.subr.mxu0 %v400
        %2201 = vmatpush1.msra.mxu0 %v399
        %2202 = vmatprep.subr.mxu0 %v398
        %2203 = vmatpush1.msra.mxu0 %v397
        %2204 = vmatprep.subr.mxu0 %v396
        %2205 = vmatpush1.msra.mxu0 %v395
        %2206 = vmatprep.subr.mxu0 0.0
        %2207 = vmatpush2.msra.mxu0 0.0
        %2208 = vmatprep.subr.mxu0 0.0
        %2209 = vmatpush2.msra.mxu0 0.0
        %2210 = vmatprep.subr.mxu0 0.0
        %2211 = vmatpush2.msra.mxu0 0.0
        %2212 = vmatprep.subr.mxu0 0.0
        %2213 = vmatpush2.msra.mxu0 0.0
        %2214 = vmatprep.subr.mxu0 0.0
        %2215 = vmatpush2.msra.mxu0 0.0
        %2216 = vmatprep.subr.mxu0 0.0
        %2217 = vmatpush2.msra.mxu0 0.0
        %2218 = vmatprep.subr.mxu0 0.0
        %2219 = vmatpush2.msra.mxu0 0.0
        %2220 = vmatprep.subr.mxu0 0.0
        %2221 = vmatpush2.msra.mxu0 0.0
        %2222 = vmatprep.subr.mxu0 0.0
        %2223 = vmatpush2.msra.mxu0 0.0
        %2224 = vmatprep.subr.mxu0 0.0
        %2225 = vmatpush2.msra.mxu0 0.0
        %2226 = vmatprep.subr.mxu0 0.0
        %2227 = vmatpush2.msra.mxu0 0.0
        %2228 = vmatprep.subr.mxu0 0.0
        %2229 = vmatpush2.msra.mxu0 0.0
        %2230 = vmatprep.subr.mxu0 0.0
        %2231 = vmatpush2.msra.mxu0 0.0
        %2232 = vmatprep.subr.mxu0 0.0
        %2233 = vmatpush2.msra.mxu0 0.0
        %2234 = vmatprep.subr.mxu0 0.0
        %2235 = vmatpush2.msra.mxu0 0.0
        %2236 = vmatprep.subr.mxu0 0.0
        %2237 = vmatpush2.msra.mxu0 0.0
        %2238 = vmatprep.mubr.f32.mxu0 0.0
        %2239 = vmatmul.mubr.f32.gmra.mxu0 %v2078
        %v2240 = vpop.f32.mrf.mxu0
        %v2241 = vadd.f32 0.0, %v2240
        %v2242 = vpop.f32.mrf.mxu0
        %v2243 = vadd.f32 0.0, %v2242
        %2244 = vmatprep.mubr.f32.mxu0 0.0
        %2245 = vmatmul.mubr.f32.gmra.mxu0 %v2079
        %v2246 = vpop.f32.mrf.mxu0
        %v2247 = vadd.f32 0.0, %v2246
        %v2248 = vpop.f32.mrf.mxu0
        %v2249 = vadd.f32 0.0, %v2248
        %2250 = vdwg.mxu0
        %v2251 = vmul.f32 %v473, %v2241
        %v2252 = vmul.f32 %v481, %v2243
        %v2253 = vmul.f32 %v477, %v2247
        %v2254 = vmul.f32 %v485, %v2249
        %v2255 = vadd.f32 %v2168, %v2251
        %v2256 = vadd.f32 %v2171, %v2253
        %v2257 = vxor.u32 %v2255, 2147483648
        %v2258 = vxor.u32 %v2256, 2147483648
        %v2259 = vmul.f32 %v2257, 1.442695
        %v2260 = vpow.pop %v2259
        %v2261 = vmul.f32 %v2258, 1.442695
        %v2262 = vpow.pop %v2261
        %v2263 = vadd.f32 %v2260, 1.0
        %v2264 = vadd.f32 %v2262, 1.0
        %v2265 = vrcp.pop %v2263
        %v2266 = vmul.f32 1.0, %v2265
        %v2267 = vrcp.pop %v2264
        %v2268 = vmul.f32 1.0, %v2267
        %v2269 = vadd.f32 %v2169, %v2252
        %v2270 = vadd.f32 %v2172, %v2254
        %v2271 = vxor.u32 %v2269, 2147483648
        %v2272 = vxor.u32 %v2270, 2147483648
        %v2273 = vmul.f32 %v2271, 1.442695
        %v2274 = vpow.pop %v2273
        %v2275 = vmul.f32 %v2272, 1.442695
        %v2276 = vpow.pop %v2275
        %v2277 = vadd.f32 %v2274, 1.0
        %v2278 = vadd.f32 %v2276, 1.0
        %v2279 = vrcp.pop %v2277
        %v2280 = vmul.f32 1.0, %v2279
        %v2281 = vrcp.pop %v2278
        %v2282 = vmul.f32 1.0, %v2281
        %v2283 = vmul.f32 %v2078, %v2280
        %v2284 = vmul.f32 %v2079, %v2282
        %v2285 = vmul.f32 %v489, %v2283
        %v2286 = vmul.f32 %v493, %v2284
        %2287 = vmatprep.subr.mxu0 0.0
        %2288 = vmatpush1.msra.mxu0 %v442
        %2289 = vmatprep.subr.mxu0 0.0
        %2290 = vmatpush1.msra.mxu0 %v441
        %2291 = vmatprep.subr.mxu0 0.0
        %2292 = vmatpush1.msra.mxu0 %v440
        %2293 = vmatprep.subr.mxu0 0.0
        %2294 = vmatpush1.msra.mxu0 %v439
        %2295 = vmatprep.subr.mxu0 0.0
        %2296 = vmatpush1.msra.mxu0 %v438
        %2297 = vmatprep.subr.mxu0 0.0
        %2298 = vmatpush1.msra.mxu0 %v437
        %2299 = vmatprep.subr.mxu0 0.0
        %2300 = vmatpush1.msra.mxu0 %v436
        %2301 = vmatprep.subr.mxu0 0.0
        %2302 = vmatpush1.msra.mxu0 %v435
        %2303 = vmatprep.subr.mxu0 0.0
        %2304 = vmatpush1.msra.mxu0 %v434
        %2305 = vmatprep.subr.mxu0 0.0
        %2306 = vmatpush1.msra.mxu0 %v433
        %2307 = vmatprep.subr.mxu0 0.0
        %2308 = vmatpush1.msra.mxu0 %v432
        %2309 = vmatprep.subr.mxu0 0.0
        %2310 = vmatpush1.msra.mxu0 %v431
        %2311 = vmatprep.subr.mxu0 0.0
        %2312 = vmatpush1.msra.mxu0 %v430
        %2313 = vmatprep.subr.mxu0 0.0
        %2314 = vmatpush1.msra.mxu0 %v429
        %2315 = vmatprep.subr.mxu0 0.0
        %2316 = vmatpush1.msra.mxu0 %v428
        %2317 = vmatprep.subr.mxu0 0.0
        %2318 = vmatpush1.msra.mxu0 %v427
        %2319 = vmatprep.subr.mxu0 0.0
        %2320 = vmatpush2.msra.mxu0 0.0
        %2321 = vmatprep.subr.mxu0 0.0
        %2322 = vmatpush2.msra.mxu0 0.0
        %2323 = vmatprep.subr.mxu0 0.0
        %2324 = vmatpush2.msra.mxu0 0.0
        %2325 = vmatprep.subr.mxu0 0.0
        %2326 = vmatpush2.msra.mxu0 0.0
        %2327 = vmatprep.subr.mxu0 0.0
        %2328 = vmatpush2.msra.mxu0 0.0
        %2329 = vmatprep.subr.mxu0 0.0
        %2330 = vmatpush2.msra.mxu0 0.0
        %2331 = vmatprep.subr.mxu0 0.0
        %2332 = vmatpush2.msra.mxu0 0.0
        %2333 = vmatprep.subr.mxu0 0.0
        %2334 = vmatpush2.msra.mxu0 0.0
        %2335 = vmatprep.subr.mxu0 0.0
        %2336 = vmatpush2.msra.mxu0 0.0
        %2337 = vmatprep.subr.mxu0 0.0
        %2338 = vmatpush2.msra.mxu0 0.0
        %2339 = vmatprep.subr.mxu0 0.0
        %2340 = vmatpush2.msra.mxu0 0.0
        %2341 = vmatprep.subr.mxu0 0.0
        %2342 = vmatpush2.msra.mxu0 0.0
        %2343 = vmatprep.subr.mxu0 0.0
        %2344 = vmatpush2.msra.mxu0 0.0
        %2345 = vmatprep.subr.mxu0 0.0
        %2346 = vmatpush2.msra.mxu0 0.0
        %2347 = vmatprep.subr.mxu0 0.0
        %2348 = vmatpush2.msra.mxu0 0.0
        %2349 = vmatprep.subr.mxu0 0.0
        %2350 = vmatpush2.msra.mxu0 0.0
        %2351 = vmatprep.mubr.f32.mxu0 0.0
        %2352 = vmatmul.mubr.f32.gmra.mxu0 %v2285
        %v2353 = vpop.f32.mrf.mxu0
        %v2354 = vadd.f32 0.0, %v2353
        %v2355 = vpop.f32.mrf.mxu0
        %2356 = vmatprep.mubr.f32.mxu0 0.0
        %2357 = vmatmul.mubr.f32.gmra.mxu0 %v2286
        %v2358 = vpop.f32.mrf.mxu0
        %v2359 = vadd.f32 0.0, %v2358
        %v2360 = vpop.f32.mrf.mxu0
        %2361 = vdwg.mxu0
        %v2362 = vadd.f32 %v2170, %v2354
        %v2363 = vadd.f32 %v2173, %v2359
        %v2364 = vtanh.pop %v2362
        %v2365 = vtanh.pop %v2363
        %v2366 = vsub.f32 %v2078, %v2364
        %v2367 = vsub.f32 %v2079, %v2365
        %v2368 = vmul.f32 %v2266, %v2366
        %v2369 = vmul.f32 %v2268, %v2367
        %v2370 = vadd.f32 %v2364, %v2368
        %v2371 = vadd.f32 %v2365, %v2369
        %s2372 = scalar_lea.vmem %s350, 80 [#allocation3]
        %2373 = vst.msk [vmem:[%s2372] sm:$0xff] %vm912, %v2370
        %2374 = vst.msk [vmem:[%s2372 + $0x8] sm:$0xff] %vm912, %v2371
        %s2375 = scalar_lea.vmem %s371, 96
        %v2376 = vld [vmem:[%s2375] sm:$0xff]
        %v2377 = vld [vmem:[%s2375 + $0x8] sm:$0xff]
        %2379 = vset.pattern.permute.xlu0 0
        %2380 = vperm.xlu0 %2379, %v2376
        %v2381 = vpop.permute.xlu0 %2380
        %2384 = vset.pattern.permute.xlu0 0
        %2385 = vperm.xlu0 %2384, %v2377
        %v2386 = vpop.permute.xlu0 %2385
        %v2388 = vmul.f32 %v2381, %v546
        %v2389 = vmul.f32 %v2381, %v550
        %v2390 = vmul.f32 %v2381, %v554
        %v2391 = vmul.f32 %v2386, %v546
        %v2392 = vmul.f32 %v2386, %v550
        %v2393 = vmul.f32 %v2386, %v554
        %2394 = vset.pattern.permute.xlu0 1
        %2395 = vperm.xlu0 %2394, %v2376
        %v2396 = vpop.permute.xlu0 %2395
        %2398 = vset.pattern.permute.xlu0 1
        %2399 = vperm.xlu0 %2398, %v2377
        %v2400 = vpop.permute.xlu0 %2399
        %v2402 = vmul.f32 %v2396, %v587
        %v2403 = vmul.f32 %v2396, %v591
        %v2404 = vmul.f32 %v2396, %v595
        %v2405 = vmul.f32 %v2400, %v587
        %v2406 = vmul.f32 %v2400, %v591
        %v2407 = vmul.f32 %v2400, %v595
        %v2408 = vadd.f32 %v2388, %v2402
        %v2409 = vadd.f32 %v2389, %v2403
        %v2410 = vadd.f32 %v2390, %v2404
        %v2411 = vadd.f32 %v2391, %v2405
        %v2412 = vadd.f32 %v2392, %v2406
        %v2413 = vadd.f32 %v2393, %v2407
        %2414 = vset.pattern.permute.xlu0 2
        %2415 = vperm.xlu0 %2414, %v2376
        %v2416 = vpop.permute.xlu0 %2415
        %2418 = vset.pattern.permute.xlu0 2
        %2419 = vperm.xlu0 %2418, %v2377
        %v2420 = vpop.permute.xlu0 %2419
        %v2422 = vmul.f32 %v2416, %v634
        %v2423 = vmul.f32 %v2416, %v638
        %v2424 = vmul.f32 %v2416, %v642
        %v2425 = vmul.f32 %v2420, %v634
        %v2426 = vmul.f32 %v2420, %v638
        %v2427 = vmul.f32 %v2420, %v642
        %v2428 = vadd.f32 %v2408, %v2422
        %v2429 = vadd.f32 %v2409, %v2423
        %v2430 = vadd.f32 %v2410, %v2424
        %v2431 = vadd.f32 %v2411, %v2425
        %v2432 = vadd.f32 %v2412, %v2426
        %v2433 = vadd.f32 %v2413, %v2427
        %2434 = vset.pattern.permute.xlu0 3
        %2435 = vperm.xlu0 %2434, %v2376
        %v2436 = vpop.permute.xlu0 %2435
        %2438 = vset.pattern.permute.xlu0 3
        %2439 = vperm.xlu0 %2438, %v2377
        %v2440 = vpop.permute.xlu0 %2439
        %v2442 = vmul.f32 %v2436, %v681
        %v2443 = vmul.f32 %v2436, %v685
        %v2444 = vmul.f32 %v2436, %v689
        %v2445 = vmul.f32 %v2440, %v681
        %v2446 = vmul.f32 %v2440, %v685
        %v2447 = vmul.f32 %v2440, %v689
        %v2448 = vadd.f32 %v2428, %v2442
        %v2449 = vadd.f32 %v2429, %v2443
        %v2450 = vadd.f32 %v2430, %v2444
        %v2451 = vadd.f32 %v2431, %v2445
        %v2452 = vadd.f32 %v2432, %v2446
        %v2453 = vadd.f32 %v2433, %v2447
        %v2454 = vmul.f32 %v448, %v2448
        %v2455 = vmul.f32 %v457, %v2449
        %v2456 = vmul.f32 %v465, %v2450
        %v2457 = vmul.f32 %v453, %v2451
        %v2458 = vmul.f32 %v461, %v2452
        %v2459 = vmul.f32 %v469, %v2453
        %v2460 = vadd.f32 %v2454, %v500
        %v2461 = vadd.f32 %v2455, %v504
        %v2462 = vadd.f32 %v2456, %v508
        %v2463 = vadd.f32 %v2457, %v500
        %v2464 = vadd.f32 %v2458, %v504
        %v2465 = vadd.f32 %v2459, %v508
        %2466 = vmatprep.subr.mxu0 %v426
        %2467 = vmatpush1.msra.mxu0 %v425
        %2468 = vmatprep.subr.mxu0 %v424
        %2469 = vmatpush1.msra.mxu0 %v423
        %2470 = vmatprep.subr.mxu0 %v422
        %2471 = vmatpush1.msra.mxu0 %v421
        %2472 = vmatprep.subr.mxu0 %v420
        %2473 = vmatpush1.msra.mxu0 %v419
        %2474 = vmatprep.subr.mxu0 %v418
        %2475 = vmatpush1.msra.mxu0 %v417
        %2476 = vmatprep.subr.mxu0 %v416
        %2477 = vmatpush1.msra.mxu0 %v415
        %2478 = vmatprep.subr.mxu0 %v414
        %2479 = vmatpush1.msra.mxu0 %v413
        %2480 = vmatprep.subr.mxu0 %v412
        %2481 = vmatpush1.msra.mxu0 %v411
        %2482 = vmatprep.subr.mxu0 %v410
        %2483 = vmatpush1.msra.mxu0 %v409
        %2484 = vmatprep.subr.mxu0 %v408
        %2485 = vmatpush1.msra.mxu0 %v407
        %2486 = vmatprep.subr.mxu0 %v406
        %2487 = vmatpush1.msra.mxu0 %v405
        %2488 = vmatprep.subr.mxu0 %v404
        %2489 = vmatpush1.msra.mxu0 %v403
        %2490 = vmatprep.subr.mxu0 %v402
        %2491 = vmatpush1.msra.mxu0 %v401
        %2492 = vmatprep.subr.mxu0 %v400
        %2493 = vmatpush1.msra.mxu0 %v399
        %2494 = vmatprep.subr.mxu0 %v398
        %2495 = vmatpush1.msra.mxu0 %v397
        %2496 = vmatprep.subr.mxu0 %v396
        %2497 = vmatpush1.msra.mxu0 %v395
        %2498 = vmatprep.subr.mxu0 0.0
        %2499 = vmatpush2.msra.mxu0 0.0
        %2500 = vmatprep.subr.mxu0 0.0
        %2501 = vmatpush2.msra.mxu0 0.0
        %2502 = vmatprep.subr.mxu0 0.0
        %2503 = vmatpush2.msra.mxu0 0.0
        %2504 = vmatprep.subr.mxu0 0.0
        %2505 = vmatpush2.msra.mxu0 0.0
        %2506 = vmatprep.subr.mxu0 0.0
        %2507 = vmatpush2.msra.mxu0 0.0
        %2508 = vmatprep.subr.mxu0 0.0
        %2509 = vmatpush2.msra.mxu0 0.0
        %2510 = vmatprep.subr.mxu0 0.0
        %2511 = vmatpush2.msra.mxu0 0.0
        %2512 = vmatprep.subr.mxu0 0.0
        %2513 = vmatpush2.msra.mxu0 0.0
        %2514 = vmatprep.subr.mxu0 0.0
        %2515 = vmatpush2.msra.mxu0 0.0
        %2516 = vmatprep.subr.mxu0 0.0
        %2517 = vmatpush2.msra.mxu0 0.0
        %2518 = vmatprep.subr.mxu0 0.0
        %2519 = vmatpush2.msra.mxu0 0.0
        %2520 = vmatprep.subr.mxu0 0.0
        %2521 = vmatpush2.msra.mxu0 0.0
        %2522 = vmatprep.subr.mxu0 0.0
        %2523 = vmatpush2.msra.mxu0 0.0
        %2524 = vmatprep.subr.mxu0 0.0
        %2525 = vmatpush2.msra.mxu0 0.0
        %2526 = vmatprep.subr.mxu0 0.0
        %2527 = vmatpush2.msra.mxu0 0.0
        %2528 = vmatprep.subr.mxu0 0.0
        %2529 = vmatpush2.msra.mxu0 0.0
        %2530 = vmatprep.mubr.f32.mxu0 0.0
        %2531 = vmatmul.mubr.f32.gmra.mxu0 %v2370
        %v2532 = vpop.f32.mrf.mxu0
        %v2533 = vadd.f32 0.0, %v2532
        %v2534 = vpop.f32.mrf.mxu0
        %v2535 = vadd.f32 0.0, %v2534
        %2536 = vmatprep.mubr.f32.mxu0 0.0
        %2537 = vmatmul.mubr.f32.gmra.mxu0 %v2371
        %v2538 = vpop.f32.mrf.mxu0
        %v2539 = vadd.f32 0.0, %v2538
        %v2540 = vpop.f32.mrf.mxu0
        %v2541 = vadd.f32 0.0, %v2540
        %2542 = vdwg.mxu0
        %v2543 = vmul.f32 %v473, %v2533
        %v2544 = vmul.f32 %v481, %v2535
        %v2545 = vmul.f32 %v477, %v2539
        %v2546 = vmul.f32 %v485, %v2541
        %v2547 = vadd.f32 %v2460, %v2543
        %v2548 = vadd.f32 %v2463, %v2545
        %v2549 = vxor.u32 %v2547, 2147483648
        %v2550 = vxor.u32 %v2548, 2147483648
        %v2551 = vmul.f32 %v2549, 1.442695
        %v2552 = vpow.pop %v2551
        %v2553 = vmul.f32 %v2550, 1.442695
        %v2554 = vpow.pop %v2553
        %v2555 = vadd.f32 %v2552, 1.0
        %v2556 = vadd.f32 %v2554, 1.0
        %v2557 = vrcp.pop %v2555
        %v2558 = vmul.f32 1.0, %v2557
        %v2559 = vrcp.pop %v2556
        %v2560 = vmul.f32 1.0, %v2559
        %v2561 = vadd.f32 %v2461, %v2544
        %v2562 = vadd.f32 %v2464, %v2546
        %v2563 = vxor.u32 %v2561, 2147483648
        %v2564 = vxor.u32 %v2562, 2147483648
        %v2565 = vmul.f32 %v2563, 1.442695
        %v2566 = vpow.pop %v2565
        %v2567 = vmul.f32 %v2564, 1.442695
        %v2568 = vpow.pop %v2567
        %v2569 = vadd.f32 %v2566, 1.0
        %v2570 = vadd.f32 %v2568, 1.0
        %v2571 = vrcp.pop %v2569
        %v2572 = vmul.f32 1.0, %v2571
        %v2573 = vrcp.pop %v2570
        %v2574 = vmul.f32 1.0, %v2573
        %v2575 = vmul.f32 %v2370, %v2572
        %v2576 = vmul.f32 %v2371, %v2574
        %v2577 = vmul.f32 %v489, %v2575
        %v2578 = vmul.f32 %v493, %v2576
        %2579 = vmatprep.subr.mxu0 0.0
        %2580 = vmatpush1.msra.mxu0 %v442
        %2581 = vmatprep.subr.mxu0 0.0
        %2582 = vmatpush1.msra.mxu0 %v441
        %2583 = vmatprep.subr.mxu0 0.0
        %2584 = vmatpush1.msra.mxu0 %v440
        %2585 = vmatprep.subr.mxu0 0.0
        %2586 = vmatpush1.msra.mxu0 %v439
        %2587 = vmatprep.subr.mxu0 0.0
        %2588 = vmatpush1.msra.mxu0 %v438
        %2589 = vmatprep.subr.mxu0 0.0
        %2590 = vmatpush1.msra.mxu0 %v437
        %2591 = vmatprep.subr.mxu0 0.0
        %2592 = vmatpush1.msra.mxu0 %v436
        %2593 = vmatprep.subr.mxu0 0.0
        %2594 = vmatpush1.msra.mxu0 %v435
        %2595 = vmatprep.subr.mxu0 0.0
        %2596 = vmatpush1.msra.mxu0 %v434
        %2597 = vmatprep.subr.mxu0 0.0
        %2598 = vmatpush1.msra.mxu0 %v433
        %2599 = vmatprep.subr.mxu0 0.0
        %2600 = vmatpush1.msra.mxu0 %v432
        %2601 = vmatprep.subr.mxu0 0.0
        %2602 = vmatpush1.msra.mxu0 %v431
        %2603 = vmatprep.subr.mxu0 0.0
        %2604 = vmatpush1.msra.mxu0 %v430
        %2605 = vmatprep.subr.mxu0 0.0
        %2606 = vmatpush1.msra.mxu0 %v429
        %2607 = vmatprep.subr.mxu0 0.0
        %2608 = vmatpush1.msra.mxu0 %v428
        %2609 = vmatprep.subr.mxu0 0.0
        %2610 = vmatpush1.msra.mxu0 %v427
        %2611 = vmatprep.subr.mxu0 0.0
        %2612 = vmatpush2.msra.mxu0 0.0
        %2613 = vmatprep.subr.mxu0 0.0
        %2614 = vmatpush2.msra.mxu0 0.0
        %2615 = vmatprep.subr.mxu0 0.0
        %2616 = vmatpush2.msra.mxu0 0.0
        %2617 = vmatprep.subr.mxu0 0.0
        %2618 = vmatpush2.msra.mxu0 0.0
        %2619 = vmatprep.subr.mxu0 0.0
        %2620 = vmatpush2.msra.mxu0 0.0
        %2621 = vmatprep.subr.mxu0 0.0
        %2622 = vmatpush2.msra.mxu0 0.0
        %2623 = vmatprep.subr.mxu0 0.0
        %2624 = vmatpush2.msra.mxu0 0.0
        %2625 = vmatprep.subr.mxu0 0.0
        %2626 = vmatpush2.msra.mxu0 0.0
        %2627 = vmatprep.subr.mxu0 0.0
        %2628 = vmatpush2.msra.mxu0 0.0
        %2629 = vmatprep.subr.mxu0 0.0
        %2630 = vmatpush2.msra.mxu0 0.0
        %2631 = vmatprep.subr.mxu0 0.0
        %2632 = vmatpush2.msra.mxu0 0.0
        %2633 = vmatprep.subr.mxu0 0.0
        %2634 = vmatpush2.msra.mxu0 0.0
        %2635 = vmatprep.subr.mxu0 0.0
        %2636 = vmatpush2.msra.mxu0 0.0
        %2637 = vmatprep.subr.mxu0 0.0
        %2638 = vmatpush2.msra.mxu0 0.0
        %2639 = vmatprep.subr.mxu0 0.0
        %2640 = vmatpush2.msra.mxu0 0.0
        %2641 = vmatprep.subr.mxu0 0.0
        %2642 = vmatpush2.msra.mxu0 0.0
        %2643 = vmatprep.mubr.f32.mxu0 0.0
        %2644 = vmatmul.mubr.f32.gmra.mxu0 %v2577
        %v2645 = vpop.f32.mrf.mxu0
        %v2646 = vadd.f32 0.0, %v2645
        %v2647 = vpop.f32.mrf.mxu0
        %2648 = vmatprep.mubr.f32.mxu0 0.0
        %2649 = vmatmul.mubr.f32.gmra.mxu0 %v2578
        %v2650 = vpop.f32.mrf.mxu0
        %v2651 = vadd.f32 0.0, %v2650
        %v2652 = vpop.f32.mrf.mxu0
        %2653 = vdwg.mxu0
        %v2654 = vadd.f32 %v2462, %v2646
        %v2655 = vadd.f32 %v2465, %v2651
        %v2656 = vtanh.pop %v2654
        %v2657 = vtanh.pop %v2655
        %v2658 = vsub.f32 %v2370, %v2656
        %v2659 = vsub.f32 %v2371, %v2657
        %v2660 = vmul.f32 %v2558, %v2658
        %v2661 = vmul.f32 %v2560, %v2659
        %v2662 = vadd.f32 %v2656, %v2660
        %v2663 = vadd.f32 %v2657, %v2661
        %s2664 = scalar_lea.vmem %s350, 96 [#allocation3]
        %2665 = vst.msk [vmem:[%s2664] sm:$0xff] %vm912, %v2662
        %2666 = vst.msk [vmem:[%s2664 + $0x8] sm:$0xff] %vm912, %v2663
        %s2667 = scalar_lea.vmem %s371, 112
        %v2668 = vld [vmem:[%s2667] sm:$0xff]
        %v2669 = vld [vmem:[%s2667 + $0x8] sm:$0xff]
        %2671 = vset.pattern.permute.xlu0 0
        %2672 = vperm.xlu0 %2671, %v2668
        %v2673 = vpop.permute.xlu0 %2672
        %2676 = vset.pattern.permute.xlu0 0
        %2677 = vperm.xlu0 %2676, %v2669
        %v2678 = vpop.permute.xlu0 %2677
        %v2680 = vmul.f32 %v2673, %v546
        %v2681 = vmul.f32 %v2673, %v550
        %v2682 = vmul.f32 %v2673, %v554
        %v2683 = vmul.f32 %v2678, %v546
        %v2684 = vmul.f32 %v2678, %v550
        %v2685 = vmul.f32 %v2678, %v554
        %2686 = vset.pattern.permute.xlu0 1
        %2687 = vperm.xlu0 %2686, %v2668
        %v2688 = vpop.permute.xlu0 %2687
        %2690 = vset.pattern.permute.xlu0 1
        %2691 = vperm.xlu0 %2690, %v2669
        %v2692 = vpop.permute.xlu0 %2691
        %v2694 = vmul.f32 %v2688, %v587
        %v2695 = vmul.f32 %v2688, %v591
        %v2696 = vmul.f32 %v2688, %v595
        %v2697 = vmul.f32 %v2692, %v587
        %v2698 = vmul.f32 %v2692, %v591
        %v2699 = vmul.f32 %v2692, %v595
        %v2700 = vadd.f32 %v2680, %v2694
        %v2701 = vadd.f32 %v2681, %v2695
        %v2702 = vadd.f32 %v2682, %v2696
        %v2703 = vadd.f32 %v2683, %v2697
        %v2704 = vadd.f32 %v2684, %v2698
        %v2705 = vadd.f32 %v2685, %v2699
        %2706 = vset.pattern.permute.xlu0 2
        %2707 = vperm.xlu0 %2706, %v2668
        %v2708 = vpop.permute.xlu0 %2707
        %2710 = vset.pattern.permute.xlu0 2
        %2711 = vperm.xlu0 %2710, %v2669
        %v2712 = vpop.permute.xlu0 %2711
        %v2714 = vmul.f32 %v2708, %v634
        %v2715 = vmul.f32 %v2708, %v638
        %v2716 = vmul.f32 %v2708, %v642
        %v2717 = vmul.f32 %v2712, %v634
        %v2718 = vmul.f32 %v2712, %v638
        %v2719 = vmul.f32 %v2712, %v642
        %v2720 = vadd.f32 %v2700, %v2714
        %v2721 = vadd.f32 %v2701, %v2715
        %v2722 = vadd.f32 %v2702, %v2716
        %v2723 = vadd.f32 %v2703, %v2717
        %v2724 = vadd.f32 %v2704, %v2718
        %v2725 = vadd.f32 %v2705, %v2719
        %2726 = vset.pattern.permute.xlu0 3
        %2727 = vperm.xlu0 %2726, %v2668
        %v2728 = vpop.permute.xlu0 %2727
        %2730 = vset.pattern.permute.xlu0 3
        %2731 = vperm.xlu0 %2730, %v2669
        %v2732 = vpop.permute.xlu0 %2731
        %v2734 = vmul.f32 %v2728, %v681
        %v2735 = vmul.f32 %v2728, %v685
        %v2736 = vmul.f32 %v2728, %v689
        %v2737 = vmul.f32 %v2732, %v681
        %v2738 = vmul.f32 %v2732, %v685
        %v2739 = vmul.f32 %v2732, %v689
        %v2740 = vadd.f32 %v2720, %v2734
        %v2741 = vadd.f32 %v2721, %v2735
        %v2742 = vadd.f32 %v2722, %v2736
        %v2743 = vadd.f32 %v2723, %v2737
        %v2744 = vadd.f32 %v2724, %v2738
        %v2745 = vadd.f32 %v2725, %v2739
        %v2746 = vmul.f32 %v448, %v2740
        %v2747 = vmul.f32 %v457, %v2741
        %v2748 = vmul.f32 %v465, %v2742
        %v2749 = vmul.f32 %v453, %v2743
        %v2750 = vmul.f32 %v461, %v2744
        %v2751 = vmul.f32 %v469, %v2745
        %v2752 = vadd.f32 %v2746, %v500
        %v2753 = vadd.f32 %v2747, %v504
        %v2754 = vadd.f32 %v2748, %v508
        %v2755 = vadd.f32 %v2749, %v500
        %v2756 = vadd.f32 %v2750, %v504
        %v2757 = vadd.f32 %v2751, %v508
        %2758 = vmatprep.subr.mxu0 %v426
        %2759 = vmatpush1.msra.mxu0 %v425
        %2760 = vmatprep.subr.mxu0 %v424
        %2761 = vmatpush1.msra.mxu0 %v423
        %2762 = vmatprep.subr.mxu0 %v422
        %2763 = vmatpush1.msra.mxu0 %v421
        %2764 = vmatprep.subr.mxu0 %v420
        %2765 = vmatpush1.msra.mxu0 %v419
        %2766 = vmatprep.subr.mxu0 %v418
        %2767 = vmatpush1.msra.mxu0 %v417
        %2768 = vmatprep.subr.mxu0 %v416
        %2769 = vmatpush1.msra.mxu0 %v415
        %2770 = vmatprep.subr.mxu0 %v414
        %2771 = vmatpush1.msra.mxu0 %v413
        %2772 = vmatprep.subr.mxu0 %v412
        %2773 = vmatpush1.msra.mxu0 %v411
        %2774 = vmatprep.subr.mxu0 %v410
        %2775 = vmatpush1.msra.mxu0 %v409
        %2776 = vmatprep.subr.mxu0 %v408
        %2777 = vmatpush1.msra.mxu0 %v407
        %2778 = vmatprep.subr.mxu0 %v406
        %2779 = vmatpush1.msra.mxu0 %v405
        %2780 = vmatprep.subr.mxu0 %v404
        %2781 = vmatpush1.msra.mxu0 %v403
        %2782 = vmatprep.subr.mxu0 %v402
        %2783 = vmatpush1.msra.mxu0 %v401
        %2784 = vmatprep.subr.mxu0 %v400
        %2785 = vmatpush1.msra.mxu0 %v399
        %2786 = vmatprep.subr.mxu0 %v398
        %2787 = vmatpush1.msra.mxu0 %v397
        %2788 = vmatprep.subr.mxu0 %v396
        %2789 = vmatpush1.msra.mxu0 %v395
        %2790 = vmatprep.subr.mxu0 0.0
        %2791 = vmatpush2.msra.mxu0 0.0
        %2792 = vmatprep.subr.mxu0 0.0
        %2793 = vmatpush2.msra.mxu0 0.0
        %2794 = vmatprep.subr.mxu0 0.0
        %2795 = vmatpush2.msra.mxu0 0.0
        %2796 = vmatprep.subr.mxu0 0.0
        %2797 = vmatpush2.msra.mxu0 0.0
        %2798 = vmatprep.subr.mxu0 0.0
        %2799 = vmatpush2.msra.mxu0 0.0
        %2800 = vmatprep.subr.mxu0 0.0
        %2801 = vmatpush2.msra.mxu0 0.0
        %2802 = vmatprep.subr.mxu0 0.0
        %2803 = vmatpush2.msra.mxu0 0.0
        %2804 = vmatprep.subr.mxu0 0.0
        %2805 = vmatpush2.msra.mxu0 0.0
        %2806 = vmatprep.subr.mxu0 0.0
        %2807 = vmatpush2.msra.mxu0 0.0
        %2808 = vmatprep.subr.mxu0 0.0
        %2809 = vmatpush2.msra.mxu0 0.0
        %2810 = vmatprep.subr.mxu0 0.0
        %2811 = vmatpush2.msra.mxu0 0.0
        %2812 = vmatprep.subr.mxu0 0.0
        %2813 = vmatpush2.msra.mxu0 0.0
        %2814 = vmatprep.subr.mxu0 0.0
        %2815 = vmatpush2.msra.mxu0 0.0
        %2816 = vmatprep.subr.mxu0 0.0
        %2817 = vmatpush2.msra.mxu0 0.0
        %2818 = vmatprep.subr.mxu0 0.0
        %2819 = vmatpush2.msra.mxu0 0.0
        %2820 = vmatprep.subr.mxu0 0.0
        %2821 = vmatpush2.msra.mxu0 0.0
        %2822 = vmatprep.mubr.f32.mxu0 0.0
        %2823 = vmatmul.mubr.f32.gmra.mxu0 %v2662
        %v2824 = vpop.f32.mrf.mxu0
        %v2825 = vadd.f32 0.0, %v2824
        %v2826 = vpop.f32.mrf.mxu0
        %v2827 = vadd.f32 0.0, %v2826
        %2828 = vmatprep.mubr.f32.mxu0 0.0
        %2829 = vmatmul.mubr.f32.gmra.mxu0 %v2663
        %v2830 = vpop.f32.mrf.mxu0
        %v2831 = vadd.f32 0.0, %v2830
        %v2832 = vpop.f32.mrf.mxu0
        %v2833 = vadd.f32 0.0, %v2832
        %2834 = vdwg.mxu0
        %v2835 = vmul.f32 %v473, %v2825
        %v2836 = vmul.f32 %v481, %v2827
        %v2837 = vmul.f32 %v477, %v2831
        %v2838 = vmul.f32 %v485, %v2833
        %v2839 = vadd.f32 %v2752, %v2835
        %v2840 = vadd.f32 %v2755, %v2837
        %v2841 = vxor.u32 %v2839, 2147483648
        %v2842 = vxor.u32 %v2840, 2147483648
        %v2843 = vmul.f32 %v2841, 1.442695
        %v2844 = vpow.pop %v2843
        %v2845 = vmul.f32 %v2842, 1.442695
        %v2846 = vpow.pop %v2845
        %v2847 = vadd.f32 %v2844, 1.0
        %v2848 = vadd.f32 %v2846, 1.0
        %v2849 = vrcp.pop %v2847
        %v2850 = vmul.f32 1.0, %v2849
        %v2851 = vrcp.pop %v2848
        %v2852 = vmul.f32 1.0, %v2851
        %v2853 = vadd.f32 %v2753, %v2836
        %v2854 = vadd.f32 %v2756, %v2838
        %v2855 = vxor.u32 %v2853, 2147483648
        %v2856 = vxor.u32 %v2854, 2147483648
        %v2857 = vmul.f32 %v2855, 1.442695
        %v2858 = vpow.pop %v2857
        %v2859 = vmul.f32 %v2856, 1.442695
        %v2860 = vpow.pop %v2859
        %v2861 = vadd.f32 %v2858, 1.0
        %v2862 = vadd.f32 %v2860, 1.0
        %v2863 = vrcp.pop %v2861
        %v2864 = vmul.f32 1.0, %v2863
        %v2865 = vrcp.pop %v2862
        %v2866 = vmul.f32 1.0, %v2865
        %v2867 = vmul.f32 %v2662, %v2864
        %v2868 = vmul.f32 %v2663, %v2866
        %v2869 = vmul.f32 %v489, %v2867
        %v2870 = vmul.f32 %v493, %v2868
        %2871 = vmatprep.subr.mxu0 0.0
        %2872 = vmatpush1.msra.mxu0 %v442
        %2873 = vmatprep.subr.mxu0 0.0
        %2874 = vmatpush1.msra.mxu0 %v441
        %2875 = vmatprep.subr.mxu0 0.0
        %2876 = vmatpush1.msra.mxu0 %v440
        %2877 = vmatprep.subr.mxu0 0.0
        %2878 = vmatpush1.msra.mxu0 %v439
        %2879 = vmatprep.subr.mxu0 0.0
        %2880 = vmatpush1.msra.mxu0 %v438
        %2881 = vmatprep.subr.mxu0 0.0
        %2882 = vmatpush1.msra.mxu0 %v437
        %2883 = vmatprep.subr.mxu0 0.0
        %2884 = vmatpush1.msra.mxu0 %v436
        %2885 = vmatprep.subr.mxu0 0.0
        %2886 = vmatpush1.msra.mxu0 %v435
        %2887 = vmatprep.subr.mxu0 0.0
        %2888 = vmatpush1.msra.mxu0 %v434
        %2889 = vmatprep.subr.mxu0 0.0
        %2890 = vmatpush1.msra.mxu0 %v433
        %2891 = vmatprep.subr.mxu0 0.0
        %2892 = vmatpush1.msra.mxu0 %v432
        %2893 = vmatprep.subr.mxu0 0.0
        %2894 = vmatpush1.msra.mxu0 %v431
        %2895 = vmatprep.subr.mxu0 0.0
        %2896 = vmatpush1.msra.mxu0 %v430
        %2897 = vmatprep.subr.mxu0 0.0
        %2898 = vmatpush1.msra.mxu0 %v429
        %2899 = vmatprep.subr.mxu0 0.0
        %2900 = vmatpush1.msra.mxu0 %v428
        %2901 = vmatprep.subr.mxu0 0.0
        %2902 = vmatpush1.msra.mxu0 %v427
        %2903 = vmatprep.subr.mxu0 0.0
        %2904 = vmatpush2.msra.mxu0 0.0
        %2905 = vmatprep.subr.mxu0 0.0
        %2906 = vmatpush2.msra.mxu0 0.0
        %2907 = vmatprep.subr.mxu0 0.0
        %2908 = vmatpush2.msra.mxu0 0.0
        %2909 = vmatprep.subr.mxu0 0.0
        %2910 = vmatpush2.msra.mxu0 0.0
        %2911 = vmatprep.subr.mxu0 0.0
        %2912 = vmatpush2.msra.mxu0 0.0
        %2913 = vmatprep.subr.mxu0 0.0
        %2914 = vmatpush2.msra.mxu0 0.0
        %2915 = vmatprep.subr.mxu0 0.0
        %2916 = vmatpush2.msra.mxu0 0.0
        %2917 = vmatprep.subr.mxu0 0.0
        %2918 = vmatpush2.msra.mxu0 0.0
        %2919 = vmatprep.subr.mxu0 0.0
        %2920 = vmatpush2.msra.mxu0 0.0
        %2921 = vmatprep.subr.mxu0 0.0
        %2922 = vmatpush2.msra.mxu0 0.0
        %2923 = vmatprep.subr.mxu0 0.0
        %2924 = vmatpush2.msra.mxu0 0.0
        %2925 = vmatprep.subr.mxu0 0.0
        %2926 = vmatpush2.msra.mxu0 0.0
        %2927 = vmatprep.subr.mxu0 0.0
        %2928 = vmatpush2.msra.mxu0 0.0
        %2929 = vmatprep.subr.mxu0 0.0
        %2930 = vmatpush2.msra.mxu0 0.0
        %2931 = vmatprep.subr.mxu0 0.0
        %2932 = vmatpush2.msra.mxu0 0.0
        %2933 = vmatprep.subr.mxu0 0.0
        %2934 = vmatpush2.msra.mxu0 0.0
        %2935 = vmatprep.mubr.f32.mxu0 0.0
        %2936 = vmatmul.mubr.f32.gmra.mxu0 %v2869
        %v2937 = vpop.f32.mrf.mxu0
        %v2938 = vadd.f32 0.0, %v2937
        %v2939 = vpop.f32.mrf.mxu0
        %2940 = vmatprep.mubr.f32.mxu0 0.0
        %2941 = vmatmul.mubr.f32.gmra.mxu0 %v2870
        %v2942 = vpop.f32.mrf.mxu0
        %v2943 = vadd.f32 0.0, %v2942
        %v2944 = vpop.f32.mrf.mxu0
        %2945 = vdwg.mxu0
        %v2946 = vadd.f32 %v2754, %v2938
        %v2947 = vadd.f32 %v2757, %v2943
        %v2948 = vtanh.pop %v2946
        %v2949 = vtanh.pop %v2947
        %v2950 = vsub.f32 %v2662, %v2948
        %v2951 = vsub.f32 %v2663, %v2949
        %v2952 = vmul.f32 %v2850, %v2950
        %v2953 = vmul.f32 %v2852, %v2951
        %v2954 = vadd.f32 %v2948, %v2952
        %v2955 = vadd.f32 %v2949, %v2953
        %s2956 = scalar_lea.vmem %s350, 112 [#allocation3]
        %2957 = vst.msk [vmem:[%s2956] sm:$0xff] %vm912, %v2954
        %2958 = vst.msk [vmem:[%s2956 + $0x8] sm:$0xff] %vm912, %v2955
        %2959 = vst [vmem:[#allocation2] sm:$0xff] %v2954
        %2960 = vst [vmem:[#allocation2 + $0x8] sm:$0xff] %v2955
        // Predicated region
        $region49: #{sggru_forward.1} parent=43 // pred_check
          %p2961 = pneg %p387
        $region50: #{sggru_forward.1} parent=43 // pred_check_branch
          %2963 = sbr.rel (%p2961) target = $region52
        $region51: #{sggru_forward.1} parent=43 // pred_region
          %2964 = vst.msk [vmem:[%s357] sm:$0xff] %vm912, %v2954
          %2965 = vst.msk [vmem:[%s357 + $0x8] sm:$0xff] %vm912, %v2955
        $region52: #{sggru_forward.1} parent=43 // pred_fallthru
          _
        %s2966 = sand.u32 %s198, 1
        %s2967 = scalar_lea.sflag [#allocation4], %s2966
        %s2968 = sand.u32 %s198, 1
        %s2969 = smul.addr %s2968, 128
        %s2970 = scalar_lea.vmem [#allocation3], %s2969
        %s2971 = sand.u32 %s226, 1
        %s2972 = scalar_lea.sflag [#allocation6], %s2971
        %s2973 = sand.u32 %s226, 1
        %s2974 = smul.addr %s2973, 16
        %s2975 = scalar_lea.vmem [#allocation5], %s2974
        // Predicated region
        $region53: #{sggru_forward.1} parent=43 // pred_check
          %p2976 = pneg %p208
        $region54: #{sggru_forward.1} parent=43 // pred_check_branch
          %2978 = sbr.rel (%p2976) target = $region56
        $region55: #{sggru_forward.1} parent=43 // pred_region
          %s2979 = smul.u32 8, %s32
          %s2980 = smul.u32 2, %s31
          %s2982 = ssub.s32 2048, 2048
          %2983 = vsyncadd %s2967, %s2982
          %s2984 = smul.addr %s2979, 2
          %s2985 = sadd.s32 %s2980, %s2984
          %s2986 = smul.addr %s30, 16
          %s2987 = sadd.s32 %s2985, %s2986
          %s2988 = smul.addr %s2987, 128
          %s2989 = scalar_lea.hbm %s6, %s2988
          %s2990 = sshll.u32 %s2970, 4
          %s2991 = int_to_ptr.vmem [resolvable:$true] %s2990
          %2996 = dma.vmem_to_hbm [thread:$0]  %s2991, 2048, %s2989, %s2967, 128, 128, 8
        $region56: #{sggru_forward.1} parent=43 // pred_fallthru
          _
        // Predicated region
        $region57: #{sggru_forward.1} parent=43 // pred_check
          %p2997 = pneg %p236
        $region58: #{sggru_forward.1} parent=43 // pred_check_branch
          %2999 = sbr.rel (%p2997) target = $region60
        $region59: #{sggru_forward.1} parent=43 // pred_region
          %s3000 = smul.u32 2, %s31
          %s3002 = ssub.s32 256, 256
          %3003 = vsyncadd %s2972, %s3002
          %s3004 = smul.addr %s30, 2
          %s3005 = sadd.s32 %s3000, %s3004
          %s3006 = smul.addr %s3005, 128
          %s3007 = scalar_lea.hbm %s7, %s3006
          %s3008 = sshll.u32 %s2975, 4
          %s3009 = int_to_ptr.vmem [resolvable:$true] %s3008
          %3014 = dma.vmem_to_hbm [thread:$0]  %s3009, 256, %s3007, %s2972, 128, 128, 8
        $region60: #{sggru_forward.1} parent=43 // pred_fallthru
          _
      $region44: #{sggru_forward.1} parent=5 // pred_fallthru
        _
      %p3015 = scmp.le.s32.totalorder 2, %s20
      // Predicated region
      $region61: #{sggru_forward.1} parent=5 // pred_check
        %p3016 = pneg %p3015
      $region62: #{sggru_forward.1} parent=5 // pred_check_branch
        %3018 = sbr.rel (%p3016) target = $region64
      $region63: #{sggru_forward.1} parent=5 // pred_region
        %s3019 = ssub.s32 %s20, 2
        // Predicated region
        $region65: #{sggru_forward.1} parent=63 // pred_check
          %p3020 = pneg %p214
        $region66: #{sggru_forward.1} parent=63 // pred_check_branch
          %3022 = sbr.rel (%p3020) target = $region68
        $region67: #{sggru_forward.1} parent=63 // pred_region
          %s3023 = sand.u32 %s199, 1
          %s3024 = scalar_lea.sflag [#allocation4], %s3023
          %s3025 = sand.u32 %s199, 1
          %s3026 = smul.addr %s3025, 128
          %s3027 = scalar_lea.vmem [#allocation3], %s3026
          %3028 = dma.done %s3024, 2048
        $region68: #{sggru_forward.1} parent=63 // pred_fallthru
          _
        // Predicated region
        $region69: #{sggru_forward.1} parent=63 // pred_check
          %p3029 = pneg %p242
        $region70: #{sggru_forward.1} parent=63 // pred_check_branch
          %3031 = sbr.rel (%p3029) target = $region72
        $region71: #{sggru_forward.1} parent=63 // pred_region
          %s3032 = sand.u32 %s227, 1
          %s3033 = scalar_lea.sflag [#allocation6], %s3032
          %s3034 = sand.u32 %s227, 1
          %s3035 = smul.addr %s3034, 16
          %s3036 = scalar_lea.vmem [#allocation5], %s3035
          %3037 = dma.done %s3033, 256
        $region72: #{sggru_forward.1} parent=63 // pred_fallthru
          _
      $region64: #{sggru_forward.1} parent=5 // pred_fallthru
        _
    $region6: #{sggru_forward.1} parent=1 // loop_footer
      %s24 = sadd.s32 1, %s20
    $region7: #{sggru_forward.1} parent=1 // loop_footer_branch
      %19 = sbr.rel target = $region3
    $region8: #{sggru_forward.1} parent=1 // loop_exit
      _
    %3038 = vsyncpa [#allocation4], 1
    %s3039 = scalar_lea.sflag [#allocation4], 1
    %3040 = vsyncpa %s3039, 1
    %3041 = vsyncpa [#allocation6], 1
    %s3042 = scalar_lea.sflag [#allocation6], 1
    %3043 = vsyncpa %s3042, 1

</llo_original>
